<compile_context>
chip_gen: v6e
topology: v6e:2x2x1
jax: 0.10.0
libtpu: 0.0.40
codegen_flags: <defaults>
</compile_context>

<pallas_src>
import math
import jax
import jax.numpy as jnp
from jax.experimental import pallas as pl
from jax.experimental.pallas import tpu as pltpu


def _round_up(x, m):
    return (x + m - 1) // m * m


# ----------------------------- Pallas kernel --------------------------------
def fused_gru_encoder_kernel(x_ref, mask_ref, imask_ref,
                             wih_ref, whh_ref, bih_ref, bhh_ref,
                             y_ref, hn_ref):
    """All GRU layers over the whole (masked) sequence in one invocation.

    x_ref:     (T*B, D_buf)   f32  time-major input; rows [t*B:(t+1)*B] = x_t
    mask_ref:  (T, B, H)      f32  1.0 where t < length[b] else 0.0 (pre-broadcast)
    imask_ref: (T, B, H)      f32  1.0 - mask
    wih_ref:   (L, D_buf, 3H) f32  fused input weights, gate order [r|z|n]
    whh_ref:   (L, H, 3H)     f32  fused hidden weights
    bih_ref:   (L, 1, 3H)     f32
    bhh_ref:   (L, 1, 3H)     f32
    y_ref:     (B, T*H)       f32  lane-dense final-layer sequence
                                   (y_ref[:, t*H:(t+1)*H] = masked h_t)
    hn_ref:    (B, L*H)       f32  lane-dense last-valid-step hidden per layer
    """
    T, B, H = mask_ref.shape
    L = wih_ref.shape[0]

    # Layer-0 input comes from VMEM; later layers' inputs stay in vregs.
    layer_in = x_ref[...]                      # (T*B, D_buf)
    k_dim = layer_in.shape[1]

    for l in range(L):                         # static layer loop (L is small)
        wih = wih_ref[l][0:k_dim, :]           # (k_dim, 3H)
        whh = whh_ref[l]                       # (H, 3H)
        bih = bih_ref[l]                       # (1, 3H)
        bhh = bhh_ref[l]                       # (1, 3H)

        # Input projection hoisted OFF the serial recurrence: one batched
        # (T*B, k_dim) @ (k_dim, 3H) MXU matmul per layer instead of T tiny
        # per-step dots inside the time loop.
        gi_all = jnp.dot(layer_in, wih, preferred_element_type=jnp.float32) + bih

        h = jnp.zeros((B, H), jnp.float32)
        ys = []
        for t in range(T):                     # static, fully unrolled time loop
            gi_t = gi_all[t * B:(t + 1) * B, :]                     # (B, 3H)
            # Only the h-recurrence matmul remains on the serial chain.
            gh = jnp.dot(h, whh, preferred_element_type=jnp.float32) + bhh
            # Fused r/z sigmoid: one EUP push on the contiguous 2H-lane slab.
            rz = jax.nn.sigmoid(gi_t[:, 0:2 * H] + gh[:, 0:2 * H])
            r = rz[:, 0:H]
            z = rz[:, H:2 * H]
            n = jnp.tanh(gi_t[:, 2 * H:3 * H] + r * gh[:, 2 * H:3 * H])
            h_new = n + z * (h - n)            # == (1 - z) * n + z * h

            m_t = mask_ref[t]                  # (B, H), pre-broadcast in wrapper
            y_t = m_t * h_new                  # exact zeros at padded steps
            # carry h through padded steps so hn is the last *valid* state
            h = y_t + imask_ref[t] * h

            if l == L - 1:
                # lane-dense output buffer -> HBM writeback is one dense slab
                y_ref[:, t * H:(t + 1) * H] = y_t
            else:
                ys.append(y_t)

        hn_ref[:, l * H:(l + 1) * H] = h

        if l < L - 1:
            # Next layer's time-major input, kept in vregs (sublane stack of
            # one-sublane-tile pieces; no HBM / VMEM round-trip).
            layer_in = jnp.concatenate(ys, axis=0)   # (T*B, H)
            k_dim = H


# ----------------------------- parameter setup -------------------------------
def init_encoder_params(key, input_size, hidden_size, num_layers):
    """Deterministic init matching torch.nn.GRU shapes: U(-1/sqrt(H), 1/sqrt(H)).

    Weights are pre-transposed and gate-fused to (D, 3H)/(H, 3H) with gate
    order [r|z|n] (torch's chunk order), then stacked over layers with the
    input dim zero-padded to a common D_buf.
    """
    H = hidden_size
    d_buf = max(H, _round_up(input_size, 8))
    bound = 1.0 / math.sqrt(H)
    wih_l, whh_l, bih_l, bhh_l = [], [], [], []
    for layer in range(num_layers):
        d_in = input_size if layer == 0 else H
        key, k1, k2, k3, k4 = jax.random.split(key, 5)
        w_ih = jax.random.uniform(k1, (3 * H, d_in), jnp.float32, -bound, bound)
        w_hh = jax.random.uniform(k2, (3 * H, H), jnp.float32, -bound, bound)
        b_ih = jax.random.uniform(k3, (3 * H,), jnp.float32, -bound, bound)
        b_hh = jax.random.uniform(k4, (3 * H,), jnp.float32, -bound, bound)
        wih_t = w_ih.T                                   # (d_in, 3H), cols [r|z|n]
        wih_l.append(jnp.pad(wih_t, ((0, d_buf - d_in), (0, 0))))
        whh_l.append(w_hh.T)                             # (H, 3H)
        bih_l.append(b_ih.reshape(1, 3 * H))
        bhh_l.append(b_hh.reshape(1, 3 * H))
    return {
        "wih": jnp.stack(wih_l),          # (L, d_buf, 3H)
        "whh": jnp.stack(whh_l),          # (L, H, 3H)
        "bih": jnp.stack(bih_l),          # (L, 1, 3H)
        "bhh": jnp.stack(bhh_l),          # (L, 1, 3H)
        "input_size": input_size,
        "hidden_size": H,
        "num_layers": num_layers,
        "d_buf": d_buf,
    }


# ----------------------------- Encoder forward --------------------------------
def encoder_forward(params, x_btd, lengths):
    """Equivalent of Encoder.forward(x, lengths) in eval mode.

    x_btd:   (B, T, input_size) float32, batch-first (PyTorch convention)
    lengths: (B,) int32, max(lengths) == T
    returns: output (B, T, H), hidden (num_layers, B, H)
    """
    B, T, D_in = x_btd.shape
    H = params["hidden_size"]
    L = params["num_layers"]
    d_buf = params["d_buf"]
    b_pad = _round_up(B, 8)

    # time-major, pad batch to 8 sublanes and features to the common K width,
    # then flatten to (T*B, D_buf) so the kernel's batched gi matmul is one op
    x_tm = jnp.transpose(x_btd, (1, 0, 2)).astype(jnp.float32)      # (T, B, D)
    x_tm = jnp.pad(x_tm, ((0, 0), (0, b_pad - B), (0, d_buf - D_in)))
    x_flat = x_tm.reshape(T * b_pad, d_buf)

    lengths = jnp.asarray(lengths, jnp.int32)
    len_pad = jnp.pad(lengths, (0, b_pad - B))                      # pads get len 0
    mask2d = (jnp.arange(T, dtype=jnp.int32)[:, None] < len_pad[None, :]
              ).astype(jnp.float32)                                 # (T, b_pad)
    mask = jnp.broadcast_to(mask2d[:, :, None], (T, b_pad, H))      # pre-broadcast
    imask = 1.0 - mask

    vmem = pl.BlockSpec(memory_space=pltpu.MemorySpace.VMEM)
    y, hn = pl.pallas_call(
        fused_gru_encoder_kernel,
        out_shape=(jax.ShapeDtypeStruct((b_pad, T * H), jnp.float32),
                   jax.ShapeDtypeStruct((b_pad, L * H), jnp.float32)),
        in_specs=[vmem] * 7,
        out_specs=(vmem, vmem),
        compiler_params=pltpu.CompilerParams(
            # actual footprint ~150 KB; keep the scoped limit small so it also
            # fits comfortably inside v7x's 64 MiB physical VMEM
            vmem_limit_bytes=4 * 1024 * 1024),
    )(x_flat, mask, imask,
      params["wih"], params["whh"], params["bih"], params["bhh"])

    # lane-dense buffers unpack with free reshapes (no strided y transpose)
    output = y[:B].reshape(B, T, H)                                 # (B, T, H)
    hidden = jnp.transpose(hn[:B].reshape(B, L, H), (1, 0, 2))      # (L, B, H)
    return output, hidden


# ----------------------------- pure-JAX reference ------------------------------
def encoder_reference(params, x_btd, lengths):
    """Same recurrence with lax.scan, for numerical verification."""
    B, T, _ = x_btd.shape
    H = params["hidden_size"]
    L = params["num_layers"]
    x = jnp.transpose(x_btd, (1, 0, 2)).astype(jnp.float32)         # (T, B, D)
    lengths = jnp.asarray(lengths, jnp.int32)
    mask = (jnp.arange(T)[:, None] < lengths[None, :]
            ).astype(jnp.float32)[:, :, None]                       # (T, B, 1)

    hiddens = []
    layer_in = x
    for l in range(L):
        d_in = layer_in.shape[-1]
        wih = params["wih"][l][:d_in]
        whh = params["whh"][l]
        bih = params["bih"][l]
        bhh = params["bhh"][l]

        def step(h, inputs, wih=wih, whh=whh, bih=bih, bhh=bhh):
            x_t, m_t = inputs
            gi = jnp.dot(x_t, wih, precision=jax.lax.Precision.HIGHEST) + bih
            gh = jnp.dot(h, whh, precision=jax.lax.Precision.HIGHEST) + bhh
            r = jax.nn.sigmoid(gi[:, :H] + gh[:, :H])
            z = jax.nn.sigmoid(gi[:, H:2 * H] + gh[:, H:2 * H])
            n = jnp.tanh(gi[:, 2 * H:] + r * gh[:, 2 * H:])
            h_new = (1.0 - z) * n + z * h
            h_next = m_t * h_new + (1.0 - m_t) * h
            return h_next, m_t * h_new

        h0 = jnp.zeros((B, H), jnp.float32)
        h_fin, y = jax.lax.scan(step, h0, (layer_in, mask))
        hiddens.append(h_fin)
        layer_in = y
    return jnp.transpose(layer_in, (1, 0, 2)), jnp.stack(hiddens, axis=0)


# ----------------------------- main ------------------------------------------
if __name__ == "__main__":
    INPUT_SIZE = 7
    HIDDEN_SIZE = 32
    NUM_LAYERS = 4
    B, T = 4, 8

    key = jax.random.PRNGKey(0)
    key, kx = jax.random.split(key)

    params = init_encoder_params(key, INPUT_SIZE, HIDDEN_SIZE, NUM_LAYERS)
    x = jax.random.normal(kx, (B, T, INPUT_SIZE), jnp.float32)
    # variable lengths, unsorted (enforce_sorted=False semantics), max == T
    lengths = jnp.array([5, 8, 3, 6], dtype=jnp.int32)

    output, hidden = encoder_forward(params, x, lengths)
    jax.block_until_ready((output, hidden))

    assert output.shape == (B, T, HIDDEN_SIZE)
    assert hidden.shape == (NUM_LAYERS, B, HIDDEN_SIZE)

    # padded positions of the output must be exactly zero
    t_idx = jnp.arange(T)[None, :, None]
    pad_mask = t_idx >= lengths[:, None, None]
    assert bool(jnp.all(jnp.where(pad_mask, output, 0.0) == 0.0))

    # numerical check against a pure-JAX reference of the same recurrence
    ref_out, ref_hid = encoder_reference(params, x, lengths)
    assert bool(jnp.allclose(output, ref_out, atol=1e-3, rtol=1e-3))
    assert bool(jnp.allclose(hidden, ref_hid, atol=1e-3, rtol=1e-3))

    print("KERNEL_OK")
</pallas_src>

<mosaic_0001>
module attributes {stable_mosaic.version = 11 : i64} {
  func.func @fused_gru_encoder_kernel(%arg0: memref<64x32xf32, #tpu.memory_space<vmem>>, %arg1: memref<8x8x32xf32, #tpu.memory_space<vmem>>, %arg2: memref<8x8x32xf32, #tpu.memory_space<vmem>>, %arg3: memref<4x32x96xf32, #tpu.memory_space<vmem>>, %arg4: memref<4x32x96xf32, #tpu.memory_space<vmem>>, %arg5: memref<4x1x96xf32, #tpu.memory_space<vmem>>, %arg6: memref<4x1x96xf32, #tpu.memory_space<vmem>>, %arg7: memref<8x256xf32, #tpu.memory_space<vmem>>, %arg8: memref<8x128xf32, #tpu.memory_space<vmem>>) attributes {dimension_semantics = [], scalar_prefetch = 0 : i64, scratch_operands = 0 : i64, tpu.core_type = #tpu.core_type<tc>} {
    %c0 = arith.constant 0 : index
    %c0_0 = arith.constant 0 : index
    %0 = vector.load %arg0[%c0, %c0_0] : memref<64x32xf32, #tpu.memory_space<vmem>>, vector<64x32xf32>
    %c0_1 = arith.constant 0 : index
    %c0_2 = arith.constant 0 : index
    %c0_3 = arith.constant 0 : index
    %1 = vector.load %arg3[%c0_1, %c0_2, %c0_3] : memref<4x32x96xf32, #tpu.memory_space<vmem>>, vector<1x32x96xf32>
    %2 = vector.shape_cast %1 : vector<1x32x96xf32> to vector<32x96xf32>
    %c0_4 = arith.constant 0 : index
    %c0_5 = arith.constant 0 : index
    %c0_6 = arith.constant 0 : index
    %3 = vector.load %arg4[%c0_4, %c0_5, %c0_6] : memref<4x32x96xf32, #tpu.memory_space<vmem>>, vector<1x32x96xf32>
    %4 = vector.shape_cast %3 : vector<1x32x96xf32> to vector<32x96xf32>
    %c0_7 = arith.constant 0 : index
    %c0_8 = arith.constant 0 : index
    %c0_9 = arith.constant 0 : index
    %5 = vector.load %arg5[%c0_7, %c0_8, %c0_9] : memref<4x1x96xf32, #tpu.memory_space<vmem>>, vector<1x1x96xf32>
    %6 = vector.shape_cast %5 : vector<1x1x96xf32> to vector<1x96xf32>
    %c0_10 = arith.constant 0 : index
    %c0_11 = arith.constant 0 : index
    %c0_12 = arith.constant 0 : index
    %7 = vector.load %arg6[%c0_10, %c0_11, %c0_12] : memref<4x1x96xf32, #tpu.memory_space<vmem>>, vector<1x1x96xf32>
    %8 = vector.shape_cast %7 : vector<1x1x96xf32> to vector<1x96xf32>
    %cst = arith.constant dense<0.000000e+00> : vector<64x96xf32>
    %9 = tpu.matmul %0, %2, %cst {dimension_numbers = #tpu.dot_dimension_numbers<[1], [0], [0], [1], [0, 0, 1, 1], [], []>} : vector<64x32xf32>, vector<32x96xf32>, vector<64x96xf32> -> vector<64x96xf32>
    %10 = vector.broadcast %6 : vector<1x96xf32> to vector<64x96xf32>
    %11 = arith.addf %9, %10 : vector<64x96xf32>
    %cst_13 = arith.constant 0.000000e+00 : f32
    %12 = vector.broadcast %cst_13 : f32 to vector<8x32xf32>
    %13 = vector.extract_strided_slice %11 {offsets = [0, 0], sizes = [8, 96], strides = [1, 1]} : vector<64x96xf32> to vector<8x96xf32>
    %cst_14 = arith.constant dense<0.000000e+00> : vector<8x96xf32>
    %14 = tpu.matmul %12, %4, %cst_14 {dimension_numbers = #tpu.dot_dimension_numbers<[1], [0], [0], [1], [0, 0, 1, 1], [], []>} : vector<8x32xf32>, vector<32x96xf32>, vector<8x96xf32> -> vector<8x96xf32>
    %15 = vector.broadcast %8 : vector<1x96xf32> to vector<8x96xf32>
    %16 = arith.addf %14, %15 : vector<8x96xf32>
    %17 = vector.extract_strided_slice %13 {offsets = [0, 0], sizes = [8, 64], strides = [1, 1]} : vector<8x96xf32> to vector<8x64xf32>
    %18 = vector.extract_strided_slice %16 {offsets = [0, 0], sizes = [8, 64], strides = [1, 1]} : vector<8x96xf32> to vector<8x64xf32>
    %19 = arith.addf %17, %18 : vector<8x64xf32>
    %20 = arith.negf %19 : vector<8x64xf32>
    %21 = math.exp %20 : vector<8x64xf32>
    %cst_15 = arith.constant 1.000000e+00 : f32
    %22 = vector.broadcast %cst_15 : f32 to vector<8x64xf32>
    %23 = arith.addf %22, %21 : vector<8x64xf32>
    %24 = arith.divf %22, %23 : vector<8x64xf32>
    %25 = vector.extract_strided_slice %24 {offsets = [0, 0], sizes = [8, 32], strides = [1, 1]} : vector<8x64xf32> to vector<8x32xf32>
    %26 = vector.extract_strided_slice %24 {offsets = [0, 32], sizes = [8, 32], strides = [1, 1]} : vector<8x64xf32> to vector<8x32xf32>
    %27 = vector.extract_strided_slice %13 {offsets = [0, 64], sizes = [8, 32], strides = [1, 1]} : vector<8x96xf32> to vector<8x32xf32>
    %28 = vector.extract_strided_slice %16 {offsets = [0, 64], sizes = [8, 32], strides = [1, 1]} : vector<8x96xf32> to vector<8x32xf32>
    %29 = arith.mulf %25, %28 : vector<8x32xf32>
    %30 = arith.addf %27, %29 : vector<8x32xf32>
    %31 = math.tanh %30 : vector<8x32xf32>
    %32 = arith.subf %12, %31 : vector<8x32xf32>
    %33 = arith.mulf %26, %32 : vector<8x32xf32>
    %34 = arith.addf %31, %33 : vector<8x32xf32>
    %c0_16 = arith.constant 0 : index
    %c0_17 = arith.constant 0 : index
    %c0_18 = arith.constant 0 : index
    %35 = vector.load %arg1[%c0_16, %c0_17, %c0_18] : memref<8x8x32xf32, #tpu.memory_space<vmem>>, vector<1x8x32xf32>
    %36 = vector.shape_cast %35 : vector<1x8x32xf32> to vector<8x32xf32>
    %37 = arith.mulf %36, %34 : vector<8x32xf32>
    %c0_19 = arith.constant 0 : index
    %c0_20 = arith.constant 0 : index
    %c0_21 = arith.constant 0 : index
    %38 = vector.load %arg2[%c0_19, %c0_20, %c0_21] : memref<8x8x32xf32, #tpu.memory_space<vmem>>, vector<1x8x32xf32>
    %39 = vector.shape_cast %38 : vector<1x8x32xf32> to vector<8x32xf32>
    %40 = arith.mulf %39, %12 : vector<8x32xf32>
    %41 = arith.addf %37, %40 : vector<8x32xf32>
    %42 = vector.extract_strided_slice %11 {offsets = [8, 0], sizes = [8, 96], strides = [1, 1]} : vector<64x96xf32> to vector<8x96xf32>
    %cst_22 = arith.constant dense<0.000000e+00> : vector<8x96xf32>
    %43 = tpu.matmul %41, %4, %cst_22 {dimension_numbers = #tpu.dot_dimension_numbers<[1], [0], [0], [1], [0, 0, 1, 1], [], []>} : vector<8x32xf32>, vector<32x96xf32>, vector<8x96xf32> -> vector<8x96xf32>
    %44 = vector.broadcast %8 : vector<1x96xf32> to vector<8x96xf32>
    %45 = arith.addf %43, %44 : vector<8x96xf32>
    %46 = vector.extract_strided_slice %42 {offsets = [0, 0], sizes = [8, 64], strides = [1, 1]} : vector<8x96xf32> to vector<8x64xf32>
    %47 = vector.extract_strided_slice %45 {offsets = [0, 0], sizes = [8, 64], strides = [1, 1]} : vector<8x96xf32> to vector<8x64xf32>
    %48 = arith.addf %46, %47 : vector<8x64xf32>
    %49 = arith.negf %48 : vector<8x64xf32>
    %50 = math.exp %49 : vector<8x64xf32>
    %cst_23 = arith.constant 1.000000e+00 : f32
    %51 = vector.broadcast %cst_23 : f32 to vector<8x64xf32>
    %52 = arith.addf %51, %50 : vector<8x64xf32>
    %53 = arith.divf %51, %52 : vector<8x64xf32>
    %54 = vector.extract_strided_slice %53 {offsets = [0, 0], sizes = [8, 32], strides = [1, 1]} : vector<8x64xf32> to vector<8x32xf32>
    %55 = vector.extract_strided_slice %53 {offsets = [0, 32], sizes = [8, 32], strides = [1, 1]} : vector<8x64xf32> to vector<8x32xf32>
    %56 = vector.extract_strided_slice %42 {offsets = [0, 64], sizes = [8, 32], strides = [1, 1]} : vector<8x96xf32> to vector<8x32xf32>
    %57 = vector.extract_strided_slice %45 {offsets = [0, 64], sizes = [8, 32], strides = [1, 1]} : vector<8x96xf32> to vector<8x32xf32>
    %58 = arith.mulf %54, %57 : vector<8x32xf32>
    %59 = arith.addf %56, %58 : vector<8x32xf32>
    %60 = math.tanh %59 : vector<8x32xf32>
    %61 = arith.subf %41, %60 : vector<8x32xf32>
    %62 = arith.mulf %55, %61 : vector<8x32xf32>
    %63 = arith.addf %60, %62 : vector<8x32xf32>
    %c1 = arith.constant 1 : index
    %c0_24 = arith.constant 0 : index
    %c0_25 = arith.constant 0 : index
    %64 = vector.load %arg1[%c1, %c0_24, %c0_25] : memref<8x8x32xf32, #tpu.memory_space<vmem>>, vector<1x8x32xf32>
    %65 = vector.shape_cast %64 : vector<1x8x32xf32> to vector<8x32xf32>
    %66 = arith.mulf %65, %63 : vector<8x32xf32>
    %c1_26 = arith.constant 1 : index
    %c0_27 = arith.constant 0 : index
    %c0_28 = arith.constant 0 : index
    %67 = vector.load %arg2[%c1_26, %c0_27, %c0_28] : memref<8x8x32xf32, #tpu.memory_space<vmem>>, vector<1x8x32xf32>
    %68 = vector.shape_cast %67 : vector<1x8x32xf32> to vector<8x32xf32>
    %69 = arith.mulf %68, %41 : vector<8x32xf32>
    %70 = arith.addf %66, %69 : vector<8x32xf32>
    %71 = vector.extract_strided_slice %11 {offsets = [16, 0], sizes = [8, 96], strides = [1, 1]} : vector<64x96xf32> to vector<8x96xf32>
    %cst_29 = arith.constant dense<0.000000e+00> : vector<8x96xf32>
    %72 = tpu.matmul %70, %4, %cst_29 {dimension_numbers = #tpu.dot_dimension_numbers<[1], [0], [0], [1], [0, 0, 1, 1], [], []>} : vector<8x32xf32>, vector<32x96xf32>, vector<8x96xf32> -> vector<8x96xf32>
    %73 = vector.broadcast %8 : vector<1x96xf32> to vector<8x96xf32>
    %74 = arith.addf %72, %73 : vector<8x96xf32>
    %75 = vector.extract_strided_slice %71 {offsets = [0, 0], sizes = [8, 64], strides = [1, 1]} : vector<8x96xf32> to vector<8x64xf32>
    %76 = vector.extract_strided_slice %74 {offsets = [0, 0], sizes = [8, 64], strides = [1, 1]} : vector<8x96xf32> to vector<8x64xf32>
    %77 = arith.addf %75, %76 : vector<8x64xf32>
    %78 = arith.negf %77 : vector<8x64xf32>
    %79 = math.exp %78 : vector<8x64xf32>
    %cst_30 = arith.constant 1.000000e+00 : f32
    %80 = vector.broadcast %cst_30 : f32 to vector<8x64xf32>
    %81 = arith.addf %80, %79 : vector<8x64xf32>
    %82 = arith.divf %80, %81 : vector<8x64xf32>
    %83 = vector.extract_strided_slice %82 {offsets = [0, 0], sizes = [8, 32], strides = [1, 1]} : vector<8x64xf32> to vector<8x32xf32>
    %84 = vector.extract_strided_slice %82 {offsets = [0, 32], sizes = [8, 32], strides = [1, 1]} : vector<8x64xf32> to vector<8x32xf32>
    %85 = vector.extract_strided_slice %71 {offsets = [0, 64], sizes = [8, 32], strides = [1, 1]} : vector<8x96xf32> to vector<8x32xf32>
    %86 = vector.extract_strided_slice %74 {offsets = [0, 64], sizes = [8, 32], strides = [1, 1]} : vector<8x96xf32> to vector<8x32xf32>
    %87 = arith.mulf %83, %86 : vector<8x32xf32>
    %88 = arith.addf %85, %87 : vector<8x32xf32>
    %89 = math.tanh %88 : vector<8x32xf32>
    %90 = arith.subf %70, %89 : vector<8x32xf32>
    %91 = arith.mulf %84, %90 : vector<8x32xf32>
    %92 = arith.addf %89, %91 : vector<8x32xf32>
    %c2 = arith.constant 2 : index
    %c0_31 = arith.constant 0 : index
    %c0_32 = arith.constant 0 : index
    %93 = vector.load %arg1[%c2, %c0_31, %c0_32] : memref<8x8x32xf32, #tpu.memory_space<vmem>>, vector<1x8x32xf32>
    %94 = vector.shape_cast %93 : vector<1x8x32xf32> to vector<8x32xf32>
    %95 = arith.mulf %94, %92 : vector<8x32xf32>
    %c2_33 = arith.constant 2 : index
    %c0_34 = arith.constant 0 : index
    %c0_35 = arith.constant 0 : index
    %96 = vector.load %arg2[%c2_33, %c0_34, %c0_35] : memref<8x8x32xf32, #tpu.memory_space<vmem>>, vector<1x8x32xf32>
    %97 = vector.shape_cast %96 : vector<1x8x32xf32> to vector<8x32xf32>
    %98 = arith.mulf %97, %70 : vector<8x32xf32>
    %99 = arith.addf %95, %98 : vector<8x32xf32>
    %100 = vector.extract_strided_slice %11 {offsets = [24, 0], sizes = [8, 96], strides = [1, 1]} : vector<64x96xf32> to vector<8x96xf32>
    %cst_36 = arith.constant dense<0.000000e+00> : vector<8x96xf32>
    %101 = tpu.matmul %99, %4, %cst_36 {dimension_numbers = #tpu.dot_dimension_numbers<[1], [0], [0], [1], [0, 0, 1, 1], [], []>} : vector<8x32xf32>, vector<32x96xf32>, vector<8x96xf32> -> vector<8x96xf32>
    %102 = vector.broadcast %8 : vector<1x96xf32> to vector<8x96xf32>
    %103 = arith.addf %101, %102 : vector<8x96xf32>
    %104 = vector.extract_strided_slice %100 {offsets = [0, 0], sizes = [8, 64], strides = [1, 1]} : vector<8x96xf32> to vector<8x64xf32>
    %105 = vector.extract_strided_slice %103 {offsets = [0, 0], sizes = [8, 64], strides = [1, 1]} : vector<8x96xf32> to vector<8x64xf32>
    %106 = arith.addf %104, %105 : vector<8x64xf32>
    %107 = arith.negf %106 : vector<8x64xf32>
    %108 = math.exp %107 : vector<8x64xf32>
    %cst_37 = arith.constant 1.000000e+00 : f32
    %109 = vector.broadcast %cst_37 : f32 to vector<8x64xf32>
    %110 = arith.addf %109, %108 : vector<8x64xf32>
    %111 = arith.divf %109, %110 : vector<8x64xf32>
    %112 = vector.extract_strided_slice %111 {offsets = [0, 0], sizes = [8, 32], strides = [1, 1]} : vector<8x64xf32> to vector<8x32xf32>
    %113 = vector.extract_strided_slice %111 {offsets = [0, 32], sizes = [8, 32], strides = [1, 1]} : vector<8x64xf32> to vector<8x32xf32>
    %114 = vector.extract_strided_slice %100 {offsets = [0, 64], sizes = [8, 32], strides = [1, 1]} : vector<8x96xf32> to vector<8x32xf32>
    %115 = vector.extract_strided_slice %103 {offsets = [0, 64], sizes = [8, 32], strides = [1, 1]} : vector<8x96xf32> to vector<8x32xf32>
    %116 = arith.mulf %112, %115 : vector<8x32xf32>
    %117 = arith.addf %114, %116 : vector<8x32xf32>
    %118 = math.tanh %117 : vector<8x32xf32>
    %119 = arith.subf %99, %118 : vector<8x32xf32>
    %120 = arith.mulf %113, %119 : vector<8x32xf32>
    %121 = arith.addf %118, %120 : vector<8x32xf32>
    %c3 = arith.constant 3 : index
    %c0_38 = arith.constant 0 : index
    %c0_39 = arith.constant 0 : index
    %122 = vector.load %arg1[%c3, %c0_38, %c0_39] : memref<8x8x32xf32, #tpu.memory_space<vmem>>, vector<1x8x32xf32>
    %123 = vector.shape_cast %122 : vector<1x8x32xf32> to vector<8x32xf32>
    %124 = arith.mulf %123, %121 : vector<8x32xf32>
    %c3_40 = arith.constant 3 : index
    %c0_41 = arith.constant 0 : index
    %c0_42 = arith.constant 0 : index
    %125 = vector.load %arg2[%c3_40, %c0_41, %c0_42] : memref<8x8x32xf32, #tpu.memory_space<vmem>>, vector<1x8x32xf32>
    %126 = vector.shape_cast %125 : vector<1x8x32xf32> to vector<8x32xf32>
    %127 = arith.mulf %126, %99 : vector<8x32xf32>
    %128 = arith.addf %124, %127 : vector<8x32xf32>
    %129 = vector.extract_strided_slice %11 {offsets = [32, 0], sizes = [8, 96], strides = [1, 1]} : vector<64x96xf32> to vector<8x96xf32>
    %cst_43 = arith.constant dense<0.000000e+00> : vector<8x96xf32>
    %130 = tpu.matmul %128, %4, %cst_43 {dimension_numbers = #tpu.dot_dimension_numbers<[1], [0], [0], [1], [0, 0, 1, 1], [], []>} : vector<8x32xf32>, vector<32x96xf32>, vector<8x96xf32> -> vector<8x96xf32>
    %131 = vector.broadcast %8 : vector<1x96xf32> to vector<8x96xf32>
    %132 = arith.addf %130, %131 : vector<8x96xf32>
    %133 = vector.extract_strided_slice %129 {offsets = [0, 0], sizes = [8, 64], strides = [1, 1]} : vector<8x96xf32> to vector<8x64xf32>
    %134 = vector.extract_strided_slice %132 {offsets = [0, 0], sizes = [8, 64], strides = [1, 1]} : vector<8x96xf32> to vector<8x64xf32>
    %135 = arith.addf %133, %134 : vector<8x64xf32>
    %136 = arith.negf %135 : vector<8x64xf32>
    %137 = math.exp %136 : vector<8x64xf32>
    %cst_44 = arith.constant 1.000000e+00 : f32
    %138 = vector.broadcast %cst_44 : f32 to vector<8x64xf32>
    %139 = arith.addf %138, %137 : vector<8x64xf32>
    %140 = arith.divf %138, %139 : vector<8x64xf32>
    %141 = vector.extract_strided_slice %140 {offsets = [0, 0], sizes = [8, 32], strides = [1, 1]} : vector<8x64xf32> to vector<8x32xf32>
    %142 = vector.extract_strided_slice %140 {offsets = [0, 32], sizes = [8, 32], strides = [1, 1]} : vector<8x64xf32> to vector<8x32xf32>
    %143 = vector.extract_strided_slice %129 {offsets = [0, 64], sizes = [8, 32], strides = [1, 1]} : vector<8x96xf32> to vector<8x32xf32>
    %144 = vector.extract_strided_slice %132 {offsets = [0, 64], sizes = [8, 32], strides = [1, 1]} : vector<8x96xf32> to vector<8x32xf32>
    %145 = arith.mulf %141, %144 : vector<8x32xf32>
    %146 = arith.addf %143, %145 : vector<8x32xf32>
    %147 = math.tanh %146 : vector<8x32xf32>
    %148 = arith.subf %128, %147 : vector<8x32xf32>
    %149 = arith.mulf %142, %148 : vector<8x32xf32>
    %150 = arith.addf %147, %149 : vector<8x32xf32>
    %c4 = arith.constant 4 : index
    %c0_45 = arith.constant 0 : index
    %c0_46 = arith.constant 0 : index
    %151 = vector.load %arg1[%c4, %c0_45, %c0_46] : memref<8x8x32xf32, #tpu.memory_space<vmem>>, vector<1x8x32xf32>
    %152 = vector.shape_cast %151 : vector<1x8x32xf32> to vector<8x32xf32>
    %153 = arith.mulf %152, %150 : vector<8x32xf32>
    %c4_47 = arith.constant 4 : index
    %c0_48 = arith.constant 0 : index
    %c0_49 = arith.constant 0 : index
    %154 = vector.load %arg2[%c4_47, %c0_48, %c0_49] : memref<8x8x32xf32, #tpu.memory_space<vmem>>, vector<1x8x32xf32>
    %155 = vector.shape_cast %154 : vector<1x8x32xf32> to vector<8x32xf32>
    %156 = arith.mulf %155, %128 : vector<8x32xf32>
    %157 = arith.addf %153, %156 : vector<8x32xf32>
    %158 = vector.extract_strided_slice %11 {offsets = [40, 0], sizes = [8, 96], strides = [1, 1]} : vector<64x96xf32> to vector<8x96xf32>
    %cst_50 = arith.constant dense<0.000000e+00> : vector<8x96xf32>
    %159 = tpu.matmul %157, %4, %cst_50 {dimension_numbers = #tpu.dot_dimension_numbers<[1], [0], [0], [1], [0, 0, 1, 1], [], []>} : vector<8x32xf32>, vector<32x96xf32>, vector<8x96xf32> -> vector<8x96xf32>
    %160 = vector.broadcast %8 : vector<1x96xf32> to vector<8x96xf32>
    %161 = arith.addf %159, %160 : vector<8x96xf32>
    %162 = vector.extract_strided_slice %158 {offsets = [0, 0], sizes = [8, 64], strides = [1, 1]} : vector<8x96xf32> to vector<8x64xf32>
    %163 = vector.extract_strided_slice %161 {offsets = [0, 0], sizes = [8, 64], strides = [1, 1]} : vector<8x96xf32> to vector<8x64xf32>
    %164 = arith.addf %162, %163 : vector<8x64xf32>
    %165 = arith.negf %164 : vector<8x64xf32>
    %166 = math.exp %165 : vector<8x64xf32>
    %cst_51 = arith.constant 1.000000e+00 : f32
    %167 = vector.broadcast %cst_51 : f32 to vector<8x64xf32>
    %168 = arith.addf %167, %166 : vector<8x64xf32>
    %169 = arith.divf %167, %168 : vector<8x64xf32>
    %170 = vector.extract_strided_slice %169 {offsets = [0, 0], sizes = [8, 32], strides = [1, 1]} : vector<8x64xf32> to vector<8x32xf32>
    %171 = vector.extract_strided_slice %169 {offsets = [0, 32], sizes = [8, 32], strides = [1, 1]} : vector<8x64xf32> to vector<8x32xf32>
    %172 = vector.extract_strided_slice %158 {offsets = [0, 64], sizes = [8, 32], strides = [1, 1]} : vector<8x96xf32> to vector<8x32xf32>
    %173 = vector.extract_strided_slice %161 {offsets = [0, 64], sizes = [8, 32], strides = [1, 1]} : vector<8x96xf32> to vector<8x32xf32>
    %174 = arith.mulf %170, %173 : vector<8x32xf32>
    %175 = arith.addf %172, %174 : vector<8x32xf32>
    %176 = math.tanh %175 : vector<8x32xf32>
    %177 = arith.subf %157, %176 : vector<8x32xf32>
    %178 = arith.mulf %171, %177 : vector<8x32xf32>
    %179 = arith.addf %176, %178 : vector<8x32xf32>
    %c5 = arith.constant 5 : index
    %c0_52 = arith.constant 0 : index
    %c0_53 = arith.constant 0 : index
    %180 = vector.load %arg1[%c5, %c0_52, %c0_53] : memref<8x8x32xf32, #tpu.memory_space<vmem>>, vector<1x8x32xf32>
    %181 = vector.shape_cast %180 : vector<1x8x32xf32> to vector<8x32xf32>
    %182 = arith.mulf %181, %179 : vector<8x32xf32>
    %c5_54 = arith.constant 5 : index
    %c0_55 = arith.constant 0 : index
    %c0_56 = arith.constant 0 : index
    %183 = vector.load %arg2[%c5_54, %c0_55, %c0_56] : memref<8x8x32xf32, #tpu.memory_space<vmem>>, vector<1x8x32xf32>
    %184 = vector.shape_cast %183 : vector<1x8x32xf32> to vector<8x32xf32>
    %185 = arith.mulf %184, %157 : vector<8x32xf32>
    %186 = arith.addf %182, %185 : vector<8x32xf32>
    %187 = vector.extract_strided_slice %11 {offsets = [48, 0], sizes = [8, 96], strides = [1, 1]} : vector<64x96xf32> to vector<8x96xf32>
    %cst_57 = arith.constant dense<0.000000e+00> : vector<8x96xf32>
    %188 = tpu.matmul %186, %4, %cst_57 {dimension_numbers = #tpu.dot_dimension_numbers<[1], [0], [0], [1], [0, 0, 1, 1], [], []>} : vector<8x32xf32>, vector<32x96xf32>, vector<8x96xf32> -> vector<8x96xf32>
    %189 = vector.broadcast %8 : vector<1x96xf32> to vector<8x96xf32>
    %190 = arith.addf %188, %189 : vector<8x96xf32>
    %191 = vector.extract_strided_slice %187 {offsets = [0, 0], sizes = [8, 64], strides = [1, 1]} : vector<8x96xf32> to vector<8x64xf32>
    %192 = vector.extract_strided_slice %190 {offsets = [0, 0], sizes = [8, 64], strides = [1, 1]} : vector<8x96xf32> to vector<8x64xf32>
    %193 = arith.addf %191, %192 : vector<8x64xf32>
    %194 = arith.negf %193 : vector<8x64xf32>
    %195 = math.exp %194 : vector<8x64xf32>
    %cst_58 = arith.constant 1.000000e+00 : f32
    %196 = vector.broadcast %cst_58 : f32 to vector<8x64xf32>
    %197 = arith.addf %196, %195 : vector<8x64xf32>
    %198 = arith.divf %196, %197 : vector<8x64xf32>
    %199 = vector.extract_strided_slice %198 {offsets = [0, 0], sizes = [8, 32], strides = [1, 1]} : vector<8x64xf32> to vector<8x32xf32>
    %200 = vector.extract_strided_slice %198 {offsets = [0, 32], sizes = [8, 32], strides = [1, 1]} : vector<8x64xf32> to vector<8x32xf32>
    %201 = vector.extract_strided_slice %187 {offsets = [0, 64], sizes = [8, 32], strides = [1, 1]} : vector<8x96xf32> to vector<8x32xf32>
    %202 = vector.extract_strided_slice %190 {offsets = [0, 64], sizes = [8, 32], strides = [1, 1]} : vector<8x96xf32> to vector<8x32xf32>
    %203 = arith.mulf %199, %202 : vector<8x32xf32>
    %204 = arith.addf %201, %203 : vector<8x32xf32>
    %205 = math.tanh %204 : vector<8x32xf32>
    %206 = arith.subf %186, %205 : vector<8x32xf32>
    %207 = arith.mulf %200, %206 : vector<8x32xf32>
    %208 = arith.addf %205, %207 : vector<8x32xf32>
    %c6 = arith.constant 6 : index
    %c0_59 = arith.constant 0 : index
    %c0_60 = arith.constant 0 : index
    %209 = vector.load %arg1[%c6, %c0_59, %c0_60] : memref<8x8x32xf32, #tpu.memory_space<vmem>>, vector<1x8x32xf32>
    %210 = vector.shape_cast %209 : vector<1x8x32xf32> to vector<8x32xf32>
    %211 = arith.mulf %210, %208 : vector<8x32xf32>
    %c6_61 = arith.constant 6 : index
    %c0_62 = arith.constant 0 : index
    %c0_63 = arith.constant 0 : index
    %212 = vector.load %arg2[%c6_61, %c0_62, %c0_63] : memref<8x8x32xf32, #tpu.memory_space<vmem>>, vector<1x8x32xf32>
    %213 = vector.shape_cast %212 : vector<1x8x32xf32> to vector<8x32xf32>
    %214 = arith.mulf %213, %186 : vector<8x32xf32>
    %215 = arith.addf %211, %214 : vector<8x32xf32>
    %216 = vector.extract_strided_slice %11 {offsets = [56, 0], sizes = [8, 96], strides = [1, 1]} : vector<64x96xf32> to vector<8x96xf32>
    %cst_64 = arith.constant dense<0.000000e+00> : vector<8x96xf32>
    %217 = tpu.matmul %215, %4, %cst_64 {dimension_numbers = #tpu.dot_dimension_numbers<[1], [0], [0], [1], [0, 0, 1, 1], [], []>} : vector<8x32xf32>, vector<32x96xf32>, vector<8x96xf32> -> vector<8x96xf32>
    %218 = vector.broadcast %8 : vector<1x96xf32> to vector<8x96xf32>
    %219 = arith.addf %217, %218 : vector<8x96xf32>
    %220 = vector.extract_strided_slice %216 {offsets = [0, 0], sizes = [8, 64], strides = [1, 1]} : vector<8x96xf32> to vector<8x64xf32>
    %221 = vector.extract_strided_slice %219 {offsets = [0, 0], sizes = [8, 64], strides = [1, 1]} : vector<8x96xf32> to vector<8x64xf32>
    %222 = arith.addf %220, %221 : vector<8x64xf32>
    %223 = arith.negf %222 : vector<8x64xf32>
    %224 = math.exp %223 : vector<8x64xf32>
    %cst_65 = arith.constant 1.000000e+00 : f32
    %225 = vector.broadcast %cst_65 : f32 to vector<8x64xf32>
    %226 = arith.addf %225, %224 : vector<8x64xf32>
    %227 = arith.divf %225, %226 : vector<8x64xf32>
    %228 = vector.extract_strided_slice %227 {offsets = [0, 0], sizes = [8, 32], strides = [1, 1]} : vector<8x64xf32> to vector<8x32xf32>
    %229 = vector.extract_strided_slice %227 {offsets = [0, 32], sizes = [8, 32], strides = [1, 1]} : vector<8x64xf32> to vector<8x32xf32>
    %230 = vector.extract_strided_slice %216 {offsets = [0, 64], sizes = [8, 32], strides = [1, 1]} : vector<8x96xf32> to vector<8x32xf32>
    %231 = vector.extract_strided_slice %219 {offsets = [0, 64], sizes = [8, 32], strides = [1, 1]} : vector<8x96xf32> to vector<8x32xf32>
    %232 = arith.mulf %228, %231 : vector<8x32xf32>
    %233 = arith.addf %230, %232 : vector<8x32xf32>
    %234 = math.tanh %233 : vector<8x32xf32>
    %235 = arith.subf %215, %234 : vector<8x32xf32>
    %236 = arith.mulf %229, %235 : vector<8x32xf32>
    %237 = arith.addf %234, %236 : vector<8x32xf32>
    %c7 = arith.constant 7 : index
    %c0_66 = arith.constant 0 : index
    %c0_67 = arith.constant 0 : index
    %238 = vector.load %arg1[%c7, %c0_66, %c0_67] : memref<8x8x32xf32, #tpu.memory_space<vmem>>, vector<1x8x32xf32>
    %239 = vector.shape_cast %238 : vector<1x8x32xf32> to vector<8x32xf32>
    %240 = arith.mulf %239, %237 : vector<8x32xf32>
    %c7_68 = arith.constant 7 : index
    %c0_69 = arith.constant 0 : index
    %c0_70 = arith.constant 0 : index
    %241 = vector.load %arg2[%c7_68, %c0_69, %c0_70] : memref<8x8x32xf32, #tpu.memory_space<vmem>>, vector<1x8x32xf32>
    %242 = vector.shape_cast %241 : vector<1x8x32xf32> to vector<8x32xf32>
    %243 = arith.mulf %242, %215 : vector<8x32xf32>
    %244 = arith.addf %240, %243 : vector<8x32xf32>
    %c0_71 = arith.constant 0 : index
    %c0_72 = arith.constant 0 : index
    %245 = vector.load %arg8[%c0_71, %c0_72] : memref<8x128xf32, #tpu.memory_space<vmem>>, vector<8x32xf32>
    tpu.vector_store %arg8[%c0_71, %c0_72], %244 {strides = array<i32>} : memref<8x128xf32, #tpu.memory_space<vmem>>, vector<8x32xf32>,
    %246 = tpu.concatenate %37, %66, %95, %124, %153, %182, %211, %240 in 0 : vector<8x32xf32>, vector<8x32xf32>, vector<8x32xf32>, vector<8x32xf32>, vector<8x32xf32>, vector<8x32xf32>, vector<8x32xf32>, vector<8x32xf32> -> vector<64x32xf32>
    %c1_73 = arith.constant 1 : index
    %c0_74 = arith.constant 0 : index
    %c0_75 = arith.constant 0 : index
    %247 = vector.load %arg3[%c1_73, %c0_74, %c0_75] : memref<4x32x96xf32, #tpu.memory_space<vmem>>, vector<1x32x96xf32>
    %248 = vector.shape_cast %247 : vector<1x32x96xf32> to vector<32x96xf32>
    %c1_76 = arith.constant 1 : index
    %c0_77 = arith.constant 0 : index
    %c0_78 = arith.constant 0 : index
    %249 = vector.load %arg4[%c1_76, %c0_77, %c0_78] : memref<4x32x96xf32, #tpu.memory_space<vmem>>, vector<1x32x96xf32>
    %250 = vector.shape_cast %249 : vector<1x32x96xf32> to vector<32x96xf32>
    %c1_79 = arith.constant 1 : index
    %c0_80 = arith.constant 0 : index
    %c0_81 = arith.constant 0 : index
    %251 = vector.load %arg5[%c1_79, %c0_80, %c0_81] : memref<4x1x96xf32, #tpu.memory_space<vmem>>, vector<1x1x96xf32>
    %252 = vector.shape_cast %251 : vector<1x1x96xf32> to vector<1x96xf32>
    %c1_82 = arith.constant 1 : index
    %c0_83 = arith.constant 0 : index
    %c0_84 = arith.constant 0 : index
    %253 = vector.load %arg6[%c1_82, %c0_83, %c0_84] : memref<4x1x96xf32, #tpu.memory_space<vmem>>, vector<1x1x96xf32>
    %254 = vector.shape_cast %253 : vector<1x1x96xf32> to vector<1x96xf32>
    %cst_85 = arith.constant dense<0.000000e+00> : vector<64x96xf32>
    %255 = tpu.matmul %246, %248, %cst_85 {dimension_numbers = #tpu.dot_dimension_numbers<[1], [0], [0], [1], [0, 0, 1, 1], [], []>} : vector<64x32xf32>, vector<32x96xf32>, vector<64x96xf32> -> vector<64x96xf32>
    %256 = vector.broadcast %252 : vector<1x96xf32> to vector<64x96xf32>
    %257 = arith.addf %255, %256 : vector<64x96xf32>
    %cst_86 = arith.constant 0.000000e+00 : f32
    %258 = vector.broadcast %cst_86 : f32 to vector<8x32xf32>
    %259 = vector.extract_strided_slice %257 {offsets = [0, 0], sizes = [8, 96], strides = [1, 1]} : vector<64x96xf32> to vector<8x96xf32>
    %cst_87 = arith.constant dense<0.000000e+00> : vector<8x96xf32>
    %260 = tpu.matmul %258, %250, %cst_87 {dimension_numbers = #tpu.dot_dimension_numbers<[1], [0], [0], [1], [0, 0, 1, 1], [], []>} : vector<8x32xf32>, vector<32x96xf32>, vector<8x96xf32> -> vector<8x96xf32>
    %261 = vector.broadcast %254 : vector<1x96xf32> to vector<8x96xf32>
    %262 = arith.addf %260, %261 : vector<8x96xf32>
    %263 = vector.extract_strided_slice %259 {offsets = [0, 0], sizes = [8, 64], strides = [1, 1]} : vector<8x96xf32> to vector<8x64xf32>
    %264 = vector.extract_strided_slice %262 {offsets = [0, 0], sizes = [8, 64], strides = [1, 1]} : vector<8x96xf32> to vector<8x64xf32>
    %265 = arith.addf %263, %264 : vector<8x64xf32>
    %266 = arith.negf %265 : vector<8x64xf32>
    %267 = math.exp %266 : vector<8x64xf32>
    %cst_88 = arith.constant 1.000000e+00 : f32
    %268 = vector.broadcast %cst_88 : f32 to vector<8x64xf32>
    %269 = arith.addf %268, %267 : vector<8x64xf32>
    %270 = arith.divf %268, %269 : vector<8x64xf32>
    %271 = vector.extract_strided_slice %270 {offsets = [0, 0], sizes = [8, 32], strides = [1, 1]} : vector<8x64xf32> to vector<8x32xf32>
    %272 = vector.extract_strided_slice %270 {offsets = [0, 32], sizes = [8, 32], strides = [1, 1]} : vector<8x64xf32> to vector<8x32xf32>
    %273 = vector.extract_strided_slice %259 {offsets = [0, 64], sizes = [8, 32], strides = [1, 1]} : vector<8x96xf32> to vector<8x32xf32>
    %274 = vector.extract_strided_slice %262 {offsets = [0, 64], sizes = [8, 32], strides = [1, 1]} : vector<8x96xf32> to vector<8x32xf32>
    %275 = arith.mulf %271, %274 : vector<8x32xf32>
    %276 = arith.addf %273, %275 : vector<8x32xf32>
    %277 = math.tanh %276 : vector<8x32xf32>
    %278 = arith.subf %258, %277 : vector<8x32xf32>
    %279 = arith.mulf %272, %278 : vector<8x32xf32>
    %280 = arith.addf %277, %279 : vector<8x32xf32>
    %c0_89 = arith.constant 0 : index
    %c0_90 = arith.constant 0 : index
    %c0_91 = arith.constant 0 : index
    %281 = vector.load %arg1[%c0_89, %c0_90, %c0_91] : memref<8x8x32xf32, #tpu.memory_space<vmem>>, vector<1x8x32xf32>
    %282 = vector.shape_cast %281 : vector<1x8x32xf32> to vector<8x32xf32>
    %283 = arith.mulf %282, %280 : vector<8x32xf32>
    %c0_92 = arith.constant 0 : index
    %c0_93 = arith.constant 0 : index
    %c0_94 = arith.constant 0 : index
    %284 = vector.load %arg2[%c0_92, %c0_93, %c0_94] : memref<8x8x32xf32, #tpu.memory_space<vmem>>, vector<1x8x32xf32>
    %285 = vector.shape_cast %284 : vector<1x8x32xf32> to vector<8x32xf32>
    %286 = arith.mulf %285, %258 : vector<8x32xf32>
    %287 = arith.addf %283, %286 : vector<8x32xf32>
    %288 = vector.extract_strided_slice %257 {offsets = [8, 0], sizes = [8, 96], strides = [1, 1]} : vector<64x96xf32> to vector<8x96xf32>
    %cst_95 = arith.constant dense<0.000000e+00> : vector<8x96xf32>
    %289 = tpu.matmul %287, %250, %cst_95 {dimension_numbers = #tpu.dot_dimension_numbers<[1], [0], [0], [1], [0, 0, 1, 1], [], []>} : vector<8x32xf32>, vector<32x96xf32>, vector<8x96xf32> -> vector<8x96xf32>
    %290 = vector.broadcast %254 : vector<1x96xf32> to vector<8x96xf32>
    %291 = arith.addf %289, %290 : vector<8x96xf32>
    %292 = vector.extract_strided_slice %288 {offsets = [0, 0], sizes = [8, 64], strides = [1, 1]} : vector<8x96xf32> to vector<8x64xf32>
    %293 = vector.extract_strided_slice %291 {offsets = [0, 0], sizes = [8, 64], strides = [1, 1]} : vector<8x96xf32> to vector<8x64xf32>
    %294 = arith.addf %292, %293 : vector<8x64xf32>
    %295 = arith.negf %294 : vector<8x64xf32>
    %296 = math.exp %295 : vector<8x64xf32>
    %cst_96 = arith.constant 1.000000e+00 : f32
    %297 = vector.broadcast %cst_96 : f32 to vector<8x64xf32>
    %298 = arith.addf %297, %296 : vector<8x64xf32>
    %299 = arith.divf %297, %298 : vector<8x64xf32>
    %300 = vector.extract_strided_slice %299 {offsets = [0, 0], sizes = [8, 32], strides = [1, 1]} : vector<8x64xf32> to vector<8x32xf32>
    %301 = vector.extract_strided_slice %299 {offsets = [0, 32], sizes = [8, 32], strides = [1, 1]} : vector<8x64xf32> to vector<8x32xf32>
    %302 = vector.extract_strided_slice %288 {offsets = [0, 64], sizes = [8, 32], strides = [1, 1]} : vector<8x96xf32> to vector<8x32xf32>
    %303 = vector.extract_strided_slice %291 {offsets = [0, 64], sizes = [8, 32], strides = [1, 1]} : vector<8x96xf32> to vector<8x32xf32>
    %304 = arith.mulf %300, %303 : vector<8x32xf32>
    %305 = arith.addf %302, %304 : vector<8x32xf32>
    %306 = math.tanh %305 : vector<8x32xf32>
    %307 = arith.subf %287, %306 : vector<8x32xf32>
    %308 = arith.mulf %301, %307 : vector<8x32xf32>
    %309 = arith.addf %306, %308 : vector<8x32xf32>
    %c1_97 = arith.constant 1 : index
    %c0_98 = arith.constant 0 : index
    %c0_99 = arith.constant 0 : index
    %310 = vector.load %arg1[%c1_97, %c0_98, %c0_99] : memref<8x8x32xf32, #tpu.memory_space<vmem>>, vector<1x8x32xf32>
    %311 = vector.shape_cast %310 : vector<1x8x32xf32> to vector<8x32xf32>
    %312 = arith.mulf %311, %309 : vector<8x32xf32>
    %c1_100 = arith.constant 1 : index
    %c0_101 = arith.constant 0 : index
    %c0_102 = arith.constant 0 : index
    %313 = vector.load %arg2[%c1_100, %c0_101, %c0_102] : memref<8x8x32xf32, #tpu.memory_space<vmem>>, vector<1x8x32xf32>
    %314 = vector.shape_cast %313 : vector<1x8x32xf32> to vector<8x32xf32>
    %315 = arith.mulf %314, %287 : vector<8x32xf32>
    %316 = arith.addf %312, %315 : vector<8x32xf32>
    %317 = vector.extract_strided_slice %257 {offsets = [16, 0], sizes = [8, 96], strides = [1, 1]} : vector<64x96xf32> to vector<8x96xf32>
    %cst_103 = arith.constant dense<0.000000e+00> : vector<8x96xf32>
    %318 = tpu.matmul %316, %250, %cst_103 {dimension_numbers = #tpu.dot_dimension_numbers<[1], [0], [0], [1], [0, 0, 1, 1], [], []>} : vector<8x32xf32>, vector<32x96xf32>, vector<8x96xf32> -> vector<8x96xf32>
    %319 = vector.broadcast %254 : vector<1x96xf32> to vector<8x96xf32>
    %320 = arith.addf %318, %319 : vector<8x96xf32>
    %321 = vector.extract_strided_slice %317 {offsets = [0, 0], sizes = [8, 64], strides = [1, 1]} : vector<8x96xf32> to vector<8x64xf32>
    %322 = vector.extract_strided_slice %320 {offsets = [0, 0], sizes = [8, 64], strides = [1, 1]} : vector<8x96xf32> to vector<8x64xf32>
    %323 = arith.addf %321, %322 : vector<8x64xf32>
    %324 = arith.negf %323 : vector<8x64xf32>
    %325 = math.exp %324 : vector<8x64xf32>
    %cst_104 = arith.constant 1.000000e+00 : f32
    %326 = vector.broadcast %cst_104 : f32 to vector<8x64xf32>
    %327 = arith.addf %326, %325 : vector<8x64xf32>
    %328 = arith.divf %326, %327 : vector<8x64xf32>
    %329 = vector.extract_strided_slice %328 {offsets = [0, 0], sizes = [8, 32], strides = [1, 1]} : vector<8x64xf32> to vector<8x32xf32>
    %330 = vector.extract_strided_slice %328 {offsets = [0, 32], sizes = [8, 32], strides = [1, 1]} : vector<8x64xf32> to vector<8x32xf32>
    %331 = vector.extract_strided_slice %317 {offsets = [0, 64], sizes = [8, 32], strides = [1, 1]} : vector<8x96xf32> to vector<8x32xf32>
    %332 = vector.extract_strided_slice %320 {offsets = [0, 64], sizes = [8, 32], strides = [1, 1]} : vector<8x96xf32> to vector<8x32xf32>
    %333 = arith.mulf %329, %332 : vector<8x32xf32>
    %334 = arith.addf %331, %333 : vector<8x32xf32>
    %335 = math.tanh %334 : vector<8x32xf32>
    %336 = arith.subf %316, %335 : vector<8x32xf32>
    %337 = arith.mulf %330, %336 : vector<8x32xf32>
    %338 = arith.addf %335, %337 : vector<8x32xf32>
    %c2_105 = arith.constant 2 : index
    %c0_106 = arith.constant 0 : index
    %c0_107 = arith.constant 0 : index
    %339 = vector.load %arg1[%c2_105, %c0_106, %c0_107] : memref<8x8x32xf32, #tpu.memory_space<vmem>>, vector<1x8x32xf32>
    %340 = vector.shape_cast %339 : vector<1x8x32xf32> to vector<8x32xf32>
    %341 = arith.mulf %340, %338 : vector<8x32xf32>
    %c2_108 = arith.constant 2 : index
    %c0_109 = arith.constant 0 : index
    %c0_110 = arith.constant 0 : index
    %342 = vector.load %arg2[%c2_108, %c0_109, %c0_110] : memref<8x8x32xf32, #tpu.memory_space<vmem>>, vector<1x8x32xf32>
    %343 = vector.shape_cast %342 : vector<1x8x32xf32> to vector<8x32xf32>
    %344 = arith.mulf %343, %316 : vector<8x32xf32>
    %345 = arith.addf %341, %344 : vector<8x32xf32>
    %346 = vector.extract_strided_slice %257 {offsets = [24, 0], sizes = [8, 96], strides = [1, 1]} : vector<64x96xf32> to vector<8x96xf32>
    %cst_111 = arith.constant dense<0.000000e+00> : vector<8x96xf32>
    %347 = tpu.matmul %345, %250, %cst_111 {dimension_numbers = #tpu.dot_dimension_numbers<[1], [0], [0], [1], [0, 0, 1, 1], [], []>} : vector<8x32xf32>, vector<32x96xf32>, vector<8x96xf32> -> vector<8x96xf32>
    %348 = vector.broadcast %254 : vector<1x96xf32> to vector<8x96xf32>
    %349 = arith.addf %347, %348 : vector<8x96xf32>
    %350 = vector.extract_strided_slice %346 {offsets = [0, 0], sizes = [8, 64], strides = [1, 1]} : vector<8x96xf32> to vector<8x64xf32>
    %351 = vector.extract_strided_slice %349 {offsets = [0, 0], sizes = [8, 64], strides = [1, 1]} : vector<8x96xf32> to vector<8x64xf32>
    %352 = arith.addf %350, %351 : vector<8x64xf32>
    %353 = arith.negf %352 : vector<8x64xf32>
    %354 = math.exp %353 : vector<8x64xf32>
    %cst_112 = arith.constant 1.000000e+00 : f32
    %355 = vector.broadcast %cst_112 : f32 to vector<8x64xf32>
    %356 = arith.addf %355, %354 : vector<8x64xf32>
    %357 = arith.divf %355, %356 : vector<8x64xf32>
    %358 = vector.extract_strided_slice %357 {offsets = [0, 0], sizes = [8, 32], strides = [1, 1]} : vector<8x64xf32> to vector<8x32xf32>
    %359 = vector.extract_strided_slice %357 {offsets = [0, 32], sizes = [8, 32], strides = [1, 1]} : vector<8x64xf32> to vector<8x32xf32>
    %360 = vector.extract_strided_slice %346 {offsets = [0, 64], sizes = [8, 32], strides = [1, 1]} : vector<8x96xf32> to vector<8x32xf32>
    %361 = vector.extract_strided_slice %349 {offsets = [0, 64], sizes = [8, 32], strides = [1, 1]} : vector<8x96xf32> to vector<8x32xf32>
    %362 = arith.mulf %358, %361 : vector<8x32xf32>
    %363 = arith.addf %360, %362 : vector<8x32xf32>
    %364 = math.tanh %363 : vector<8x32xf32>
    %365 = arith.subf %345, %364 : vector<8x32xf32>
    %366 = arith.mulf %359, %365 : vector<8x32xf32>
    %367 = arith.addf %364, %366 : vector<8x32xf32>
    %c3_113 = arith.constant 3 : index
    %c0_114 = arith.constant 0 : index
    %c0_115 = arith.constant 0 : index
    %368 = vector.load %arg1[%c3_113, %c0_114, %c0_115] : memref<8x8x32xf32, #tpu.memory_space<vmem>>, vector<1x8x32xf32>
    %369 = vector.shape_cast %368 : vector<1x8x32xf32> to vector<8x32xf32>
    %370 = arith.mulf %369, %367 : vector<8x32xf32>
    %c3_116 = arith.constant 3 : index
    %c0_117 = arith.constant 0 : index
    %c0_118 = arith.constant 0 : index
    %371 = vector.load %arg2[%c3_116, %c0_117, %c0_118] : memref<8x8x32xf32, #tpu.memory_space<vmem>>, vector<1x8x32xf32>
    %372 = vector.shape_cast %371 : vector<1x8x32xf32> to vector<8x32xf32>
    %373 = arith.mulf %372, %345 : vector<8x32xf32>
    %374 = arith.addf %370, %373 : vector<8x32xf32>
    %375 = vector.extract_strided_slice %257 {offsets = [32, 0], sizes = [8, 96], strides = [1, 1]} : vector<64x96xf32> to vector<8x96xf32>
    %cst_119 = arith.constant dense<0.000000e+00> : vector<8x96xf32>
    %376 = tpu.matmul %374, %250, %cst_119 {dimension_numbers = #tpu.dot_dimension_numbers<[1], [0], [0], [1], [0, 0, 1, 1], [], []>} : vector<8x32xf32>, vector<32x96xf32>, vector<8x96xf32> -> vector<8x96xf32>
    %377 = vector.broadcast %254 : vector<1x96xf32> to vector<8x96xf32>
    %378 = arith.addf %376, %377 : vector<8x96xf32>
    %379 = vector.extract_strided_slice %375 {offsets = [0, 0], sizes = [8, 64], strides = [1, 1]} : vector<8x96xf32> to vector<8x64xf32>
    %380 = vector.extract_strided_slice %378 {offsets = [0, 0], sizes = [8, 64], strides = [1, 1]} : vector<8x96xf32> to vector<8x64xf32>
    %381 = arith.addf %379, %380 : vector<8x64xf32>
    %382 = arith.negf %381 : vector<8x64xf32>
    %383 = math.exp %382 : vector<8x64xf32>
    %cst_120 = arith.constant 1.000000e+00 : f32
    %384 = vector.broadcast %cst_120 : f32 to vector<8x64xf32>
    %385 = arith.addf %384, %383 : vector<8x64xf32>
    %386 = arith.divf %384, %385 : vector<8x64xf32>
    %387 = vector.extract_strided_slice %386 {offsets = [0, 0], sizes = [8, 32], strides = [1, 1]} : vector<8x64xf32> to vector<8x32xf32>
    %388 = vector.extract_strided_slice %386 {offsets = [0, 32], sizes = [8, 32], strides = [1, 1]} : vector<8x64xf32> to vector<8x32xf32>
    %389 = vector.extract_strided_slice %375 {offsets = [0, 64], sizes = [8, 32], strides = [1, 1]} : vector<8x96xf32> to vector<8x32xf32>
    %390 = vector.extract_strided_slice %378 {offsets = [0, 64], sizes = [8, 32], strides = [1, 1]} : vector<8x96xf32> to vector<8x32xf32>
    %391 = arith.mulf %387, %390 : vector<8x32xf32>
    %392 = arith.addf %389, %391 : vector<8x32xf32>
    %393 = math.tanh %392 : vector<8x32xf32>
    %394 = arith.subf %374, %393 : vector<8x32xf32>
    %395 = arith.mulf %388, %394 : vector<8x32xf32>
    %396 = arith.addf %393, %395 : vector<8x32xf32>
    %c4_121 = arith.constant 4 : index
    %c0_122 = arith.constant 0 : index
    %c0_123 = arith.constant 0 : index
    %397 = vector.load %arg1[%c4_121, %c0_122, %c0_123] : memref<8x8x32xf32, #tpu.memory_space<vmem>>, vector<1x8x32xf32>
    %398 = vector.shape_cast %397 : vector<1x8x32xf32> to vector<8x32xf32>
    %399 = arith.mulf %398, %396 : vector<8x32xf32>
    %c4_124 = arith.constant 4 : index
    %c0_125 = arith.constant 0 : index
    %c0_126 = arith.constant 0 : index
    %400 = vector.load %arg2[%c4_124, %c0_125, %c0_126] : memref<8x8x32xf32, #tpu.memory_space<vmem>>, vector<1x8x32xf32>
    %401 = vector.shape_cast %400 : vector<1x8x32xf32> to vector<8x32xf32>
    %402 = arith.mulf %401, %374 : vector<8x32xf32>
    %403 = arith.addf %399, %402 : vector<8x32xf32>
    %404 = vector.extract_strided_slice %257 {offsets = [40, 0], sizes = [8, 96], strides = [1, 1]} : vector<64x96xf32> to vector<8x96xf32>
    %cst_127 = arith.constant dense<0.000000e+00> : vector<8x96xf32>
    %405 = tpu.matmul %403, %250, %cst_127 {dimension_numbers = #tpu.dot_dimension_numbers<[1], [0], [0], [1], [0, 0, 1, 1], [], []>} : vector<8x32xf32>, vector<32x96xf32>, vector<8x96xf32> -> vector<8x96xf32>
    %406 = vector.broadcast %254 : vector<1x96xf32> to vector<8x96xf32>
    %407 = arith.addf %405, %406 : vector<8x96xf32>
    %408 = vector.extract_strided_slice %404 {offsets = [0, 0], sizes = [8, 64], strides = [1, 1]} : vector<8x96xf32> to vector<8x64xf32>
    %409 = vector.extract_strided_slice %407 {offsets = [0, 0], sizes = [8, 64], strides = [1, 1]} : vector<8x96xf32> to vector<8x64xf32>
    %410 = arith.addf %408, %409 : vector<8x64xf32>
    %411 = arith.negf %410 : vector<8x64xf32>
    %412 = math.exp %411 : vector<8x64xf32>
    %cst_128 = arith.constant 1.000000e+00 : f32
    %413 = vector.broadcast %cst_128 : f32 to vector<8x64xf32>
    %414 = arith.addf %413, %412 : vector<8x64xf32>
    %415 = arith.divf %413, %414 : vector<8x64xf32>
    %416 = vector.extract_strided_slice %415 {offsets = [0, 0], sizes = [8, 32], strides = [1, 1]} : vector<8x64xf32> to vector<8x32xf32>
    %417 = vector.extract_strided_slice %415 {offsets = [0, 32], sizes = [8, 32], strides = [1, 1]} : vector<8x64xf32> to vector<8x32xf32>
    %418 = vector.extract_strided_slice %404 {offsets = [0, 64], sizes = [8, 32], strides = [1, 1]} : vector<8x96xf32> to vector<8x32xf32>
    %419 = vector.extract_strided_slice %407 {offsets = [0, 64], sizes = [8, 32], strides = [1, 1]} : vector<8x96xf32> to vector<8x32xf32>
    %420 = arith.mulf %416, %419 : vector<8x32xf32>
    %421 = arith.addf %418, %420 : vector<8x32xf32>
    %422 = math.tanh %421 : vector<8x32xf32>
    %423 = arith.subf %403, %422 : vector<8x32xf32>
    %424 = arith.mulf %417, %423 : vector<8x32xf32>
    %425 = arith.addf %422, %424 : vector<8x32xf32>
    %c5_129 = arith.constant 5 : index
    %c0_130 = arith.constant 0 : index
    %c0_131 = arith.constant 0 : index
    %426 = vector.load %arg1[%c5_129, %c0_130, %c0_131] : memref<8x8x32xf32, #tpu.memory_space<vmem>>, vector<1x8x32xf32>
    %427 = vector.shape_cast %426 : vector<1x8x32xf32> to vector<8x32xf32>
    %428 = arith.mulf %427, %425 : vector<8x32xf32>
    %c5_132 = arith.constant 5 : index
    %c0_133 = arith.constant 0 : index
    %c0_134 = arith.constant 0 : index
    %429 = vector.load %arg2[%c5_132, %c0_133, %c0_134] : memref<8x8x32xf32, #tpu.memory_space<vmem>>, vector<1x8x32xf32>
    %430 = vector.shape_cast %429 : vector<1x8x32xf32> to vector<8x32xf32>
    %431 = arith.mulf %430, %403 : vector<8x32xf32>
    %432 = arith.addf %428, %431 : vector<8x32xf32>
    %433 = vector.extract_strided_slice %257 {offsets = [48, 0], sizes = [8, 96], strides = [1, 1]} : vector<64x96xf32> to vector<8x96xf32>
    %cst_135 = arith.constant dense<0.000000e+00> : vector<8x96xf32>
    %434 = tpu.matmul %432, %250, %cst_135 {dimension_numbers = #tpu.dot_dimension_numbers<[1], [0], [0], [1], [0, 0, 1, 1], [], []>} : vector<8x32xf32>, vector<32x96xf32>, vector<8x96xf32> -> vector<8x96xf32>
    %435 = vector.broadcast %254 : vector<1x96xf32> to vector<8x96xf32>
    %436 = arith.addf %434, %435 : vector<8x96xf32>
    %437 = vector.extract_strided_slice %433 {offsets = [0, 0], sizes = [8, 64], strides = [1, 1]} : vector<8x96xf32> to vector<8x64xf32>
    %438 = vector.extract_strided_slice %436 {offsets = [0, 0], sizes = [8, 64], strides = [1, 1]} : vector<8x96xf32> to vector<8x64xf32>
    %439 = arith.addf %437, %438 : vector<8x64xf32>
    %440 = arith.negf %439 : vector<8x64xf32>
    %441 = math.exp %440 : vector<8x64xf32>
    %cst_136 = arith.constant 1.000000e+00 : f32
    %442 = vector.broadcast %cst_136 : f32 to vector<8x64xf32>
    %443 = arith.addf %442, %441 : vector<8x64xf32>
    %444 = arith.divf %442, %443 : vector<8x64xf32>
    %445 = vector.extract_strided_slice %444 {offsets = [0, 0], sizes = [8, 32], strides = [1, 1]} : vector<8x64xf32> to vector<8x32xf32>
    %446 = vector.extract_strided_slice %444 {offsets = [0, 32], sizes = [8, 32], strides = [1, 1]} : vector<8x64xf32> to vector<8x32xf32>
    %447 = vector.extract_strided_slice %433 {offsets = [0, 64], sizes = [8, 32], strides = [1, 1]} : vector<8x96xf32> to vector<8x32xf32>
    %448 = vector.extract_strided_slice %436 {offsets = [0, 64], sizes = [8, 32], strides = [1, 1]} : vector<8x96xf32> to vector<8x32xf32>
    %449 = arith.mulf %445, %448 : vector<8x32xf32>
    %450 = arith.addf %447, %449 : vector<8x32xf32>
    %451 = math.tanh %450 : vector<8x32xf32>
    %452 = arith.subf %432, %451 : vector<8x32xf32>
    %453 = arith.mulf %446, %452 : vector<8x32xf32>
    %454 = arith.addf %451, %453 : vector<8x32xf32>
    %c6_137 = arith.constant 6 : index
    %c0_138 = arith.constant 0 : index
    %c0_139 = arith.constant 0 : index
    %455 = vector.load %arg1[%c6_137, %c0_138, %c0_139] : memref<8x8x32xf32, #tpu.memory_space<vmem>>, vector<1x8x32xf32>
    %456 = vector.shape_cast %455 : vector<1x8x32xf32> to vector<8x32xf32>
    %457 = arith.mulf %456, %454 : vector<8x32xf32>
    %c6_140 = arith.constant 6 : index
    %c0_141 = arith.constant 0 : index
    %c0_142 = arith.constant 0 : index
    %458 = vector.load %arg2[%c6_140, %c0_141, %c0_142] : memref<8x8x32xf32, #tpu.memory_space<vmem>>, vector<1x8x32xf32>
    %459 = vector.shape_cast %458 : vector<1x8x32xf32> to vector<8x32xf32>
    %460 = arith.mulf %459, %432 : vector<8x32xf32>
    %461 = arith.addf %457, %460 : vector<8x32xf32>
    %462 = vector.extract_strided_slice %257 {offsets = [56, 0], sizes = [8, 96], strides = [1, 1]} : vector<64x96xf32> to vector<8x96xf32>
    %cst_143 = arith.constant dense<0.000000e+00> : vector<8x96xf32>
    %463 = tpu.matmul %461, %250, %cst_143 {dimension_numbers = #tpu.dot_dimension_numbers<[1], [0], [0], [1], [0, 0, 1, 1], [], []>} : vector<8x32xf32>, vector<32x96xf32>, vector<8x96xf32> -> vector<8x96xf32>
    %464 = vector.broadcast %254 : vector<1x96xf32> to vector<8x96xf32>
    %465 = arith.addf %463, %464 : vector<8x96xf32>
    %466 = vector.extract_strided_slice %462 {offsets = [0, 0], sizes = [8, 64], strides = [1, 1]} : vector<8x96xf32> to vector<8x64xf32>
    %467 = vector.extract_strided_slice %465 {offsets = [0, 0], sizes = [8, 64], strides = [1, 1]} : vector<8x96xf32> to vector<8x64xf32>
    %468 = arith.addf %466, %467 : vector<8x64xf32>
    %469 = arith.negf %468 : vector<8x64xf32>
    %470 = math.exp %469 : vector<8x64xf32>
    %cst_144 = arith.constant 1.000000e+00 : f32
    %471 = vector.broadcast %cst_144 : f32 to vector<8x64xf32>
    %472 = arith.addf %471, %470 : vector<8x64xf32>
    %473 = arith.divf %471, %472 : vector<8x64xf32>
    %474 = vector.extract_strided_slice %473 {offsets = [0, 0], sizes = [8, 32], strides = [1, 1]} : vector<8x64xf32> to vector<8x32xf32>
    %475 = vector.extract_strided_slice %473 {offsets = [0, 32], sizes = [8, 32], strides = [1, 1]} : vector<8x64xf32> to vector<8x32xf32>
    %476 = vector.extract_strided_slice %462 {offsets = [0, 64], sizes = [8, 32], strides = [1, 1]} : vector<8x96xf32> to vector<8x32xf32>
    %477 = vector.extract_strided_slice %465 {offsets = [0, 64], sizes = [8, 32], strides = [1, 1]} : vector<8x96xf32> to vector<8x32xf32>
    %478 = arith.mulf %474, %477 : vector<8x32xf32>
    %479 = arith.addf %476, %478 : vector<8x32xf32>
    %480 = math.tanh %479 : vector<8x32xf32>
    %481 = arith.subf %461, %480 : vector<8x32xf32>
    %482 = arith.mulf %475, %481 : vector<8x32xf32>
    %483 = arith.addf %480, %482 : vector<8x32xf32>
    %c7_145 = arith.constant 7 : index
    %c0_146 = arith.constant 0 : index
    %c0_147 = arith.constant 0 : index
    %484 = vector.load %arg1[%c7_145, %c0_146, %c0_147] : memref<8x8x32xf32, #tpu.memory_space<vmem>>, vector<1x8x32xf32>
    %485 = vector.shape_cast %484 : vector<1x8x32xf32> to vector<8x32xf32>
    %486 = arith.mulf %485, %483 : vector<8x32xf32>
    %c7_148 = arith.constant 7 : index
    %c0_149 = arith.constant 0 : index
    %c0_150 = arith.constant 0 : index
    %487 = vector.load %arg2[%c7_148, %c0_149, %c0_150] : memref<8x8x32xf32, #tpu.memory_space<vmem>>, vector<1x8x32xf32>
    %488 = vector.shape_cast %487 : vector<1x8x32xf32> to vector<8x32xf32>
    %489 = arith.mulf %488, %461 : vector<8x32xf32>
    %490 = arith.addf %486, %489 : vector<8x32xf32>
    %c0_151 = arith.constant 0 : index
    %c32 = arith.constant 32 : index
    %491 = vector.load %arg8[%c0_151, %c32] : memref<8x128xf32, #tpu.memory_space<vmem>>, vector<8x32xf32>
    tpu.vector_store %arg8[%c0_151, %c32], %490 {strides = array<i32>} : memref<8x128xf32, #tpu.memory_space<vmem>>, vector<8x32xf32>,
    %492 = tpu.concatenate %283, %312, %341, %370, %399, %428, %457, %486 in 0 : vector<8x32xf32>, vector<8x32xf32>, vector<8x32xf32>, vector<8x32xf32>, vector<8x32xf32>, vector<8x32xf32>, vector<8x32xf32>, vector<8x32xf32> -> vector<64x32xf32>
    %c2_152 = arith.constant 2 : index
    %c0_153 = arith.constant 0 : index
    %c0_154 = arith.constant 0 : index
    %493 = vector.load %arg3[%c2_152, %c0_153, %c0_154] : memref<4x32x96xf32, #tpu.memory_space<vmem>>, vector<1x32x96xf32>
    %494 = vector.shape_cast %493 : vector<1x32x96xf32> to vector<32x96xf32>
    %c2_155 = arith.constant 2 : index
    %c0_156 = arith.constant 0 : index
    %c0_157 = arith.constant 0 : index
    %495 = vector.load %arg4[%c2_155, %c0_156, %c0_157] : memref<4x32x96xf32, #tpu.memory_space<vmem>>, vector<1x32x96xf32>
    %496 = vector.shape_cast %495 : vector<1x32x96xf32> to vector<32x96xf32>
    %c2_158 = arith.constant 2 : index
    %c0_159 = arith.constant 0 : index
    %c0_160 = arith.constant 0 : index
    %497 = vector.load %arg5[%c2_158, %c0_159, %c0_160] : memref<4x1x96xf32, #tpu.memory_space<vmem>>, vector<1x1x96xf32>
    %498 = vector.shape_cast %497 : vector<1x1x96xf32> to vector<1x96xf32>
    %c2_161 = arith.constant 2 : index
    %c0_162 = arith.constant 0 : index
    %c0_163 = arith.constant 0 : index
    %499 = vector.load %arg6[%c2_161, %c0_162, %c0_163] : memref<4x1x96xf32, #tpu.memory_space<vmem>>, vector<1x1x96xf32>
    %500 = vector.shape_cast %499 : vector<1x1x96xf32> to vector<1x96xf32>
    %cst_164 = arith.constant dense<0.000000e+00> : vector<64x96xf32>
    %501 = tpu.matmul %492, %494, %cst_164 {dimension_numbers = #tpu.dot_dimension_numbers<[1], [0], [0], [1], [0, 0, 1, 1], [], []>} : vector<64x32xf32>, vector<32x96xf32>, vector<64x96xf32> -> vector<64x96xf32>
    %502 = vector.broadcast %498 : vector<1x96xf32> to vector<64x96xf32>
    %503 = arith.addf %501, %502 : vector<64x96xf32>
    %cst_165 = arith.constant 0.000000e+00 : f32
    %504 = vector.broadcast %cst_165 : f32 to vector<8x32xf32>
    %505 = vector.extract_strided_slice %503 {offsets = [0, 0], sizes = [8, 96], strides = [1, 1]} : vector<64x96xf32> to vector<8x96xf32>
    %cst_166 = arith.constant dense<0.000000e+00> : vector<8x96xf32>
    %506 = tpu.matmul %504, %496, %cst_166 {dimension_numbers = #tpu.dot_dimension_numbers<[1], [0], [0], [1], [0, 0, 1, 1], [], []>} : vector<8x32xf32>, vector<32x96xf32>, vector<8x96xf32> -> vector<8x96xf32>
    %507 = vector.broadcast %500 : vector<1x96xf32> to vector<8x96xf32>
    %508 = arith.addf %506, %507 : vector<8x96xf32>
    %509 = vector.extract_strided_slice %505 {offsets = [0, 0], sizes = [8, 64], strides = [1, 1]} : vector<8x96xf32> to vector<8x64xf32>
    %510 = vector.extract_strided_slice %508 {offsets = [0, 0], sizes = [8, 64], strides = [1, 1]} : vector<8x96xf32> to vector<8x64xf32>
    %511 = arith.addf %509, %510 : vector<8x64xf32>
    %512 = arith.negf %511 : vector<8x64xf32>
    %513 = math.exp %512 : vector<8x64xf32>
    %cst_167 = arith.constant 1.000000e+00 : f32
    %514 = vector.broadcast %cst_167 : f32 to vector<8x64xf32>
    %515 = arith.addf %514, %513 : vector<8x64xf32>
    %516 = arith.divf %514, %515 : vector<8x64xf32>
    %517 = vector.extract_strided_slice %516 {offsets = [0, 0], sizes = [8, 32], strides = [1, 1]} : vector<8x64xf32> to vector<8x32xf32>
    %518 = vector.extract_strided_slice %516 {offsets = [0, 32], sizes = [8, 32], strides = [1, 1]} : vector<8x64xf32> to vector<8x32xf32>
    %519 = vector.extract_strided_slice %505 {offsets = [0, 64], sizes = [8, 32], strides = [1, 1]} : vector<8x96xf32> to vector<8x32xf32>
    %520 = vector.extract_strided_slice %508 {offsets = [0, 64], sizes = [8, 32], strides = [1, 1]} : vector<8x96xf32> to vector<8x32xf32>
    %521 = arith.mulf %517, %520 : vector<8x32xf32>
    %522 = arith.addf %519, %521 : vector<8x32xf32>
    %523 = math.tanh %522 : vector<8x32xf32>
    %524 = arith.subf %504, %523 : vector<8x32xf32>
    %525 = arith.mulf %518, %524 : vector<8x32xf32>
    %526 = arith.addf %523, %525 : vector<8x32xf32>
    %c0_168 = arith.constant 0 : index
    %c0_169 = arith.constant 0 : index
    %c0_170 = arith.constant 0 : index
    %527 = vector.load %arg1[%c0_168, %c0_169, %c0_170] : memref<8x8x32xf32, #tpu.memory_space<vmem>>, vector<1x8x32xf32>
    %528 = vector.shape_cast %527 : vector<1x8x32xf32> to vector<8x32xf32>
    %529 = arith.mulf %528, %526 : vector<8x32xf32>
    %c0_171 = arith.constant 0 : index
    %c0_172 = arith.constant 0 : index
    %c0_173 = arith.constant 0 : index
    %530 = vector.load %arg2[%c0_171, %c0_172, %c0_173] : memref<8x8x32xf32, #tpu.memory_space<vmem>>, vector<1x8x32xf32>
    %531 = vector.shape_cast %530 : vector<1x8x32xf32> to vector<8x32xf32>
    %532 = arith.mulf %531, %504 : vector<8x32xf32>
    %533 = arith.addf %529, %532 : vector<8x32xf32>
    %534 = vector.extract_strided_slice %503 {offsets = [8, 0], sizes = [8, 96], strides = [1, 1]} : vector<64x96xf32> to vector<8x96xf32>
    %cst_174 = arith.constant dense<0.000000e+00> : vector<8x96xf32>
    %535 = tpu.matmul %533, %496, %cst_174 {dimension_numbers = #tpu.dot_dimension_numbers<[1], [0], [0], [1], [0, 0, 1, 1], [], []>} : vector<8x32xf32>, vector<32x96xf32>, vector<8x96xf32> -> vector<8x96xf32>
    %536 = vector.broadcast %500 : vector<1x96xf32> to vector<8x96xf32>
    %537 = arith.addf %535, %536 : vector<8x96xf32>
    %538 = vector.extract_strided_slice %534 {offsets = [0, 0], sizes = [8, 64], strides = [1, 1]} : vector<8x96xf32> to vector<8x64xf32>
    %539 = vector.extract_strided_slice %537 {offsets = [0, 0], sizes = [8, 64], strides = [1, 1]} : vector<8x96xf32> to vector<8x64xf32>
    %540 = arith.addf %538, %539 : vector<8x64xf32>
    %541 = arith.negf %540 : vector<8x64xf32>
    %542 = math.exp %541 : vector<8x64xf32>
    %cst_175 = arith.constant 1.000000e+00 : f32
    %543 = vector.broadcast %cst_175 : f32 to vector<8x64xf32>
    %544 = arith.addf %543, %542 : vector<8x64xf32>
    %545 = arith.divf %543, %544 : vector<8x64xf32>
    %546 = vector.extract_strided_slice %545 {offsets = [0, 0], sizes = [8, 32], strides = [1, 1]} : vector<8x64xf32> to vector<8x32xf32>
    %547 = vector.extract_strided_slice %545 {offsets = [0, 32], sizes = [8, 32], strides = [1, 1]} : vector<8x64xf32> to vector<8x32xf32>
    %548 = vector.extract_strided_slice %534 {offsets = [0, 64], sizes = [8, 32], strides = [1, 1]} : vector<8x96xf32> to vector<8x32xf32>
    %549 = vector.extract_strided_slice %537 {offsets = [0, 64], sizes = [8, 32], strides = [1, 1]} : vector<8x96xf32> to vector<8x32xf32>
    %550 = arith.mulf %546, %549 : vector<8x32xf32>
    %551 = arith.addf %548, %550 : vector<8x32xf32>
    %552 = math.tanh %551 : vector<8x32xf32>
    %553 = arith.subf %533, %552 : vector<8x32xf32>
    %554 = arith.mulf %547, %553 : vector<8x32xf32>
    %555 = arith.addf %552, %554 : vector<8x32xf32>
    %c1_176 = arith.constant 1 : index
    %c0_177 = arith.constant 0 : index
    %c0_178 = arith.constant 0 : index
    %556 = vector.load %arg1[%c1_176, %c0_177, %c0_178] : memref<8x8x32xf32, #tpu.memory_space<vmem>>, vector<1x8x32xf32>
    %557 = vector.shape_cast %556 : vector<1x8x32xf32> to vector<8x32xf32>
    %558 = arith.mulf %557, %555 : vector<8x32xf32>
    %c1_179 = arith.constant 1 : index
    %c0_180 = arith.constant 0 : index
    %c0_181 = arith.constant 0 : index
    %559 = vector.load %arg2[%c1_179, %c0_180, %c0_181] : memref<8x8x32xf32, #tpu.memory_space<vmem>>, vector<1x8x32xf32>
    %560 = vector.shape_cast %559 : vector<1x8x32xf32> to vector<8x32xf32>
    %561 = arith.mulf %560, %533 : vector<8x32xf32>
    %562 = arith.addf %558, %561 : vector<8x32xf32>
    %563 = vector.extract_strided_slice %503 {offsets = [16, 0], sizes = [8, 96], strides = [1, 1]} : vector<64x96xf32> to vector<8x96xf32>
    %cst_182 = arith.constant dense<0.000000e+00> : vector<8x96xf32>
    %564 = tpu.matmul %562, %496, %cst_182 {dimension_numbers = #tpu.dot_dimension_numbers<[1], [0], [0], [1], [0, 0, 1, 1], [], []>} : vector<8x32xf32>, vector<32x96xf32>, vector<8x96xf32> -> vector<8x96xf32>
    %565 = vector.broadcast %500 : vector<1x96xf32> to vector<8x96xf32>
    %566 = arith.addf %564, %565 : vector<8x96xf32>
    %567 = vector.extract_strided_slice %563 {offsets = [0, 0], sizes = [8, 64], strides = [1, 1]} : vector<8x96xf32> to vector<8x64xf32>
    %568 = vector.extract_strided_slice %566 {offsets = [0, 0], sizes = [8, 64], strides = [1, 1]} : vector<8x96xf32> to vector<8x64xf32>
    %569 = arith.addf %567, %568 : vector<8x64xf32>
    %570 = arith.negf %569 : vector<8x64xf32>
    %571 = math.exp %570 : vector<8x64xf32>
    %cst_183 = arith.constant 1.000000e+00 : f32
    %572 = vector.broadcast %cst_183 : f32 to vector<8x64xf32>
    %573 = arith.addf %572, %571 : vector<8x64xf32>
    %574 = arith.divf %572, %573 : vector<8x64xf32>
    %575 = vector.extract_strided_slice %574 {offsets = [0, 0], sizes = [8, 32], strides = [1, 1]} : vector<8x64xf32> to vector<8x32xf32>
    %576 = vector.extract_strided_slice %574 {offsets = [0, 32], sizes = [8, 32], strides = [1, 1]} : vector<8x64xf32> to vector<8x32xf32>
    %577 = vector.extract_strided_slice %563 {offsets = [0, 64], sizes = [8, 32], strides = [1, 1]} : vector<8x96xf32> to vector<8x32xf32>
    %578 = vector.extract_strided_slice %566 {offsets = [0, 64], sizes = [8, 32], strides = [1, 1]} : vector<8x96xf32> to vector<8x32xf32>
    %579 = arith.mulf %575, %578 : vector<8x32xf32>
    %580 = arith.addf %577, %579 : vector<8x32xf32>
    %581 = math.tanh %580 : vector<8x32xf32>
    %582 = arith.subf %562, %581 : vector<8x32xf32>
    %583 = arith.mulf %576, %582 : vector<8x32xf32>
    %584 = arith.addf %581, %583 : vector<8x32xf32>
    %c2_184 = arith.constant 2 : index
    %c0_185 = arith.constant 0 : index
    %c0_186 = arith.constant 0 : index
    %585 = vector.load %arg1[%c2_184, %c0_185, %c0_186] : memref<8x8x32xf32, #tpu.memory_space<vmem>>, vector<1x8x32xf32>
    %586 = vector.shape_cast %585 : vector<1x8x32xf32> to vector<8x32xf32>
    %587 = arith.mulf %586, %584 : vector<8x32xf32>
    %c2_187 = arith.constant 2 : index
    %c0_188 = arith.constant 0 : index
    %c0_189 = arith.constant 0 : index
    %588 = vector.load %arg2[%c2_187, %c0_188, %c0_189] : memref<8x8x32xf32, #tpu.memory_space<vmem>>, vector<1x8x32xf32>
    %589 = vector.shape_cast %588 : vector<1x8x32xf32> to vector<8x32xf32>
    %590 = arith.mulf %589, %562 : vector<8x32xf32>
    %591 = arith.addf %587, %590 : vector<8x32xf32>
    %592 = vector.extract_strided_slice %503 {offsets = [24, 0], sizes = [8, 96], strides = [1, 1]} : vector<64x96xf32> to vector<8x96xf32>
    %cst_190 = arith.constant dense<0.000000e+00> : vector<8x96xf32>
    %593 = tpu.matmul %591, %496, %cst_190 {dimension_numbers = #tpu.dot_dimension_numbers<[1], [0], [0], [1], [0, 0, 1, 1], [], []>} : vector<8x32xf32>, vector<32x96xf32>, vector<8x96xf32> -> vector<8x96xf32>
    %594 = vector.broadcast %500 : vector<1x96xf32> to vector<8x96xf32>
    %595 = arith.addf %593, %594 : vector<8x96xf32>
    %596 = vector.extract_strided_slice %592 {offsets = [0, 0], sizes = [8, 64], strides = [1, 1]} : vector<8x96xf32> to vector<8x64xf32>
    %597 = vector.extract_strided_slice %595 {offsets = [0, 0], sizes = [8, 64], strides = [1, 1]} : vector<8x96xf32> to vector<8x64xf32>
    %598 = arith.addf %596, %597 : vector<8x64xf32>
    %599 = arith.negf %598 : vector<8x64xf32>
    %600 = math.exp %599 : vector<8x64xf32>
    %cst_191 = arith.constant 1.000000e+00 : f32
    %601 = vector.broadcast %cst_191 : f32 to vector<8x64xf32>
    %602 = arith.addf %601, %600 : vector<8x64xf32>
    %603 = arith.divf %601, %602 : vector<8x64xf32>
    %604 = vector.extract_strided_slice %603 {offsets = [0, 0], sizes = [8, 32], strides = [1, 1]} : vector<8x64xf32> to vector<8x32xf32>
    %605 = vector.extract_strided_slice %603 {offsets = [0, 32], sizes = [8, 32], strides = [1, 1]} : vector<8x64xf32> to vector<8x32xf32>
    %606 = vector.extract_strided_slice %592 {offsets = [0, 64], sizes = [8, 32], strides = [1, 1]} : vector<8x96xf32> to vector<8x32xf32>
    %607 = vector.extract_strided_slice %595 {offsets = [0, 64], sizes = [8, 32], strides = [1, 1]} : vector<8x96xf32> to vector<8x32xf32>
    %608 = arith.mulf %604, %607 : vector<8x32xf32>
    %609 = arith.addf %606, %608 : vector<8x32xf32>
    %610 = math.tanh %609 : vector<8x32xf32>
    %611 = arith.subf %591, %610 : vector<8x32xf32>
    %612 = arith.mulf %605, %611 : vector<8x32xf32>
    %613 = arith.addf %610, %612 : vector<8x32xf32>
    %c3_192 = arith.constant 3 : index
    %c0_193 = arith.constant 0 : index
    %c0_194 = arith.constant 0 : index
    %614 = vector.load %arg1[%c3_192, %c0_193, %c0_194] : memref<8x8x32xf32, #tpu.memory_space<vmem>>, vector<1x8x32xf32>
    %615 = vector.shape_cast %614 : vector<1x8x32xf32> to vector<8x32xf32>
    %616 = arith.mulf %615, %613 : vector<8x32xf32>
    %c3_195 = arith.constant 3 : index
    %c0_196 = arith.constant 0 : index
    %c0_197 = arith.constant 0 : index
    %617 = vector.load %arg2[%c3_195, %c0_196, %c0_197] : memref<8x8x32xf32, #tpu.memory_space<vmem>>, vector<1x8x32xf32>
    %618 = vector.shape_cast %617 : vector<1x8x32xf32> to vector<8x32xf32>
    %619 = arith.mulf %618, %591 : vector<8x32xf32>
    %620 = arith.addf %616, %619 : vector<8x32xf32>
    %621 = vector.extract_strided_slice %503 {offsets = [32, 0], sizes = [8, 96], strides = [1, 1]} : vector<64x96xf32> to vector<8x96xf32>
    %cst_198 = arith.constant dense<0.000000e+00> : vector<8x96xf32>
    %622 = tpu.matmul %620, %496, %cst_198 {dimension_numbers = #tpu.dot_dimension_numbers<[1], [0], [0], [1], [0, 0, 1, 1], [], []>} : vector<8x32xf32>, vector<32x96xf32>, vector<8x96xf32> -> vector<8x96xf32>
    %623 = vector.broadcast %500 : vector<1x96xf32> to vector<8x96xf32>
    %624 = arith.addf %622, %623 : vector<8x96xf32>
    %625 = vector.extract_strided_slice %621 {offsets = [0, 0], sizes = [8, 64], strides = [1, 1]} : vector<8x96xf32> to vector<8x64xf32>
    %626 = vector.extract_strided_slice %624 {offsets = [0, 0], sizes = [8, 64], strides = [1, 1]} : vector<8x96xf32> to vector<8x64xf32>
    %627 = arith.addf %625, %626 : vector<8x64xf32>
    %628 = arith.negf %627 : vector<8x64xf32>
    %629 = math.exp %628 : vector<8x64xf32>
    %cst_199 = arith.constant 1.000000e+00 : f32
    %630 = vector.broadcast %cst_199 : f32 to vector<8x64xf32>
    %631 = arith.addf %630, %629 : vector<8x64xf32>
    %632 = arith.divf %630, %631 : vector<8x64xf32>
    %633 = vector.extract_strided_slice %632 {offsets = [0, 0], sizes = [8, 32], strides = [1, 1]} : vector<8x64xf32> to vector<8x32xf32>
    %634 = vector.extract_strided_slice %632 {offsets = [0, 32], sizes = [8, 32], strides = [1, 1]} : vector<8x64xf32> to vector<8x32xf32>
    %635 = vector.extract_strided_slice %621 {offsets = [0, 64], sizes = [8, 32], strides = [1, 1]} : vector<8x96xf32> to vector<8x32xf32>
    %636 = vector.extract_strided_slice %624 {offsets = [0, 64], sizes = [8, 32], strides = [1, 1]} : vector<8x96xf32> to vector<8x32xf32>
    %637 = arith.mulf %633, %636 : vector<8x32xf32>
    %638 = arith.addf %635, %637 : vector<8x32xf32>
    %639 = math.tanh %638 : vector<8x32xf32>
    %640 = arith.subf %620, %639 : vector<8x32xf32>
    %641 = arith.mulf %634, %640 : vector<8x32xf32>
    %642 = arith.addf %639, %641 : vector<8x32xf32>
    %c4_200 = arith.constant 4 : index
    %c0_201 = arith.constant 0 : index
    %c0_202 = arith.constant 0 : index
    %643 = vector.load %arg1[%c4_200, %c0_201, %c0_202] : memref<8x8x32xf32, #tpu.memory_space<vmem>>, vector<1x8x32xf32>
    %644 = vector.shape_cast %643 : vector<1x8x32xf32> to vector<8x32xf32>
    %645 = arith.mulf %644, %642 : vector<8x32xf32>
    %c4_203 = arith.constant 4 : index
    %c0_204 = arith.constant 0 : index
    %c0_205 = arith.constant 0 : index
    %646 = vector.load %arg2[%c4_203, %c0_204, %c0_205] : memref<8x8x32xf32, #tpu.memory_space<vmem>>, vector<1x8x32xf32>
    %647 = vector.shape_cast %646 : vector<1x8x32xf32> to vector<8x32xf32>
    %648 = arith.mulf %647, %620 : vector<8x32xf32>
    %649 = arith.addf %645, %648 : vector<8x32xf32>
    %650 = vector.extract_strided_slice %503 {offsets = [40, 0], sizes = [8, 96], strides = [1, 1]} : vector<64x96xf32> to vector<8x96xf32>
    %cst_206 = arith.constant dense<0.000000e+00> : vector<8x96xf32>
    %651 = tpu.matmul %649, %496, %cst_206 {dimension_numbers = #tpu.dot_dimension_numbers<[1], [0], [0], [1], [0, 0, 1, 1], [], []>} : vector<8x32xf32>, vector<32x96xf32>, vector<8x96xf32> -> vector<8x96xf32>
    %652 = vector.broadcast %500 : vector<1x96xf32> to vector<8x96xf32>
    %653 = arith.addf %651, %652 : vector<8x96xf32>
    %654 = vector.extract_strided_slice %650 {offsets = [0, 0], sizes = [8, 64], strides = [1, 1]} : vector<8x96xf32> to vector<8x64xf32>
    %655 = vector.extract_strided_slice %653 {offsets = [0, 0], sizes = [8, 64], strides = [1, 1]} : vector<8x96xf32> to vector<8x64xf32>
    %656 = arith.addf %654, %655 : vector<8x64xf32>
    %657 = arith.negf %656 : vector<8x64xf32>
    %658 = math.exp %657 : vector<8x64xf32>
    %cst_207 = arith.constant 1.000000e+00 : f32
    %659 = vector.broadcast %cst_207 : f32 to vector<8x64xf32>
    %660 = arith.addf %659, %658 : vector<8x64xf32>
    %661 = arith.divf %659, %660 : vector<8x64xf32>
    %662 = vector.extract_strided_slice %661 {offsets = [0, 0], sizes = [8, 32], strides = [1, 1]} : vector<8x64xf32> to vector<8x32xf32>
    %663 = vector.extract_strided_slice %661 {offsets = [0, 32], sizes = [8, 32], strides = [1, 1]} : vector<8x64xf32> to vector<8x32xf32>
    %664 = vector.extract_strided_slice %650 {offsets = [0, 64], sizes = [8, 32], strides = [1, 1]} : vector<8x96xf32> to vector<8x32xf32>
    %665 = vector.extract_strided_slice %653 {offsets = [0, 64], sizes = [8, 32], strides = [1, 1]} : vector<8x96xf32> to vector<8x32xf32>
    %666 = arith.mulf %662, %665 : vector<8x32xf32>
    %667 = arith.addf %664, %666 : vector<8x32xf32>
    %668 = math.tanh %667 : vector<8x32xf32>
    %669 = arith.subf %649, %668 : vector<8x32xf32>
    %670 = arith.mulf %663, %669 : vector<8x32xf32>
    %671 = arith.addf %668, %670 : vector<8x32xf32>
    %c5_208 = arith.constant 5 : index
    %c0_209 = arith.constant 0 : index
    %c0_210 = arith.constant 0 : index
    %672 = vector.load %arg1[%c5_208, %c0_209, %c0_210] : memref<8x8x32xf32, #tpu.memory_space<vmem>>, vector<1x8x32xf32>
    %673 = vector.shape_cast %672 : vector<1x8x32xf32> to vector<8x32xf32>
    %674 = arith.mulf %673, %671 : vector<8x32xf32>
    %c5_211 = arith.constant 5 : index
    %c0_212 = arith.constant 0 : index
    %c0_213 = arith.constant 0 : index
    %675 = vector.load %arg2[%c5_211, %c0_212, %c0_213] : memref<8x8x32xf32, #tpu.memory_space<vmem>>, vector<1x8x32xf32>
    %676 = vector.shape_cast %675 : vector<1x8x32xf32> to vector<8x32xf32>
    %677 = arith.mulf %676, %649 : vector<8x32xf32>
    %678 = arith.addf %674, %677 : vector<8x32xf32>
    %679 = vector.extract_strided_slice %503 {offsets = [48, 0], sizes = [8, 96], strides = [1, 1]} : vector<64x96xf32> to vector<8x96xf32>
    %cst_214 = arith.constant dense<0.000000e+00> : vector<8x96xf32>
    %680 = tpu.matmul %678, %496, %cst_214 {dimension_numbers = #tpu.dot_dimension_numbers<[1], [0], [0], [1], [0, 0, 1, 1], [], []>} : vector<8x32xf32>, vector<32x96xf32>, vector<8x96xf32> -> vector<8x96xf32>
    %681 = vector.broadcast %500 : vector<1x96xf32> to vector<8x96xf32>
    %682 = arith.addf %680, %681 : vector<8x96xf32>
    %683 = vector.extract_strided_slice %679 {offsets = [0, 0], sizes = [8, 64], strides = [1, 1]} : vector<8x96xf32> to vector<8x64xf32>
    %684 = vector.extract_strided_slice %682 {offsets = [0, 0], sizes = [8, 64], strides = [1, 1]} : vector<8x96xf32> to vector<8x64xf32>
    %685 = arith.addf %683, %684 : vector<8x64xf32>
    %686 = arith.negf %685 : vector<8x64xf32>
    %687 = math.exp %686 : vector<8x64xf32>
    %cst_215 = arith.constant 1.000000e+00 : f32
    %688 = vector.broadcast %cst_215 : f32 to vector<8x64xf32>
    %689 = arith.addf %688, %687 : vector<8x64xf32>
    %690 = arith.divf %688, %689 : vector<8x64xf32>
    %691 = vector.extract_strided_slice %690 {offsets = [0, 0], sizes = [8, 32], strides = [1, 1]} : vector<8x64xf32> to vector<8x32xf32>
    %692 = vector.extract_strided_slice %690 {offsets = [0, 32], sizes = [8, 32], strides = [1, 1]} : vector<8x64xf32> to vector<8x32xf32>
    %693 = vector.extract_strided_slice %679 {offsets = [0, 64], sizes = [8, 32], strides = [1, 1]} : vector<8x96xf32> to vector<8x32xf32>
    %694 = vector.extract_strided_slice %682 {offsets = [0, 64], sizes = [8, 32], strides = [1, 1]} : vector<8x96xf32> to vector<8x32xf32>
    %695 = arith.mulf %691, %694 : vector<8x32xf32>
    %696 = arith.addf %693, %695 : vector<8x32xf32>
    %697 = math.tanh %696 : vector<8x32xf32>
    %698 = arith.subf %678, %697 : vector<8x32xf32>
    %699 = arith.mulf %692, %698 : vector<8x32xf32>
    %700 = arith.addf %697, %699 : vector<8x32xf32>
    %c6_216 = arith.constant 6 : index
    %c0_217 = arith.constant 0 : index
    %c0_218 = arith.constant 0 : index
    %701 = vector.load %arg1[%c6_216, %c0_217, %c0_218] : memref<8x8x32xf32, #tpu.memory_space<vmem>>, vector<1x8x32xf32>
    %702 = vector.shape_cast %701 : vector<1x8x32xf32> to vector<8x32xf32>
    %703 = arith.mulf %702, %700 : vector<8x32xf32>
    %c6_219 = arith.constant 6 : index
    %c0_220 = arith.constant 0 : index
    %c0_221 = arith.constant 0 : index
    %704 = vector.load %arg2[%c6_219, %c0_220, %c0_221] : memref<8x8x32xf32, #tpu.memory_space<vmem>>, vector<1x8x32xf32>
    %705 = vector.shape_cast %704 : vector<1x8x32xf32> to vector<8x32xf32>
    %706 = arith.mulf %705, %678 : vector<8x32xf32>
    %707 = arith.addf %703, %706 : vector<8x32xf32>
    %708 = vector.extract_strided_slice %503 {offsets = [56, 0], sizes = [8, 96], strides = [1, 1]} : vector<64x96xf32> to vector<8x96xf32>
    %cst_222 = arith.constant dense<0.000000e+00> : vector<8x96xf32>
    %709 = tpu.matmul %707, %496, %cst_222 {dimension_numbers = #tpu.dot_dimension_numbers<[1], [0], [0], [1], [0, 0, 1, 1], [], []>} : vector<8x32xf32>, vector<32x96xf32>, vector<8x96xf32> -> vector<8x96xf32>
    %710 = vector.broadcast %500 : vector<1x96xf32> to vector<8x96xf32>
    %711 = arith.addf %709, %710 : vector<8x96xf32>
    %712 = vector.extract_strided_slice %708 {offsets = [0, 0], sizes = [8, 64], strides = [1, 1]} : vector<8x96xf32> to vector<8x64xf32>
    %713 = vector.extract_strided_slice %711 {offsets = [0, 0], sizes = [8, 64], strides = [1, 1]} : vector<8x96xf32> to vector<8x64xf32>
    %714 = arith.addf %712, %713 : vector<8x64xf32>
    %715 = arith.negf %714 : vector<8x64xf32>
    %716 = math.exp %715 : vector<8x64xf32>
    %cst_223 = arith.constant 1.000000e+00 : f32
    %717 = vector.broadcast %cst_223 : f32 to vector<8x64xf32>
    %718 = arith.addf %717, %716 : vector<8x64xf32>
    %719 = arith.divf %717, %718 : vector<8x64xf32>
    %720 = vector.extract_strided_slice %719 {offsets = [0, 0], sizes = [8, 32], strides = [1, 1]} : vector<8x64xf32> to vector<8x32xf32>
    %721 = vector.extract_strided_slice %719 {offsets = [0, 32], sizes = [8, 32], strides = [1, 1]} : vector<8x64xf32> to vector<8x32xf32>
    %722 = vector.extract_strided_slice %708 {offsets = [0, 64], sizes = [8, 32], strides = [1, 1]} : vector<8x96xf32> to vector<8x32xf32>
    %723 = vector.extract_strided_slice %711 {offsets = [0, 64], sizes = [8, 32], strides = [1, 1]} : vector<8x96xf32> to vector<8x32xf32>
    %724 = arith.mulf %720, %723 : vector<8x32xf32>
    %725 = arith.addf %722, %724 : vector<8x32xf32>
    %726 = math.tanh %725 : vector<8x32xf32>
    %727 = arith.subf %707, %726 : vector<8x32xf32>
    %728 = arith.mulf %721, %727 : vector<8x32xf32>
    %729 = arith.addf %726, %728 : vector<8x32xf32>
    %c7_224 = arith.constant 7 : index
    %c0_225 = arith.constant 0 : index
    %c0_226 = arith.constant 0 : index
    %730 = vector.load %arg1[%c7_224, %c0_225, %c0_226] : memref<8x8x32xf32, #tpu.memory_space<vmem>>, vector<1x8x32xf32>
    %731 = vector.shape_cast %730 : vector<1x8x32xf32> to vector<8x32xf32>
    %732 = arith.mulf %731, %729 : vector<8x32xf32>
    %c7_227 = arith.constant 7 : index
    %c0_228 = arith.constant 0 : index
    %c0_229 = arith.constant 0 : index
    %733 = vector.load %arg2[%c7_227, %c0_228, %c0_229] : memref<8x8x32xf32, #tpu.memory_space<vmem>>, vector<1x8x32xf32>
    %734 = vector.shape_cast %733 : vector<1x8x32xf32> to vector<8x32xf32>
    %735 = arith.mulf %734, %707 : vector<8x32xf32>
    %736 = arith.addf %732, %735 : vector<8x32xf32>
    %c0_230 = arith.constant 0 : index
    %c64 = arith.constant 64 : index
    %737 = vector.load %arg8[%c0_230, %c64] : memref<8x128xf32, #tpu.memory_space<vmem>>, vector<8x32xf32>
    tpu.vector_store %arg8[%c0_230, %c64], %736 {strides = array<i32>} : memref<8x128xf32, #tpu.memory_space<vmem>>, vector<8x32xf32>,
    %738 = tpu.concatenate %529, %558, %587, %616, %645, %674, %703, %732 in 0 : vector<8x32xf32>, vector<8x32xf32>, vector<8x32xf32>, vector<8x32xf32>, vector<8x32xf32>, vector<8x32xf32>, vector<8x32xf32>, vector<8x32xf32> -> vector<64x32xf32>
    %c3_231 = arith.constant 3 : index
    %c0_232 = arith.constant 0 : index
    %c0_233 = arith.constant 0 : index
    %739 = vector.load %arg3[%c3_231, %c0_232, %c0_233] : memref<4x32x96xf32, #tpu.memory_space<vmem>>, vector<1x32x96xf32>
    %740 = vector.shape_cast %739 : vector<1x32x96xf32> to vector<32x96xf32>
    %c3_234 = arith.constant 3 : index
    %c0_235 = arith.constant 0 : index
    %c0_236 = arith.constant 0 : index
    %741 = vector.load %arg4[%c3_234, %c0_235, %c0_236] : memref<4x32x96xf32, #tpu.memory_space<vmem>>, vector<1x32x96xf32>
    %742 = vector.shape_cast %741 : vector<1x32x96xf32> to vector<32x96xf32>
    %c3_237 = arith.constant 3 : index
    %c0_238 = arith.constant 0 : index
    %c0_239 = arith.constant 0 : index
    %743 = vector.load %arg5[%c3_237, %c0_238, %c0_239] : memref<4x1x96xf32, #tpu.memory_space<vmem>>, vector<1x1x96xf32>
    %744 = vector.shape_cast %743 : vector<1x1x96xf32> to vector<1x96xf32>
    %c3_240 = arith.constant 3 : index
    %c0_241 = arith.constant 0 : index
    %c0_242 = arith.constant 0 : index
    %745 = vector.load %arg6[%c3_240, %c0_241, %c0_242] : memref<4x1x96xf32, #tpu.memory_space<vmem>>, vector<1x1x96xf32>
    %746 = vector.shape_cast %745 : vector<1x1x96xf32> to vector<1x96xf32>
    %cst_243 = arith.constant dense<0.000000e+00> : vector<64x96xf32>
    %747 = tpu.matmul %738, %740, %cst_243 {dimension_numbers = #tpu.dot_dimension_numbers<[1], [0], [0], [1], [0, 0, 1, 1], [], []>} : vector<64x32xf32>, vector<32x96xf32>, vector<64x96xf32> -> vector<64x96xf32>
    %748 = vector.broadcast %744 : vector<1x96xf32> to vector<64x96xf32>
    %749 = arith.addf %747, %748 : vector<64x96xf32>
    %cst_244 = arith.constant 0.000000e+00 : f32
    %750 = vector.broadcast %cst_244 : f32 to vector<8x32xf32>
    %751 = vector.extract_strided_slice %749 {offsets = [0, 0], sizes = [8, 96], strides = [1, 1]} : vector<64x96xf32> to vector<8x96xf32>
    %cst_245 = arith.constant dense<0.000000e+00> : vector<8x96xf32>
    %752 = tpu.matmul %750, %742, %cst_245 {dimension_numbers = #tpu.dot_dimension_numbers<[1], [0], [0], [1], [0, 0, 1, 1], [], []>} : vector<8x32xf32>, vector<32x96xf32>, vector<8x96xf32> -> vector<8x96xf32>
    %753 = vector.broadcast %746 : vector<1x96xf32> to vector<8x96xf32>
    %754 = arith.addf %752, %753 : vector<8x96xf32>
    %755 = vector.extract_strided_slice %751 {offsets = [0, 0], sizes = [8, 64], strides = [1, 1]} : vector<8x96xf32> to vector<8x64xf32>
    %756 = vector.extract_strided_slice %754 {offsets = [0, 0], sizes = [8, 64], strides = [1, 1]} : vector<8x96xf32> to vector<8x64xf32>
    %757 = arith.addf %755, %756 : vector<8x64xf32>
    %758 = arith.negf %757 : vector<8x64xf32>
    %759 = math.exp %758 : vector<8x64xf32>
    %cst_246 = arith.constant 1.000000e+00 : f32
    %760 = vector.broadcast %cst_246 : f32 to vector<8x64xf32>
    %761 = arith.addf %760, %759 : vector<8x64xf32>
    %762 = arith.divf %760, %761 : vector<8x64xf32>
    %763 = vector.extract_strided_slice %762 {offsets = [0, 0], sizes = [8, 32], strides = [1, 1]} : vector<8x64xf32> to vector<8x32xf32>
    %764 = vector.extract_strided_slice %762 {offsets = [0, 32], sizes = [8, 32], strides = [1, 1]} : vector<8x64xf32> to vector<8x32xf32>
    %765 = vector.extract_strided_slice %751 {offsets = [0, 64], sizes = [8, 32], strides = [1, 1]} : vector<8x96xf32> to vector<8x32xf32>
    %766 = vector.extract_strided_slice %754 {offsets = [0, 64], sizes = [8, 32], strides = [1, 1]} : vector<8x96xf32> to vector<8x32xf32>
    %767 = arith.mulf %763, %766 : vector<8x32xf32>
    %768 = arith.addf %765, %767 : vector<8x32xf32>
    %769 = math.tanh %768 : vector<8x32xf32>
    %770 = arith.subf %750, %769 : vector<8x32xf32>
    %771 = arith.mulf %764, %770 : vector<8x32xf32>
    %772 = arith.addf %769, %771 : vector<8x32xf32>
    %c0_247 = arith.constant 0 : index
    %c0_248 = arith.constant 0 : index
    %c0_249 = arith.constant 0 : index
    %773 = vector.load %arg1[%c0_247, %c0_248, %c0_249] : memref<8x8x32xf32, #tpu.memory_space<vmem>>, vector<1x8x32xf32>
    %774 = vector.shape_cast %773 : vector<1x8x32xf32> to vector<8x32xf32>
    %775 = arith.mulf %774, %772 : vector<8x32xf32>
    %c0_250 = arith.constant 0 : index
    %c0_251 = arith.constant 0 : index
    %c0_252 = arith.constant 0 : index
    %776 = vector.load %arg2[%c0_250, %c0_251, %c0_252] : memref<8x8x32xf32, #tpu.memory_space<vmem>>, vector<1x8x32xf32>
    %777 = vector.shape_cast %776 : vector<1x8x32xf32> to vector<8x32xf32>
    %778 = arith.mulf %777, %750 : vector<8x32xf32>
    %779 = arith.addf %775, %778 : vector<8x32xf32>
    %c0_253 = arith.constant 0 : index
    %c0_254 = arith.constant 0 : index
    %780 = vector.load %arg7[%c0_253, %c0_254] : memref<8x256xf32, #tpu.memory_space<vmem>>, vector<8x32xf32>
    tpu.vector_store %arg7[%c0_253, %c0_254], %775 {strides = array<i32>} : memref<8x256xf32, #tpu.memory_space<vmem>>, vector<8x32xf32>,
    %781 = vector.extract_strided_slice %749 {offsets = [8, 0], sizes = [8, 96], strides = [1, 1]} : vector<64x96xf32> to vector<8x96xf32>
    %cst_255 = arith.constant dense<0.000000e+00> : vector<8x96xf32>
    %782 = tpu.matmul %779, %742, %cst_255 {dimension_numbers = #tpu.dot_dimension_numbers<[1], [0], [0], [1], [0, 0, 1, 1], [], []>} : vector<8x32xf32>, vector<32x96xf32>, vector<8x96xf32> -> vector<8x96xf32>
    %783 = vector.broadcast %746 : vector<1x96xf32> to vector<8x96xf32>
    %784 = arith.addf %782, %783 : vector<8x96xf32>
    %785 = vector.extract_strided_slice %781 {offsets = [0, 0], sizes = [8, 64], strides = [1, 1]} : vector<8x96xf32> to vector<8x64xf32>
    %786 = vector.extract_strided_slice %784 {offsets = [0, 0], sizes = [8, 64], strides = [1, 1]} : vector<8x96xf32> to vector<8x64xf32>
    %787 = arith.addf %785, %786 : vector<8x64xf32>
    %788 = arith.negf %787 : vector<8x64xf32>
    %789 = math.exp %788 : vector<8x64xf32>
    %cst_256 = arith.constant 1.000000e+00 : f32
    %790 = vector.broadcast %cst_256 : f32 to vector<8x64xf32>
    %791 = arith.addf %790, %789 : vector<8x64xf32>
    %792 = arith.divf %790, %791 : vector<8x64xf32>
    %793 = vector.extract_strided_slice %792 {offsets = [0, 0], sizes = [8, 32], strides = [1, 1]} : vector<8x64xf32> to vector<8x32xf32>
    %794 = vector.extract_strided_slice %792 {offsets = [0, 32], sizes = [8, 32], strides = [1, 1]} : vector<8x64xf32> to vector<8x32xf32>
    %795 = vector.extract_strided_slice %781 {offsets = [0, 64], sizes = [8, 32], strides = [1, 1]} : vector<8x96xf32> to vector<8x32xf32>
    %796 = vector.extract_strided_slice %784 {offsets = [0, 64], sizes = [8, 32], strides = [1, 1]} : vector<8x96xf32> to vector<8x32xf32>
    %797 = arith.mulf %793, %796 : vector<8x32xf32>
    %798 = arith.addf %795, %797 : vector<8x32xf32>
    %799 = math.tanh %798 : vector<8x32xf32>
    %800 = arith.subf %779, %799 : vector<8x32xf32>
    %801 = arith.mulf %794, %800 : vector<8x32xf32>
    %802 = arith.addf %799, %801 : vector<8x32xf32>
    %c1_257 = arith.constant 1 : index
    %c0_258 = arith.constant 0 : index
    %c0_259 = arith.constant 0 : index
    %803 = vector.load %arg1[%c1_257, %c0_258, %c0_259] : memref<8x8x32xf32, #tpu.memory_space<vmem>>, vector<1x8x32xf32>
    %804 = vector.shape_cast %803 : vector<1x8x32xf32> to vector<8x32xf32>
    %805 = arith.mulf %804, %802 : vector<8x32xf32>
    %c1_260 = arith.constant 1 : index
    %c0_261 = arith.constant 0 : index
    %c0_262 = arith.constant 0 : index
    %806 = vector.load %arg2[%c1_260, %c0_261, %c0_262] : memref<8x8x32xf32, #tpu.memory_space<vmem>>, vector<1x8x32xf32>
    %807 = vector.shape_cast %806 : vector<1x8x32xf32> to vector<8x32xf32>
    %808 = arith.mulf %807, %779 : vector<8x32xf32>
    %809 = arith.addf %805, %808 : vector<8x32xf32>
    %c0_263 = arith.constant 0 : index
    %c32_264 = arith.constant 32 : index
    %810 = vector.load %arg7[%c0_263, %c32_264] : memref<8x256xf32, #tpu.memory_space<vmem>>, vector<8x32xf32>
    tpu.vector_store %arg7[%c0_263, %c32_264], %805 {strides = array<i32>} : memref<8x256xf32, #tpu.memory_space<vmem>>, vector<8x32xf32>,
    %811 = vector.extract_strided_slice %749 {offsets = [16, 0], sizes = [8, 96], strides = [1, 1]} : vector<64x96xf32> to vector<8x96xf32>
    %cst_265 = arith.constant dense<0.000000e+00> : vector<8x96xf32>
    %812 = tpu.matmul %809, %742, %cst_265 {dimension_numbers = #tpu.dot_dimension_numbers<[1], [0], [0], [1], [0, 0, 1, 1], [], []>} : vector<8x32xf32>, vector<32x96xf32>, vector<8x96xf32> -> vector<8x96xf32>
    %813 = vector.broadcast %746 : vector<1x96xf32> to vector<8x96xf32>
    %814 = arith.addf %812, %813 : vector<8x96xf32>
    %815 = vector.extract_strided_slice %811 {offsets = [0, 0], sizes = [8, 64], strides = [1, 1]} : vector<8x96xf32> to vector<8x64xf32>
    %816 = vector.extract_strided_slice %814 {offsets = [0, 0], sizes = [8, 64], strides = [1, 1]} : vector<8x96xf32> to vector<8x64xf32>
    %817 = arith.addf %815, %816 : vector<8x64xf32>
    %818 = arith.negf %817 : vector<8x64xf32>
    %819 = math.exp %818 : vector<8x64xf32>
    %cst_266 = arith.constant 1.000000e+00 : f32
    %820 = vector.broadcast %cst_266 : f32 to vector<8x64xf32>
    %821 = arith.addf %820, %819 : vector<8x64xf32>
    %822 = arith.divf %820, %821 : vector<8x64xf32>
    %823 = vector.extract_strided_slice %822 {offsets = [0, 0], sizes = [8, 32], strides = [1, 1]} : vector<8x64xf32> to vector<8x32xf32>
    %824 = vector.extract_strided_slice %822 {offsets = [0, 32], sizes = [8, 32], strides = [1, 1]} : vector<8x64xf32> to vector<8x32xf32>
    %825 = vector.extract_strided_slice %811 {offsets = [0, 64], sizes = [8, 32], strides = [1, 1]} : vector<8x96xf32> to vector<8x32xf32>
    %826 = vector.extract_strided_slice %814 {offsets = [0, 64], sizes = [8, 32], strides = [1, 1]} : vector<8x96xf32> to vector<8x32xf32>
    %827 = arith.mulf %823, %826 : vector<8x32xf32>
    %828 = arith.addf %825, %827 : vector<8x32xf32>
    %829 = math.tanh %828 : vector<8x32xf32>
    %830 = arith.subf %809, %829 : vector<8x32xf32>
    %831 = arith.mulf %824, %830 : vector<8x32xf32>
    %832 = arith.addf %829, %831 : vector<8x32xf32>
    %c2_267 = arith.constant 2 : index
    %c0_268 = arith.constant 0 : index
    %c0_269 = arith.constant 0 : index
    %833 = vector.load %arg1[%c2_267, %c0_268, %c0_269] : memref<8x8x32xf32, #tpu.memory_space<vmem>>, vector<1x8x32xf32>
    %834 = vector.shape_cast %833 : vector<1x8x32xf32> to vector<8x32xf32>
    %835 = arith.mulf %834, %832 : vector<8x32xf32>
    %c2_270 = arith.constant 2 : index
    %c0_271 = arith.constant 0 : index
    %c0_272 = arith.constant 0 : index
    %836 = vector.load %arg2[%c2_270, %c0_271, %c0_272] : memref<8x8x32xf32, #tpu.memory_space<vmem>>, vector<1x8x32xf32>
    %837 = vector.shape_cast %836 : vector<1x8x32xf32> to vector<8x32xf32>
    %838 = arith.mulf %837, %809 : vector<8x32xf32>
    %839 = arith.addf %835, %838 : vector<8x32xf32>
    %c0_273 = arith.constant 0 : index
    %c64_274 = arith.constant 64 : index
    %840 = vector.load %arg7[%c0_273, %c64_274] : memref<8x256xf32, #tpu.memory_space<vmem>>, vector<8x32xf32>
    tpu.vector_store %arg7[%c0_273, %c64_274], %835 {strides = array<i32>} : memref<8x256xf32, #tpu.memory_space<vmem>>, vector<8x32xf32>,
    %841 = vector.extract_strided_slice %749 {offsets = [24, 0], sizes = [8, 96], strides = [1, 1]} : vector<64x96xf32> to vector<8x96xf32>
    %cst_275 = arith.constant dense<0.000000e+00> : vector<8x96xf32>
    %842 = tpu.matmul %839, %742, %cst_275 {dimension_numbers = #tpu.dot_dimension_numbers<[1], [0], [0], [1], [0, 0, 1, 1], [], []>} : vector<8x32xf32>, vector<32x96xf32>, vector<8x96xf32> -> vector<8x96xf32>
    %843 = vector.broadcast %746 : vector<1x96xf32> to vector<8x96xf32>
    %844 = arith.addf %842, %843 : vector<8x96xf32>
    %845 = vector.extract_strided_slice %841 {offsets = [0, 0], sizes = [8, 64], strides = [1, 1]} : vector<8x96xf32> to vector<8x64xf32>
    %846 = vector.extract_strided_slice %844 {offsets = [0, 0], sizes = [8, 64], strides = [1, 1]} : vector<8x96xf32> to vector<8x64xf32>
    %847 = arith.addf %845, %846 : vector<8x64xf32>
    %848 = arith.negf %847 : vector<8x64xf32>
    %849 = math.exp %848 : vector<8x64xf32>
    %cst_276 = arith.constant 1.000000e+00 : f32
    %850 = vector.broadcast %cst_276 : f32 to vector<8x64xf32>
    %851 = arith.addf %850, %849 : vector<8x64xf32>
    %852 = arith.divf %850, %851 : vector<8x64xf32>
    %853 = vector.extract_strided_slice %852 {offsets = [0, 0], sizes = [8, 32], strides = [1, 1]} : vector<8x64xf32> to vector<8x32xf32>
    %854 = vector.extract_strided_slice %852 {offsets = [0, 32], sizes = [8, 32], strides = [1, 1]} : vector<8x64xf32> to vector<8x32xf32>
    %855 = vector.extract_strided_slice %841 {offsets = [0, 64], sizes = [8, 32], strides = [1, 1]} : vector<8x96xf32> to vector<8x32xf32>
    %856 = vector.extract_strided_slice %844 {offsets = [0, 64], sizes = [8, 32], strides = [1, 1]} : vector<8x96xf32> to vector<8x32xf32>
    %857 = arith.mulf %853, %856 : vector<8x32xf32>
    %858 = arith.addf %855, %857 : vector<8x32xf32>
    %859 = math.tanh %858 : vector<8x32xf32>
    %860 = arith.subf %839, %859 : vector<8x32xf32>
    %861 = arith.mulf %854, %860 : vector<8x32xf32>
    %862 = arith.addf %859, %861 : vector<8x32xf32>
    %c3_277 = arith.constant 3 : index
    %c0_278 = arith.constant 0 : index
    %c0_279 = arith.constant 0 : index
    %863 = vector.load %arg1[%c3_277, %c0_278, %c0_279] : memref<8x8x32xf32, #tpu.memory_space<vmem>>, vector<1x8x32xf32>
    %864 = vector.shape_cast %863 : vector<1x8x32xf32> to vector<8x32xf32>
    %865 = arith.mulf %864, %862 : vector<8x32xf32>
    %c3_280 = arith.constant 3 : index
    %c0_281 = arith.constant 0 : index
    %c0_282 = arith.constant 0 : index
    %866 = vector.load %arg2[%c3_280, %c0_281, %c0_282] : memref<8x8x32xf32, #tpu.memory_space<vmem>>, vector<1x8x32xf32>
    %867 = vector.shape_cast %866 : vector<1x8x32xf32> to vector<8x32xf32>
    %868 = arith.mulf %867, %839 : vector<8x32xf32>
    %869 = arith.addf %865, %868 : vector<8x32xf32>
    %c0_283 = arith.constant 0 : index
    %c96 = arith.constant 96 : index
    %870 = vector.load %arg7[%c0_283, %c96] : memref<8x256xf32, #tpu.memory_space<vmem>>, vector<8x32xf32>
    tpu.vector_store %arg7[%c0_283, %c96], %865 {strides = array<i32>} : memref<8x256xf32, #tpu.memory_space<vmem>>, vector<8x32xf32>,
    %871 = vector.extract_strided_slice %749 {offsets = [32, 0], sizes = [8, 96], strides = [1, 1]} : vector<64x96xf32> to vector<8x96xf32>
    %cst_284 = arith.constant dense<0.000000e+00> : vector<8x96xf32>
    %872 = tpu.matmul %869, %742, %cst_284 {dimension_numbers = #tpu.dot_dimension_numbers<[1], [0], [0], [1], [0, 0, 1, 1], [], []>} : vector<8x32xf32>, vector<32x96xf32>, vector<8x96xf32> -> vector<8x96xf32>
    %873 = vector.broadcast %746 : vector<1x96xf32> to vector<8x96xf32>
    %874 = arith.addf %872, %873 : vector<8x96xf32>
    %875 = vector.extract_strided_slice %871 {offsets = [0, 0], sizes = [8, 64], strides = [1, 1]} : vector<8x96xf32> to vector<8x64xf32>
    %876 = vector.extract_strided_slice %874 {offsets = [0, 0], sizes = [8, 64], strides = [1, 1]} : vector<8x96xf32> to vector<8x64xf32>
    %877 = arith.addf %875, %876 : vector<8x64xf32>
    %878 = arith.negf %877 : vector<8x64xf32>
    %879 = math.exp %878 : vector<8x64xf32>
    %cst_285 = arith.constant 1.000000e+00 : f32
    %880 = vector.broadcast %cst_285 : f32 to vector<8x64xf32>
    %881 = arith.addf %880, %879 : vector<8x64xf32>
    %882 = arith.divf %880, %881 : vector<8x64xf32>
    %883 = vector.extract_strided_slice %882 {offsets = [0, 0], sizes = [8, 32], strides = [1, 1]} : vector<8x64xf32> to vector<8x32xf32>
    %884 = vector.extract_strided_slice %882 {offsets = [0, 32], sizes = [8, 32], strides = [1, 1]} : vector<8x64xf32> to vector<8x32xf32>
    %885 = vector.extract_strided_slice %871 {offsets = [0, 64], sizes = [8, 32], strides = [1, 1]} : vector<8x96xf32> to vector<8x32xf32>
    %886 = vector.extract_strided_slice %874 {offsets = [0, 64], sizes = [8, 32], strides = [1, 1]} : vector<8x96xf32> to vector<8x32xf32>
    %887 = arith.mulf %883, %886 : vector<8x32xf32>
    %888 = arith.addf %885, %887 : vector<8x32xf32>
    %889 = math.tanh %888 : vector<8x32xf32>
    %890 = arith.subf %869, %889 : vector<8x32xf32>
    %891 = arith.mulf %884, %890 : vector<8x32xf32>
    %892 = arith.addf %889, %891 : vector<8x32xf32>
    %c4_286 = arith.constant 4 : index
    %c0_287 = arith.constant 0 : index
    %c0_288 = arith.constant 0 : index
    %893 = vector.load %arg1[%c4_286, %c0_287, %c0_288] : memref<8x8x32xf32, #tpu.memory_space<vmem>>, vector<1x8x32xf32>
    %894 = vector.shape_cast %893 : vector<1x8x32xf32> to vector<8x32xf32>
    %895 = arith.mulf %894, %892 : vector<8x32xf32>
    %c4_289 = arith.constant 4 : index
    %c0_290 = arith.constant 0 : index
    %c0_291 = arith.constant 0 : index
    %896 = vector.load %arg2[%c4_289, %c0_290, %c0_291] : memref<8x8x32xf32, #tpu.memory_space<vmem>>, vector<1x8x32xf32>
    %897 = vector.shape_cast %896 : vector<1x8x32xf32> to vector<8x32xf32>
    %898 = arith.mulf %897, %869 : vector<8x32xf32>
    %899 = arith.addf %895, %898 : vector<8x32xf32>
    %c0_292 = arith.constant 0 : index
    %c128 = arith.constant 128 : index
    %900 = vector.load %arg7[%c0_292, %c128] : memref<8x256xf32, #tpu.memory_space<vmem>>, vector<8x32xf32>
    tpu.vector_store %arg7[%c0_292, %c128], %895 {strides = array<i32>} : memref<8x256xf32, #tpu.memory_space<vmem>>, vector<8x32xf32>,
    %901 = vector.extract_strided_slice %749 {offsets = [40, 0], sizes = [8, 96], strides = [1, 1]} : vector<64x96xf32> to vector<8x96xf32>
    %cst_293 = arith.constant dense<0.000000e+00> : vector<8x96xf32>
    %902 = tpu.matmul %899, %742, %cst_293 {dimension_numbers = #tpu.dot_dimension_numbers<[1], [0], [0], [1], [0, 0, 1, 1], [], []>} : vector<8x32xf32>, vector<32x96xf32>, vector<8x96xf32> -> vector<8x96xf32>
    %903 = vector.broadcast %746 : vector<1x96xf32> to vector<8x96xf32>
    %904 = arith.addf %902, %903 : vector<8x96xf32>
    %905 = vector.extract_strided_slice %901 {offsets = [0, 0], sizes = [8, 64], strides = [1, 1]} : vector<8x96xf32> to vector<8x64xf32>
    %906 = vector.extract_strided_slice %904 {offsets = [0, 0], sizes = [8, 64], strides = [1, 1]} : vector<8x96xf32> to vector<8x64xf32>
    %907 = arith.addf %905, %906 : vector<8x64xf32>
    %908 = arith.negf %907 : vector<8x64xf32>
    %909 = math.exp %908 : vector<8x64xf32>
    %cst_294 = arith.constant 1.000000e+00 : f32
    %910 = vector.broadcast %cst_294 : f32 to vector<8x64xf32>
    %911 = arith.addf %910, %909 : vector<8x64xf32>
    %912 = arith.divf %910, %911 : vector<8x64xf32>
    %913 = vector.extract_strided_slice %912 {offsets = [0, 0], sizes = [8, 32], strides = [1, 1]} : vector<8x64xf32> to vector<8x32xf32>
    %914 = vector.extract_strided_slice %912 {offsets = [0, 32], sizes = [8, 32], strides = [1, 1]} : vector<8x64xf32> to vector<8x32xf32>
    %915 = vector.extract_strided_slice %901 {offsets = [0, 64], sizes = [8, 32], strides = [1, 1]} : vector<8x96xf32> to vector<8x32xf32>
    %916 = vector.extract_strided_slice %904 {offsets = [0, 64], sizes = [8, 32], strides = [1, 1]} : vector<8x96xf32> to vector<8x32xf32>
    %917 = arith.mulf %913, %916 : vector<8x32xf32>
    %918 = arith.addf %915, %917 : vector<8x32xf32>
    %919 = math.tanh %918 : vector<8x32xf32>
    %920 = arith.subf %899, %919 : vector<8x32xf32>
    %921 = arith.mulf %914, %920 : vector<8x32xf32>
    %922 = arith.addf %919, %921 : vector<8x32xf32>
    %c5_295 = arith.constant 5 : index
    %c0_296 = arith.constant 0 : index
    %c0_297 = arith.constant 0 : index
    %923 = vector.load %arg1[%c5_295, %c0_296, %c0_297] : memref<8x8x32xf32, #tpu.memory_space<vmem>>, vector<1x8x32xf32>
    %924 = vector.shape_cast %923 : vector<1x8x32xf32> to vector<8x32xf32>
    %925 = arith.mulf %924, %922 : vector<8x32xf32>
    %c5_298 = arith.constant 5 : index
    %c0_299 = arith.constant 0 : index
    %c0_300 = arith.constant 0 : index
    %926 = vector.load %arg2[%c5_298, %c0_299, %c0_300] : memref<8x8x32xf32, #tpu.memory_space<vmem>>, vector<1x8x32xf32>
    %927 = vector.shape_cast %926 : vector<1x8x32xf32> to vector<8x32xf32>
    %928 = arith.mulf %927, %899 : vector<8x32xf32>
    %929 = arith.addf %925, %928 : vector<8x32xf32>
    %c0_301 = arith.constant 0 : index
    %c160 = arith.constant 160 : index
    %930 = vector.load %arg7[%c0_301, %c160] : memref<8x256xf32, #tpu.memory_space<vmem>>, vector<8x32xf32>
    tpu.vector_store %arg7[%c0_301, %c160], %925 {strides = array<i32>} : memref<8x256xf32, #tpu.memory_space<vmem>>, vector<8x32xf32>,
    %931 = vector.extract_strided_slice %749 {offsets = [48, 0], sizes = [8, 96], strides = [1, 1]} : vector<64x96xf32> to vector<8x96xf32>
    %cst_302 = arith.constant dense<0.000000e+00> : vector<8x96xf32>
    %932 = tpu.matmul %929, %742, %cst_302 {dimension_numbers = #tpu.dot_dimension_numbers<[1], [0], [0], [1], [0, 0, 1, 1], [], []>} : vector<8x32xf32>, vector<32x96xf32>, vector<8x96xf32> -> vector<8x96xf32>
    %933 = vector.broadcast %746 : vector<1x96xf32> to vector<8x96xf32>
    %934 = arith.addf %932, %933 : vector<8x96xf32>
    %935 = vector.extract_strided_slice %931 {offsets = [0, 0], sizes = [8, 64], strides = [1, 1]} : vector<8x96xf32> to vector<8x64xf32>
    %936 = vector.extract_strided_slice %934 {offsets = [0, 0], sizes = [8, 64], strides = [1, 1]} : vector<8x96xf32> to vector<8x64xf32>
    %937 = arith.addf %935, %936 : vector<8x64xf32>
    %938 = arith.negf %937 : vector<8x64xf32>
    %939 = math.exp %938 : vector<8x64xf32>
    %cst_303 = arith.constant 1.000000e+00 : f32
    %940 = vector.broadcast %cst_303 : f32 to vector<8x64xf32>
    %941 = arith.addf %940, %939 : vector<8x64xf32>
    %942 = arith.divf %940, %941 : vector<8x64xf32>
    %943 = vector.extract_strided_slice %942 {offsets = [0, 0], sizes = [8, 32], strides = [1, 1]} : vector<8x64xf32> to vector<8x32xf32>
    %944 = vector.extract_strided_slice %942 {offsets = [0, 32], sizes = [8, 32], strides = [1, 1]} : vector<8x64xf32> to vector<8x32xf32>
    %945 = vector.extract_strided_slice %931 {offsets = [0, 64], sizes = [8, 32], strides = [1, 1]} : vector<8x96xf32> to vector<8x32xf32>
    %946 = vector.extract_strided_slice %934 {offsets = [0, 64], sizes = [8, 32], strides = [1, 1]} : vector<8x96xf32> to vector<8x32xf32>
    %947 = arith.mulf %943, %946 : vector<8x32xf32>
    %948 = arith.addf %945, %947 : vector<8x32xf32>
    %949 = math.tanh %948 : vector<8x32xf32>
    %950 = arith.subf %929, %949 : vector<8x32xf32>
    %951 = arith.mulf %944, %950 : vector<8x32xf32>
    %952 = arith.addf %949, %951 : vector<8x32xf32>
    %c6_304 = arith.constant 6 : index
    %c0_305 = arith.constant 0 : index
    %c0_306 = arith.constant 0 : index
    %953 = vector.load %arg1[%c6_304, %c0_305, %c0_306] : memref<8x8x32xf32, #tpu.memory_space<vmem>>, vector<1x8x32xf32>
    %954 = vector.shape_cast %953 : vector<1x8x32xf32> to vector<8x32xf32>
    %955 = arith.mulf %954, %952 : vector<8x32xf32>
    %c6_307 = arith.constant 6 : index
    %c0_308 = arith.constant 0 : index
    %c0_309 = arith.constant 0 : index
    %956 = vector.load %arg2[%c6_307, %c0_308, %c0_309] : memref<8x8x32xf32, #tpu.memory_space<vmem>>, vector<1x8x32xf32>
    %957 = vector.shape_cast %956 : vector<1x8x32xf32> to vector<8x32xf32>
    %958 = arith.mulf %957, %929 : vector<8x32xf32>
    %959 = arith.addf %955, %958 : vector<8x32xf32>
    %c0_310 = arith.constant 0 : index
    %c192 = arith.constant 192 : index
    %960 = vector.load %arg7[%c0_310, %c192] : memref<8x256xf32, #tpu.memory_space<vmem>>, vector<8x32xf32>
    tpu.vector_store %arg7[%c0_310, %c192], %955 {strides = array<i32>} : memref<8x256xf32, #tpu.memory_space<vmem>>, vector<8x32xf32>,
    %961 = vector.extract_strided_slice %749 {offsets = [56, 0], sizes = [8, 96], strides = [1, 1]} : vector<64x96xf32> to vector<8x96xf32>
    %cst_311 = arith.constant dense<0.000000e+00> : vector<8x96xf32>
    %962 = tpu.matmul %959, %742, %cst_311 {dimension_numbers = #tpu.dot_dimension_numbers<[1], [0], [0], [1], [0, 0, 1, 1], [], []>} : vector<8x32xf32>, vector<32x96xf32>, vector<8x96xf32> -> vector<8x96xf32>
    %963 = vector.broadcast %746 : vector<1x96xf32> to vector<8x96xf32>
    %964 = arith.addf %962, %963 : vector<8x96xf32>
    %965 = vector.extract_strided_slice %961 {offsets = [0, 0], sizes = [8, 64], strides = [1, 1]} : vector<8x96xf32> to vector<8x64xf32>
    %966 = vector.extract_strided_slice %964 {offsets = [0, 0], sizes = [8, 64], strides = [1, 1]} : vector<8x96xf32> to vector<8x64xf32>
    %967 = arith.addf %965, %966 : vector<8x64xf32>
    %968 = arith.negf %967 : vector<8x64xf32>
    %969 = math.exp %968 : vector<8x64xf32>
    %cst_312 = arith.constant 1.000000e+00 : f32
    %970 = vector.broadcast %cst_312 : f32 to vector<8x64xf32>
    %971 = arith.addf %970, %969 : vector<8x64xf32>
    %972 = arith.divf %970, %971 : vector<8x64xf32>
    %973 = vector.extract_strided_slice %972 {offsets = [0, 0], sizes = [8, 32], strides = [1, 1]} : vector<8x64xf32> to vector<8x32xf32>
    %974 = vector.extract_strided_slice %972 {offsets = [0, 32], sizes = [8, 32], strides = [1, 1]} : vector<8x64xf32> to vector<8x32xf32>
    %975 = vector.extract_strided_slice %961 {offsets = [0, 64], sizes = [8, 32], strides = [1, 1]} : vector<8x96xf32> to vector<8x32xf32>
    %976 = vector.extract_strided_slice %964 {offsets = [0, 64], sizes = [8, 32], strides = [1, 1]} : vector<8x96xf32> to vector<8x32xf32>
    %977 = arith.mulf %973, %976 : vector<8x32xf32>
    %978 = arith.addf %975, %977 : vector<8x32xf32>
    %979 = math.tanh %978 : vector<8x32xf32>
    %980 = arith.subf %959, %979 : vector<8x32xf32>
    %981 = arith.mulf %974, %980 : vector<8x32xf32>
    %982 = arith.addf %979, %981 : vector<8x32xf32>
    %c7_313 = arith.constant 7 : index
    %c0_314 = arith.constant 0 : index
    %c0_315 = arith.constant 0 : index
    %983 = vector.load %arg1[%c7_313, %c0_314, %c0_315] : memref<8x8x32xf32, #tpu.memory_space<vmem>>, vector<1x8x32xf32>
    %984 = vector.shape_cast %983 : vector<1x8x32xf32> to vector<8x32xf32>
    %985 = arith.mulf %984, %982 : vector<8x32xf32>
    %c7_316 = arith.constant 7 : index
    %c0_317 = arith.constant 0 : index
    %c0_318 = arith.constant 0 : index
    %986 = vector.load %arg2[%c7_316, %c0_317, %c0_318] : memref<8x8x32xf32, #tpu.memory_space<vmem>>, vector<1x8x32xf32>
    %987 = vector.shape_cast %986 : vector<1x8x32xf32> to vector<8x32xf32>
    %988 = arith.mulf %987, %959 : vector<8x32xf32>
    %989 = arith.addf %985, %988 : vector<8x32xf32>
    %c0_319 = arith.constant 0 : index
    %c224 = arith.constant 224 : index
    %990 = vector.load %arg7[%c0_319, %c224] : memref<8x256xf32, #tpu.memory_space<vmem>>, vector<8x32xf32>
    tpu.vector_store %arg7[%c0_319, %c224], %985 {strides = array<i32>} : memref<8x256xf32, #tpu.memory_space<vmem>>, vector<8x32xf32>,
    %c0_320 = arith.constant 0 : index
    %c96_321 = arith.constant 96 : index
    %991 = vector.load %arg8[%c0_320, %c96_321] : memref<8x128xf32, #tpu.memory_space<vmem>>, vector<8x32xf32>
    tpu.vector_store %arg8[%c0_320, %c96_321], %989 {strides = array<i32>} : memref<8x128xf32, #tpu.memory_space<vmem>>, vector<8x32xf32>,
    return
  }
}

</mosaic_0001>

<llo_original>
// kernel: tpu_custom_call.1
$region0: #{tpu_custom_call.1}
  #allocation0 [shape = 'u32[]', space=smem, size = 0x4, offset = 0x4, fixed_abs, tag = 'smem constant byte address 0x4 - core index']
  #allocation1 [shape = 'u32[144,128]{1,0:T(1,128)}', space=vmem, size = 0x12000, scoped, tag = 'internal scratch']
  %s0 = inlined_call_operand.vmem [shape: f32[64,32], index: 0, kind: input, shape index: {}]
  %s1 = inlined_call_operand.vmem [shape: f32[8,8,32], index: 1, kind: input, shape index: {}]
  %s2 = inlined_call_operand.hbm [shape: f32[8,8,32], index: 2, kind: input, shape index: {}]
  %s3 = inlined_call_operand.hbm [shape: f32[4,32,96], index: 3, kind: input, shape index: {}]
  %s4 = inlined_call_operand.hbm [shape: f32[4,32,96], index: 4, kind: input, shape index: {}]
  %s5 = inlined_call_operand.vmem [shape: f32[4,1,96], index: 5, kind: input, shape index: {}]
  %s6 = inlined_call_operand.vmem [shape: f32[4,1,96], index: 6, kind: input, shape index: {}]
  %s7 = inlined_call_operand.hbm [shape: f32[8,256], index: 7, kind: output, shape index: {0}]
  %s8 = inlined_call_operand.hbm [shape: f32[8,128], index: 8, kind: output, shape index: {1}]
  %9 = xla_tuple %s7, %s8
  %s10 = sld [smem:[#allocation0]]
  $region58: #{tpu_custom_call.1} parent=0
    _
  %s12 = ssub.s32 1, %s10
  %s13 = scalar_select 0, %s12, %s10
  $region1: #{tpu_custom_call.1} parent=0
    #allocation2 [shape = 'u8[32768]{0}', space=vmem, size = 0x8000, scoped, tag = 'input window, operand 2, single buffered']
    #allocation3 [shape = 's32[1]{0}', space=sflag, size = 0x4, scoped, tag = 'scoped memory for tpu_custom_call.1']
    #allocation4 [shape = 's32[1]{0}', space=sflag, size = 0x4, scoped, tag = 'scoped memory for tpu_custom_call.1']
    #allocation5 [shape = 'u8[65536]{0}', space=vmem, size = 0x10000, scoped, tag = 'input window, operand 3, single buffered']
    #allocation6 [shape = 's32[1]{0}', space=sflag, size = 0x4, scoped, tag = 'scoped memory for tpu_custom_call.1']
    #allocation7 [shape = 'u8[65536]{0}', space=vmem, size = 0x10000, scoped, tag = 'input window, operand 4, single buffered']
    #allocation8 [shape = 'u8[8192]{0}', space=vmem, size = 0x2000, scoped, tag = 'output window, operand 0, single buffered']
    #allocation9 [shape = 'u8[4096]{0}', space=vmem, size = 0x1000, scoped, tag = 'output window, operand 1, single buffered']
    #allocation10 [shape = 's32[1]{0}', space=sflag, size = 0x4, scoped, tag = 'scoped memory for tpu_custom_call.1']
    %14 = vsyncpa [#allocation3], 0
    %15 = vsyncpa [#allocation6], 0
    %16 = vsyncpa [#allocation4], 0
    %17 = vsyncpa [#allocation10], 0
    // Predicated region
    $region2: #{tpu_custom_call.1} parent=1 // pred_check
      _
    $region3: #{tpu_custom_call.1} parent=1 // pred_check_branch
      %19 = sbr.rel (0) target = $region5
    $region4: #{tpu_custom_call.1} parent=1 // pred_region
      _
    $region5: #{tpu_custom_call.1} parent=1 // pred_fallthru
      _
    // Predicated region
    $region6: #{tpu_custom_call.1} parent=1 // pred_check
      _
    $region7: #{tpu_custom_call.1} parent=1 // pred_check_branch
      %21 = sbr.rel (0) target = $region9
    $region8: #{tpu_custom_call.1} parent=1 // pred_region
      _
    $region9: #{tpu_custom_call.1} parent=1 // pred_fallthru
      _
    // Predicated region
    $region10: #{tpu_custom_call.1} parent=1 // pred_check
      _
    $region11: #{tpu_custom_call.1} parent=1 // pred_check_branch
      %23 = sbr.rel (0) target = $region13
    $region12: #{tpu_custom_call.1} parent=1 // pred_region
      %s25 = ssub.s32 1024, 1024
      %26 = vsyncadd [#allocation3], %s25
      %s27 = sshll.u32 [#allocation2], 4
      %s28 = int_to_ptr.vmem [resolvable:$true] %s27
      %33 = dma.hbm_to_vmem [thread:$0]  %s2, 1024, %s28, [#allocation3], 128, 128, 8
    $region13: #{tpu_custom_call.1} parent=1 // pred_fallthru
      _
    // Predicated region
    $region14: #{tpu_custom_call.1} parent=1 // pred_check
      _
    $region15: #{tpu_custom_call.1} parent=1 // pred_check_branch
      %35 = sbr.rel (0) target = $region17
    $region16: #{tpu_custom_call.1} parent=1 // pred_region
      %s37 = ssub.s32 2048, 2048
      %38 = vsyncadd [#allocation6], %s37
      %s39 = sshll.u32 [#allocation5], 4
      %s40 = int_to_ptr.vmem [resolvable:$true] %s39
      %45 = dma.hbm_to_vmem [thread:$0]  %s3, 2048, %s40, [#allocation6], 128, 128, 8
    $region17: #{tpu_custom_call.1} parent=1 // pred_fallthru
      _
    // Predicated region
    $region18: #{tpu_custom_call.1} parent=1 // pred_check
      _
    $region19: #{tpu_custom_call.1} parent=1 // pred_check_branch
      %47 = sbr.rel (0) target = $region21
    $region20: #{tpu_custom_call.1} parent=1 // pred_region
      %s49 = ssub.s32 2048, 2048
      %50 = vsyncadd [#allocation6], %s49
      %s51 = sshll.u32 [#allocation7], 4
      %s52 = int_to_ptr.vmem [resolvable:$true] %s51
      %57 = dma.hbm_to_vmem [thread:$0]  %s4, 2048, %s52, [#allocation6], 128, 128, 8
    $region21: #{tpu_custom_call.1} parent=1 // pred_fallthru
      _
    // Predicated region
    $region22: #{tpu_custom_call.1} parent=1 // pred_check
      _
    $region23: #{tpu_custom_call.1} parent=1 // pred_check_branch
      %59 = sbr.rel (0) target = $region25
    $region24: #{tpu_custom_call.1} parent=1 // pred_region
      _
    $region25: #{tpu_custom_call.1} parent=1 // pred_fallthru
      _
    // Predicated region
    $region26: #{tpu_custom_call.1} parent=1 // pred_check
      _
    $region27: #{tpu_custom_call.1} parent=1 // pred_check_branch
      %61 = sbr.rel (0) target = $region29
    $region28: #{tpu_custom_call.1} parent=1 // pred_region
      _
    $region29: #{tpu_custom_call.1} parent=1 // pred_fallthru
      _
    // Predicated region
    $region30: #{tpu_custom_call.1} parent=1 // pred_check
      _
    $region31: #{tpu_custom_call.1} parent=1 // pred_check_branch
      %63 = sbr.rel (0) target = $region33
    $region32: #{tpu_custom_call.1} parent=1 // pred_region
      %64 = dma.done [#allocation3], 1024
    $region33: #{tpu_custom_call.1} parent=1 // pred_fallthru
      _
    // Predicated region
    $region34: #{tpu_custom_call.1} parent=1 // pred_check
      _
    $region35: #{tpu_custom_call.1} parent=1 // pred_check_branch
      %66 = sbr.rel (0) target = $region37
    $region36: #{tpu_custom_call.1} parent=1 // pred_region
      %67 = dma.done [#allocation6], 2048
    $region37: #{tpu_custom_call.1} parent=1 // pred_fallthru
      _
    // Predicated region
    $region38: #{tpu_custom_call.1} parent=1 // pred_check
      _
    $region39: #{tpu_custom_call.1} parent=1 // pred_check_branch
      %69 = sbr.rel (0) target = $region41
    $region40: #{tpu_custom_call.1} parent=1 // pred_region
      %70 = dma.done [#allocation6], 2048
    $region41: #{tpu_custom_call.1} parent=1 // pred_fallthru
      _
    %v71 = vld [vmem:[%s0] sm:$0xff]
    %v72 = vld [vmem:[%s0 + $0x8] sm:$0xff]
    %v73 = vld [vmem:[%s0 + $0x10] sm:$0xff]
    %v74 = vld [vmem:[%s0 + $0x18] sm:$0xff]
    %v75 = vld [vmem:[%s0 + $0x20] sm:$0xff]
    %v76 = vld [vmem:[%s0 + $0x28] sm:$0xff]
    %v77 = vld [vmem:[%s0 + $0x30] sm:$0xff]
    %v78 = vld [vmem:[%s0 + $0x38] sm:$0xff]
    %v79 = vld [vmem:[#allocation5] sm:$0xff]
    %v80 = vld [vmem:[#allocation5 + $0x8] sm:$0xff]
    %v81 = vld [vmem:[#allocation5 + $0x10] sm:$0xff]
    %v82 = vld [vmem:[#allocation5 + $0x18] sm:$0xff]
    %v83 = vld [vmem:[#allocation7] sm:$0xff]
    %v84 = vld [vmem:[#allocation7 + $0x8] sm:$0xff]
    %v85 = vld [vmem:[#allocation7 + $0x10] sm:$0xff]
    %v86 = vld [vmem:[#allocation7 + $0x18] sm:$0xff]
    %v87 = vld [vmem:[%s5] sm:$0x1]
    %v88 = vld [vmem:[%s6] sm:$0x1]
    %v90 = vlaneseq
    %v91 = vshrl.u32 %v90, 7
    %v92 = vsub.s32 0, %v91
    %v93 = vrot.slane %v87, %v92
    %vm95 = vcmask 261120
    %v97 = vsel %vm95, %v71, 0
    %v100 = vsel %vm95, %v72, 0
    %v103 = vsel %vm95, %v73, 0
    %v106 = vsel %vm95, %v74, 0
    %v109 = vsel %vm95, %v75, 0
    %v112 = vsel %vm95, %v76, 0
    %v115 = vsel %vm95, %v77, 0
    %v118 = vsel %vm95, %v78, 0
    %120 = vmatprep.subr.mxu0 0.0
    %121 = vmatpush1.msra.mxu0 0.0
    %122 = vmatprep.subr.mxu0 0.0
    %123 = vmatpush1.msra.mxu0 0.0
    %124 = vmatprep.subr.mxu0 0.0
    %125 = vmatpush1.msra.mxu0 0.0
    %126 = vmatprep.subr.mxu0 0.0
    %127 = vmatpush1.msra.mxu0 0.0
    %128 = vmatprep.subr.mxu0 0.0
    %129 = vmatpush1.msra.mxu0 0.0
    %130 = vmatprep.subr.mxu0 0.0
    %131 = vmatpush1.msra.mxu0 0.0
    %132 = vmatprep.subr.mxu0 0.0
    %133 = vmatpush1.msra.mxu0 0.0
    %134 = vmatprep.subr.mxu0 0.0
    %135 = vmatpush1.msra.mxu0 0.0
    %136 = vmatprep.subr.mxu0 0.0
    %137 = vmatpush1.msra.mxu0 0.0
    %138 = vmatprep.subr.mxu0 0.0
    %139 = vmatpush1.msra.mxu0 0.0
    %140 = vmatprep.subr.mxu0 0.0
    %141 = vmatpush1.msra.mxu0 0.0
    %142 = vmatprep.subr.mxu0 0.0
    %143 = vmatpush1.msra.mxu0 0.0
    %144 = vmatprep.subr.mxu0 0.0
    %145 = vmatpush1.msra.mxu0 %v82
    %146 = vmatprep.subr.mxu0 0.0
    %147 = vmatpush1.msra.mxu0 %v81
    %148 = vmatprep.subr.mxu0 0.0
    %149 = vmatpush1.msra.mxu0 %v80
    %150 = vmatprep.subr.mxu0 0.0
    %151 = vmatpush1.msra.mxu0 %v79
    %152 = vmatprep.subr.mxu0 0.0
    %153 = vmatpush2.msra.mxu0 0.0
    %154 = vmatprep.subr.mxu0 0.0
    %155 = vmatpush2.msra.mxu0 0.0
    %156 = vmatprep.subr.mxu0 0.0
    %157 = vmatpush2.msra.mxu0 0.0
    %158 = vmatprep.subr.mxu0 0.0
    %159 = vmatpush2.msra.mxu0 0.0
    %160 = vmatprep.subr.mxu0 0.0
    %161 = vmatpush2.msra.mxu0 0.0
    %162 = vmatprep.subr.mxu0 0.0
    %163 = vmatpush2.msra.mxu0 0.0
    %164 = vmatprep.subr.mxu0 0.0
    %165 = vmatpush2.msra.mxu0 0.0
    %166 = vmatprep.subr.mxu0 0.0
    %167 = vmatpush2.msra.mxu0 0.0
    %168 = vmatprep.subr.mxu0 0.0
    %169 = vmatpush2.msra.mxu0 0.0
    %170 = vmatprep.subr.mxu0 0.0
    %171 = vmatpush2.msra.mxu0 0.0
    %172 = vmatprep.subr.mxu0 0.0
    %173 = vmatpush2.msra.mxu0 0.0
    %174 = vmatprep.subr.mxu0 0.0
    %175 = vmatpush2.msra.mxu0 0.0
    %176 = vmatprep.subr.mxu0 0.0
    %177 = vmatpush2.msra.mxu0 0.0
    %178 = vmatprep.subr.mxu0 0.0
    %179 = vmatpush2.msra.mxu0 0.0
    %180 = vmatprep.subr.mxu0 0.0
    %181 = vmatpush2.msra.mxu0 0.0
    %182 = vmatprep.subr.mxu0 0.0
    %183 = vmatpush2.msra.mxu0 0.0
    %184 = vmatprep.mubr.f32.mxu0 0.0
    %185 = vmatmul.mubr.f32.gmra.mxu0 %v97
    %v186 = vpop.f32.mrf.mxu0
    %v187 = vadd.f32 %v93, %v186
    %v188 = vpop.f32.mrf.mxu0
    %189 = vmatprep.mubr.f32.mxu0 0.0
    %190 = vmatmul.mubr.f32.gmra.mxu0 %v100
    %v191 = vpop.f32.mrf.mxu0
    %v192 = vadd.f32 %v93, %v191
    %v193 = vpop.f32.mrf.mxu0
    %194 = vmatprep.mubr.f32.mxu0 0.0
    %195 = vmatmul.mubr.f32.gmra.mxu0 %v103
    %v196 = vpop.f32.mrf.mxu0
    %v197 = vadd.f32 %v93, %v196
    %v198 = vpop.f32.mrf.mxu0
    %199 = vmatprep.mubr.f32.mxu0 0.0
    %200 = vmatmul.mubr.f32.gmra.mxu0 %v106
    %v201 = vpop.f32.mrf.mxu0
    %v202 = vadd.f32 %v93, %v201
    %v203 = vpop.f32.mrf.mxu0
    %204 = vmatprep.mubr.f32.mxu0 0.0
    %205 = vmatmul.mubr.f32.gmra.mxu0 %v109
    %v206 = vpop.f32.mrf.mxu0
    %v207 = vadd.f32 %v93, %v206
    %v208 = vpop.f32.mrf.mxu0
    %209 = vmatprep.mubr.f32.mxu0 0.0
    %210 = vmatmul.mubr.f32.gmra.mxu0 %v112
    %v211 = vpop.f32.mrf.mxu0
    %v212 = vadd.f32 %v93, %v211
    %v213 = vpop.f32.mrf.mxu0
    %214 = vmatprep.mubr.f32.mxu0 0.0
    %215 = vmatmul.mubr.f32.gmra.mxu0 %v115
    %v216 = vpop.f32.mrf.mxu0
    %v217 = vadd.f32 %v93, %v216
    %v218 = vpop.f32.mrf.mxu0
    %219 = vmatprep.mubr.f32.mxu0 0.0
    %220 = vmatmul.mubr.f32.gmra.mxu0 %v118
    %v221 = vpop.f32.mrf.mxu0
    %v222 = vadd.f32 %v93, %v221
    %v223 = vpop.f32.mrf.mxu0
    %224 = vdwg.mxu0
    %v226 = vlaneseq
    %v227 = vshrl.u32 %v226, 7
    %v228 = vsub.s32 0, %v227
    %v229 = vrot.slane %v88, %v228
    %v232 = vsel %vm95, 0.0, 0
    %234 = vmatprep.subr.mxu0 0.0
    %235 = vmatpush1.msra.mxu0 0.0
    %236 = vmatprep.subr.mxu0 0.0
    %237 = vmatpush1.msra.mxu0 0.0
    %238 = vmatprep.subr.mxu0 0.0
    %239 = vmatpush1.msra.mxu0 0.0
    %240 = vmatprep.subr.mxu0 0.0
    %241 = vmatpush1.msra.mxu0 0.0
    %242 = vmatprep.subr.mxu0 0.0
    %243 = vmatpush1.msra.mxu0 0.0
    %244 = vmatprep.subr.mxu0 0.0
    %245 = vmatpush1.msra.mxu0 0.0
    %246 = vmatprep.subr.mxu0 0.0
    %247 = vmatpush1.msra.mxu0 0.0
    %248 = vmatprep.subr.mxu0 0.0
    %249 = vmatpush1.msra.mxu0 0.0
    %250 = vmatprep.subr.mxu0 0.0
    %251 = vmatpush1.msra.mxu0 0.0
    %252 = vmatprep.subr.mxu0 0.0
    %253 = vmatpush1.msra.mxu0 0.0
    %254 = vmatprep.subr.mxu0 0.0
    %255 = vmatpush1.msra.mxu0 0.0
    %256 = vmatprep.subr.mxu0 0.0
    %257 = vmatpush1.msra.mxu0 0.0
    %258 = vmatprep.subr.mxu0 0.0
    %259 = vmatpush1.msra.mxu0 %v86
    %260 = vmatprep.subr.mxu0 0.0
    %261 = vmatpush1.msra.mxu0 %v85
    %262 = vmatprep.subr.mxu0 0.0
    %263 = vmatpush1.msra.mxu0 %v84
    %264 = vmatprep.subr.mxu0 0.0
    %265 = vmatpush1.msra.mxu0 %v83
    %266 = vmatprep.subr.mxu0 0.0
    %267 = vmatpush2.msra.mxu0 0.0
    %268 = vmatprep.subr.mxu0 0.0
    %269 = vmatpush2.msra.mxu0 0.0
    %270 = vmatprep.subr.mxu0 0.0
    %271 = vmatpush2.msra.mxu0 0.0
    %272 = vmatprep.subr.mxu0 0.0
    %273 = vmatpush2.msra.mxu0 0.0
    %274 = vmatprep.subr.mxu0 0.0
    %275 = vmatpush2.msra.mxu0 0.0
    %276 = vmatprep.subr.mxu0 0.0
    %277 = vmatpush2.msra.mxu0 0.0
    %278 = vmatprep.subr.mxu0 0.0
    %279 = vmatpush2.msra.mxu0 0.0
    %280 = vmatprep.subr.mxu0 0.0
    %281 = vmatpush2.msra.mxu0 0.0
    %282 = vmatprep.subr.mxu0 0.0
    %283 = vmatpush2.msra.mxu0 0.0
    %284 = vmatprep.subr.mxu0 0.0
    %285 = vmatpush2.msra.mxu0 0.0
    %286 = vmatprep.subr.mxu0 0.0
    %287 = vmatpush2.msra.mxu0 0.0
    %288 = vmatprep.subr.mxu0 0.0
    %289 = vmatpush2.msra.mxu0 0.0
    %290 = vmatprep.subr.mxu0 0.0
    %291 = vmatpush2.msra.mxu0 0.0
    %292 = vmatprep.subr.mxu0 0.0
    %293 = vmatpush2.msra.mxu0 0.0
    %294 = vmatprep.subr.mxu0 0.0
    %295 = vmatpush2.msra.mxu0 0.0
    %296 = vmatprep.subr.mxu0 0.0
    %297 = vmatpush2.msra.mxu0 0.0
    %298 = vmatprep.mubr.f32.mxu0 0.0
    %299 = vmatmul.mubr.f32.gmra.mxu0 %v232
    %v300 = vpop.f32.mrf.mxu0
    %v301 = vadd.f32 %v229, %v300
    %v302 = vpop.f32.mrf.mxu0
    %303 = vdwg.mxu0
    %v304 = vadd.f32 %v187, %v301
    %v305 = vxor.u32 %v304, 2147483648
    %v306 = vmul.f32 %v305, 1.442695
    %v307 = vpow.pop %v306
    %v308 = vadd.f32 %v307, 1.0
    %v309 = vrcp.pop %v308
    %v310 = vmul.f32 1.0, %v309
    %312 = vrot.lane.b32.xlu0 %v301, 64
    %v313 = vpop.permute.xlu0 %312
    %v315 = vmul.f32 %v310, %v313
    %317 = vrot.lane.b32.xlu0 %v315, 64
    %v318 = vpop.permute.xlu0 %317
    %v320 = vadd.f32 %v187, %v318
    %v321 = vtanh.pop %v320
    %v322 = vsub.f32 0.0, %v321
    %324 = vrot.lane.b32.xlu0 %v322, 96
    %v325 = vpop.permute.xlu0 %324
    %v327 = vmul.f32 %v310, %v325
    %329 = vrot.lane.b32.xlu0 %v327, 32
    %v330 = vpop.permute.xlu0 %329
    %v332 = vadd.f32 %v321, %v330
    %v333 = vld [vmem:[%s1] sm:$0xff]
    %335 = vrot.lane.b32.xlu0 %v332, 64
    %v336 = vpop.permute.xlu0 %335
    %v338 = vmul.f32 %v333, %v336
    %v339 = vld [vmem:[#allocation2] sm:$0xff]
    %v340 = vmul.f32 %v339, 0.0
    %v341 = vadd.f32 %v338, %v340
    %v343 = vsel %vm95, %v341, 0
    %345 = vmatprep.subr.mxu0 0.0
    %346 = vmatpush1.msra.mxu0 0.0
    %347 = vmatprep.subr.mxu0 0.0
    %348 = vmatpush1.msra.mxu0 0.0
    %349 = vmatprep.subr.mxu0 0.0
    %350 = vmatpush1.msra.mxu0 0.0
    %351 = vmatprep.subr.mxu0 0.0
    %352 = vmatpush1.msra.mxu0 0.0
    %353 = vmatprep.subr.mxu0 0.0
    %354 = vmatpush1.msra.mxu0 0.0
    %355 = vmatprep.subr.mxu0 0.0
    %356 = vmatpush1.msra.mxu0 0.0
    %357 = vmatprep.subr.mxu0 0.0
    %358 = vmatpush1.msra.mxu0 0.0
    %359 = vmatprep.subr.mxu0 0.0
    %360 = vmatpush1.msra.mxu0 0.0
    %361 = vmatprep.subr.mxu0 0.0
    %362 = vmatpush1.msra.mxu0 0.0
    %363 = vmatprep.subr.mxu0 0.0
    %364 = vmatpush1.msra.mxu0 0.0
    %365 = vmatprep.subr.mxu0 0.0
    %366 = vmatpush1.msra.mxu0 0.0
    %367 = vmatprep.subr.mxu0 0.0
    %368 = vmatpush1.msra.mxu0 0.0
    %369 = vmatprep.subr.mxu0 0.0
    %370 = vmatpush1.msra.mxu0 %v86
    %371 = vmatprep.subr.mxu0 0.0
    %372 = vmatpush1.msra.mxu0 %v85
    %373 = vmatprep.subr.mxu0 0.0
    %374 = vmatpush1.msra.mxu0 %v84
    %375 = vmatprep.subr.mxu0 0.0
    %376 = vmatpush1.msra.mxu0 %v83
    %377 = vmatprep.subr.mxu0 0.0
    %378 = vmatpush2.msra.mxu0 0.0
    %379 = vmatprep.subr.mxu0 0.0
    %380 = vmatpush2.msra.mxu0 0.0
    %381 = vmatprep.subr.mxu0 0.0
    %382 = vmatpush2.msra.mxu0 0.0
    %383 = vmatprep.subr.mxu0 0.0
    %384 = vmatpush2.msra.mxu0 0.0
    %385 = vmatprep.subr.mxu0 0.0
    %386 = vmatpush2.msra.mxu0 0.0
    %387 = vmatprep.subr.mxu0 0.0
    %388 = vmatpush2.msra.mxu0 0.0
    %389 = vmatprep.subr.mxu0 0.0
    %390 = vmatpush2.msra.mxu0 0.0
    %391 = vmatprep.subr.mxu0 0.0
    %392 = vmatpush2.msra.mxu0 0.0
    %393 = vmatprep.subr.mxu0 0.0
    %394 = vmatpush2.msra.mxu0 0.0
    %395 = vmatprep.subr.mxu0 0.0
    %396 = vmatpush2.msra.mxu0 0.0
    %397 = vmatprep.subr.mxu0 0.0
    %398 = vmatpush2.msra.mxu0 0.0
    %399 = vmatprep.subr.mxu0 0.0
    %400 = vmatpush2.msra.mxu0 0.0
    %401 = vmatprep.subr.mxu0 0.0
    %402 = vmatpush2.msra.mxu0 0.0
    %403 = vmatprep.subr.mxu0 0.0
    %404 = vmatpush2.msra.mxu0 0.0
    %405 = vmatprep.subr.mxu0 0.0
    %406 = vmatpush2.msra.mxu0 0.0
    %407 = vmatprep.subr.mxu0 0.0
    %408 = vmatpush2.msra.mxu0 0.0
    %409 = vmatprep.mubr.f32.mxu0 0.0
    %410 = vmatmul.mubr.f32.gmra.mxu0 %v343
    %v411 = vpop.f32.mrf.mxu0
    %v412 = vadd.f32 %v229, %v411
    %v413 = vpop.f32.mrf.mxu0
    %414 = vdwg.mxu0
    %v415 = vadd.f32 %v192, %v412
    %v416 = vxor.u32 %v415, 2147483648
    %v417 = vmul.f32 %v416, 1.442695
    %v418 = vpow.pop %v417
    %v419 = vadd.f32 %v418, 1.0
    %v420 = vrcp.pop %v419
    %v421 = vmul.f32 1.0, %v420
    %423 = vrot.lane.b32.xlu0 %v412, 64
    %v424 = vpop.permute.xlu0 %423
    %v426 = vmul.f32 %v421, %v424
    %428 = vrot.lane.b32.xlu0 %v426, 64
    %v429 = vpop.permute.xlu0 %428
    %v431 = vadd.f32 %v192, %v429
    %v432 = vtanh.pop %v431
    %434 = vrot.lane.b32.xlu0 %v432, 64
    %v435 = vpop.permute.xlu0 %434
    %v437 = vsub.f32 %v341, %v435
    %439 = vrot.lane.b32.xlu0 %v437, 32
    %v440 = vpop.permute.xlu0 %439
    %v442 = vmul.f32 %v421, %v440
    %444 = vrot.lane.b32.xlu0 %v442, 32
    %v445 = vpop.permute.xlu0 %444
    %v447 = vadd.f32 %v432, %v445
    %s448 = scalar_lea.vmem %s1, 8
    %v449 = vld [vmem:[%s448] sm:$0xff]
    %451 = vrot.lane.b32.xlu0 %v447, 64
    %v452 = vpop.permute.xlu0 %451
    %v454 = vmul.f32 %v449, %v452
    %s455 = scalar_lea.vmem [#allocation2], 8
    %v456 = vld [vmem:[%s455] sm:$0xff]
    %v457 = vmul.f32 %v456, %v341
    %v458 = vadd.f32 %v454, %v457
    %v460 = vsel %vm95, %v458, 0
    %462 = vmatprep.subr.mxu0 0.0
    %463 = vmatpush1.msra.mxu0 0.0
    %464 = vmatprep.subr.mxu0 0.0
    %465 = vmatpush1.msra.mxu0 0.0
    %466 = vmatprep.subr.mxu0 0.0
    %467 = vmatpush1.msra.mxu0 0.0
    %468 = vmatprep.subr.mxu0 0.0
    %469 = vmatpush1.msra.mxu0 0.0
    %470 = vmatprep.subr.mxu0 0.0
    %471 = vmatpush1.msra.mxu0 0.0
    %472 = vmatprep.subr.mxu0 0.0
    %473 = vmatpush1.msra.mxu0 0.0
    %474 = vmatprep.subr.mxu0 0.0
    %475 = vmatpush1.msra.mxu0 0.0
    %476 = vmatprep.subr.mxu0 0.0
    %477 = vmatpush1.msra.mxu0 0.0
    %478 = vmatprep.subr.mxu0 0.0
    %479 = vmatpush1.msra.mxu0 0.0
    %480 = vmatprep.subr.mxu0 0.0
    %481 = vmatpush1.msra.mxu0 0.0
    %482 = vmatprep.subr.mxu0 0.0
    %483 = vmatpush1.msra.mxu0 0.0
    %484 = vmatprep.subr.mxu0 0.0
    %485 = vmatpush1.msra.mxu0 0.0
    %486 = vmatprep.subr.mxu0 0.0
    %487 = vmatpush1.msra.mxu0 %v86
    %488 = vmatprep.subr.mxu0 0.0
    %489 = vmatpush1.msra.mxu0 %v85
    %490 = vmatprep.subr.mxu0 0.0
    %491 = vmatpush1.msra.mxu0 %v84
    %492 = vmatprep.subr.mxu0 0.0
    %493 = vmatpush1.msra.mxu0 %v83
    %494 = vmatprep.subr.mxu0 0.0
    %495 = vmatpush2.msra.mxu0 0.0
    %496 = vmatprep.subr.mxu0 0.0
    %497 = vmatpush2.msra.mxu0 0.0
    %498 = vmatprep.subr.mxu0 0.0
    %499 = vmatpush2.msra.mxu0 0.0
    %500 = vmatprep.subr.mxu0 0.0
    %501 = vmatpush2.msra.mxu0 0.0
    %502 = vmatprep.subr.mxu0 0.0
    %503 = vmatpush2.msra.mxu0 0.0
    %504 = vmatprep.subr.mxu0 0.0
    %505 = vmatpush2.msra.mxu0 0.0
    %506 = vmatprep.subr.mxu0 0.0
    %507 = vmatpush2.msra.mxu0 0.0
    %508 = vmatprep.subr.mxu0 0.0
    %509 = vmatpush2.msra.mxu0 0.0
    %510 = vmatprep.subr.mxu0 0.0
    %511 = vmatpush2.msra.mxu0 0.0
    %512 = vmatprep.subr.mxu0 0.0
    %513 = vmatpush2.msra.mxu0 0.0
    %514 = vmatprep.subr.mxu0 0.0
    %515 = vmatpush2.msra.mxu0 0.0
    %516 = vmatprep.subr.mxu0 0.0
    %517 = vmatpush2.msra.mxu0 0.0
    %518 = vmatprep.subr.mxu0 0.0
    %519 = vmatpush2.msra.mxu0 0.0
    %520 = vmatprep.subr.mxu0 0.0
    %521 = vmatpush2.msra.mxu0 0.0
    %522 = vmatprep.subr.mxu0 0.0
    %523 = vmatpush2.msra.mxu0 0.0
    %524 = vmatprep.subr.mxu0 0.0
    %525 = vmatpush2.msra.mxu0 0.0
    %526 = vmatprep.mubr.f32.mxu0 0.0
    %527 = vmatmul.mubr.f32.gmra.mxu0 %v460
    %v528 = vpop.f32.mrf.mxu0
    %v529 = vadd.f32 %v229, %v528
    %v530 = vpop.f32.mrf.mxu0
    %531 = vdwg.mxu0
    %v532 = vadd.f32 %v197, %v529
    %v533 = vxor.u32 %v532, 2147483648
    %v534 = vmul.f32 %v533, 1.442695
    %v535 = vpow.pop %v534
    %v536 = vadd.f32 %v535, 1.0
    %v537 = vrcp.pop %v536
    %v538 = vmul.f32 1.0, %v537
    %540 = vrot.lane.b32.xlu0 %v529, 64
    %v541 = vpop.permute.xlu0 %540
    %v543 = vmul.f32 %v538, %v541
    %545 = vrot.lane.b32.xlu0 %v543, 64
    %v546 = vpop.permute.xlu0 %545
    %v548 = vadd.f32 %v197, %v546
    %v549 = vtanh.pop %v548
    %551 = vrot.lane.b32.xlu0 %v549, 64
    %v552 = vpop.permute.xlu0 %551
    %v554 = vsub.f32 %v458, %v552
    %556 = vrot.lane.b32.xlu0 %v554, 32
    %v557 = vpop.permute.xlu0 %556
    %v559 = vmul.f32 %v538, %v557
    %561 = vrot.lane.b32.xlu0 %v559, 32
    %v562 = vpop.permute.xlu0 %561
    %v564 = vadd.f32 %v549, %v562
    %s565 = scalar_lea.vmem %s1, 16
    %v566 = vld [vmem:[%s565] sm:$0xff]
    %568 = vrot.lane.b32.xlu0 %v564, 64
    %v569 = vpop.permute.xlu0 %568
    %v571 = vmul.f32 %v566, %v569
    %s572 = scalar_lea.vmem [#allocation2], 16
    %v573 = vld [vmem:[%s572] sm:$0xff]
    %v574 = vmul.f32 %v573, %v458
    %v575 = vadd.f32 %v571, %v574
    %v577 = vsel %vm95, %v575, 0
    %579 = vmatprep.subr.mxu0 0.0
    %580 = vmatpush1.msra.mxu0 0.0
    %581 = vmatprep.subr.mxu0 0.0
    %582 = vmatpush1.msra.mxu0 0.0
    %583 = vmatprep.subr.mxu0 0.0
    %584 = vmatpush1.msra.mxu0 0.0
    %585 = vmatprep.subr.mxu0 0.0
    %586 = vmatpush1.msra.mxu0 0.0
    %587 = vmatprep.subr.mxu0 0.0
    %588 = vmatpush1.msra.mxu0 0.0
    %589 = vmatprep.subr.mxu0 0.0
    %590 = vmatpush1.msra.mxu0 0.0
    %591 = vmatprep.subr.mxu0 0.0
    %592 = vmatpush1.msra.mxu0 0.0
    %593 = vmatprep.subr.mxu0 0.0
    %594 = vmatpush1.msra.mxu0 0.0
    %595 = vmatprep.subr.mxu0 0.0
    %596 = vmatpush1.msra.mxu0 0.0
    %597 = vmatprep.subr.mxu0 0.0
    %598 = vmatpush1.msra.mxu0 0.0
    %599 = vmatprep.subr.mxu0 0.0
    %600 = vmatpush1.msra.mxu0 0.0
    %601 = vmatprep.subr.mxu0 0.0
    %602 = vmatpush1.msra.mxu0 0.0
    %603 = vmatprep.subr.mxu0 0.0
    %604 = vmatpush1.msra.mxu0 %v86
    %605 = vmatprep.subr.mxu0 0.0
    %606 = vmatpush1.msra.mxu0 %v85
    %607 = vmatprep.subr.mxu0 0.0
    %608 = vmatpush1.msra.mxu0 %v84
    %609 = vmatprep.subr.mxu0 0.0
    %610 = vmatpush1.msra.mxu0 %v83
    %611 = vmatprep.subr.mxu0 0.0
    %612 = vmatpush2.msra.mxu0 0.0
    %613 = vmatprep.subr.mxu0 0.0
    %614 = vmatpush2.msra.mxu0 0.0
    %615 = vmatprep.subr.mxu0 0.0
    %616 = vmatpush2.msra.mxu0 0.0
    %617 = vmatprep.subr.mxu0 0.0
    %618 = vmatpush2.msra.mxu0 0.0
    %619 = vmatprep.subr.mxu0 0.0
    %620 = vmatpush2.msra.mxu0 0.0
    %621 = vmatprep.subr.mxu0 0.0
    %622 = vmatpush2.msra.mxu0 0.0
    %623 = vmatprep.subr.mxu0 0.0
    %624 = vmatpush2.msra.mxu0 0.0
    %625 = vmatprep.subr.mxu0 0.0
    %626 = vmatpush2.msra.mxu0 0.0
    %627 = vmatprep.subr.mxu0 0.0
    %628 = vmatpush2.msra.mxu0 0.0
    %629 = vmatprep.subr.mxu0 0.0
    %630 = vmatpush2.msra.mxu0 0.0
    %631 = vmatprep.subr.mxu0 0.0
    %632 = vmatpush2.msra.mxu0 0.0
    %633 = vmatprep.subr.mxu0 0.0
    %634 = vmatpush2.msra.mxu0 0.0
    %635 = vmatprep.subr.mxu0 0.0
    %636 = vmatpush2.msra.mxu0 0.0
    %637 = vmatprep.subr.mxu0 0.0
    %638 = vmatpush2.msra.mxu0 0.0
    %639 = vmatprep.subr.mxu0 0.0
    %640 = vmatpush2.msra.mxu0 0.0
    %641 = vmatprep.subr.mxu0 0.0
    %642 = vmatpush2.msra.mxu0 0.0
    %643 = vmatprep.mubr.f32.mxu0 0.0
    %644 = vmatmul.mubr.f32.gmra.mxu0 %v577
    %v645 = vpop.f32.mrf.mxu0
    %v646 = vadd.f32 %v229, %v645
    %v647 = vpop.f32.mrf.mxu0
    %648 = vdwg.mxu0
    %v649 = vadd.f32 %v202, %v646
    %v650 = vxor.u32 %v649, 2147483648
    %v651 = vmul.f32 %v650, 1.442695
    %v652 = vpow.pop %v651
    %v653 = vadd.f32 %v652, 1.0
    %v654 = vrcp.pop %v653
    %v655 = vmul.f32 1.0, %v654
    %657 = vrot.lane.b32.xlu0 %v646, 64
    %v658 = vpop.permute.xlu0 %657
    %v660 = vmul.f32 %v655, %v658
    %662 = vrot.lane.b32.xlu0 %v660, 64
    %v663 = vpop.permute.xlu0 %662
    %v665 = vadd.f32 %v202, %v663
    %v666 = vtanh.pop %v665
    %668 = vrot.lane.b32.xlu0 %v666, 64
    %v669 = vpop.permute.xlu0 %668
    %v671 = vsub.f32 %v575, %v669
    %673 = vrot.lane.b32.xlu0 %v671, 32
    %v674 = vpop.permute.xlu0 %673
    %v676 = vmul.f32 %v655, %v674
    %678 = vrot.lane.b32.xlu0 %v676, 32
    %v679 = vpop.permute.xlu0 %678
    %v681 = vadd.f32 %v666, %v679
    %s682 = scalar_lea.vmem %s1, 24
    %v683 = vld [vmem:[%s682] sm:$0xff]
    %685 = vrot.lane.b32.xlu0 %v681, 64
    %v686 = vpop.permute.xlu0 %685
    %v688 = vmul.f32 %v683, %v686
    %s689 = scalar_lea.vmem [#allocation2], 24
    %v690 = vld [vmem:[%s689] sm:$0xff]
    %v691 = vmul.f32 %v690, %v575
    %v692 = vadd.f32 %v688, %v691
    %v694 = vsel %vm95, %v692, 0
    %696 = vmatprep.subr.mxu0 0.0
    %697 = vmatpush1.msra.mxu0 0.0
    %698 = vmatprep.subr.mxu0 0.0
    %699 = vmatpush1.msra.mxu0 0.0
    %700 = vmatprep.subr.mxu0 0.0
    %701 = vmatpush1.msra.mxu0 0.0
    %702 = vmatprep.subr.mxu0 0.0
    %703 = vmatpush1.msra.mxu0 0.0
    %704 = vmatprep.subr.mxu0 0.0
    %705 = vmatpush1.msra.mxu0 0.0
    %706 = vmatprep.subr.mxu0 0.0
    %707 = vmatpush1.msra.mxu0 0.0
    %708 = vmatprep.subr.mxu0 0.0
    %709 = vmatpush1.msra.mxu0 0.0
    %710 = vmatprep.subr.mxu0 0.0
    %711 = vmatpush1.msra.mxu0 0.0
    %712 = vmatprep.subr.mxu0 0.0
    %713 = vmatpush1.msra.mxu0 0.0
    %714 = vmatprep.subr.mxu0 0.0
    %715 = vmatpush1.msra.mxu0 0.0
    %716 = vmatprep.subr.mxu0 0.0
    %717 = vmatpush1.msra.mxu0 0.0
    %718 = vmatprep.subr.mxu0 0.0
    %719 = vmatpush1.msra.mxu0 0.0
    %720 = vmatprep.subr.mxu0 0.0
    %721 = vmatpush1.msra.mxu0 %v86
    %722 = vmatprep.subr.mxu0 0.0
    %723 = vmatpush1.msra.mxu0 %v85
    %724 = vmatprep.subr.mxu0 0.0
    %725 = vmatpush1.msra.mxu0 %v84
    %726 = vmatprep.subr.mxu0 0.0
    %727 = vmatpush1.msra.mxu0 %v83
    %728 = vmatprep.subr.mxu0 0.0
    %729 = vmatpush2.msra.mxu0 0.0
    %730 = vmatprep.subr.mxu0 0.0
    %731 = vmatpush2.msra.mxu0 0.0
    %732 = vmatprep.subr.mxu0 0.0
    %733 = vmatpush2.msra.mxu0 0.0
    %734 = vmatprep.subr.mxu0 0.0
    %735 = vmatpush2.msra.mxu0 0.0
    %736 = vmatprep.subr.mxu0 0.0
    %737 = vmatpush2.msra.mxu0 0.0
    %738 = vmatprep.subr.mxu0 0.0
    %739 = vmatpush2.msra.mxu0 0.0
    %740 = vmatprep.subr.mxu0 0.0
    %741 = vmatpush2.msra.mxu0 0.0
    %742 = vmatprep.subr.mxu0 0.0
    %743 = vmatpush2.msra.mxu0 0.0
    %744 = vmatprep.subr.mxu0 0.0
    %745 = vmatpush2.msra.mxu0 0.0
    %746 = vmatprep.subr.mxu0 0.0
    %747 = vmatpush2.msra.mxu0 0.0
    %748 = vmatprep.subr.mxu0 0.0
    %749 = vmatpush2.msra.mxu0 0.0
    %750 = vmatprep.subr.mxu0 0.0
    %751 = vmatpush2.msra.mxu0 0.0
    %752 = vmatprep.subr.mxu0 0.0
    %753 = vmatpush2.msra.mxu0 0.0
    %754 = vmatprep.subr.mxu0 0.0
    %755 = vmatpush2.msra.mxu0 0.0
    %756 = vmatprep.subr.mxu0 0.0
    %757 = vmatpush2.msra.mxu0 0.0
    %758 = vmatprep.subr.mxu0 0.0
    %759 = vmatpush2.msra.mxu0 0.0
    %760 = vmatprep.mubr.f32.mxu0 0.0
    %761 = vmatmul.mubr.f32.gmra.mxu0 %v694
    %v762 = vpop.f32.mrf.mxu0
    %v763 = vadd.f32 %v229, %v762
    %v764 = vpop.f32.mrf.mxu0
    %765 = vdwg.mxu0
    %v766 = vadd.f32 %v207, %v763
    %v767 = vxor.u32 %v766, 2147483648
    %v768 = vmul.f32 %v767, 1.442695
    %v769 = vpow.pop %v768
    %v770 = vadd.f32 %v769, 1.0
    %v771 = vrcp.pop %v770
    %v772 = vmul.f32 1.0, %v771
    %774 = vrot.lane.b32.xlu0 %v763, 64
    %v775 = vpop.permute.xlu0 %774
    %v777 = vmul.f32 %v772, %v775
    %779 = vrot.lane.b32.xlu0 %v777, 64
    %v780 = vpop.permute.xlu0 %779
    %v782 = vadd.f32 %v207, %v780
    %v783 = vtanh.pop %v782
    %785 = vrot.lane.b32.xlu0 %v783, 64
    %v786 = vpop.permute.xlu0 %785
    %v788 = vsub.f32 %v692, %v786
    %790 = vrot.lane.b32.xlu0 %v788, 32
    %v791 = vpop.permute.xlu0 %790
    %v793 = vmul.f32 %v772, %v791
    %795 = vrot.lane.b32.xlu0 %v793, 32
    %v796 = vpop.permute.xlu0 %795
    %v798 = vadd.f32 %v783, %v796
    %s799 = scalar_lea.vmem %s1, 32
    %v800 = vld [vmem:[%s799] sm:$0xff]
    %802 = vrot.lane.b32.xlu0 %v798, 64
    %v803 = vpop.permute.xlu0 %802
    %v805 = vmul.f32 %v800, %v803
    %s806 = scalar_lea.vmem [#allocation2], 32
    %v807 = vld [vmem:[%s806] sm:$0xff]
    %v808 = vmul.f32 %v807, %v692
    %v809 = vadd.f32 %v805, %v808
    %v811 = vsel %vm95, %v809, 0
    %813 = vmatprep.subr.mxu0 0.0
    %814 = vmatpush1.msra.mxu0 0.0
    %815 = vmatprep.subr.mxu0 0.0
    %816 = vmatpush1.msra.mxu0 0.0
    %817 = vmatprep.subr.mxu0 0.0
    %818 = vmatpush1.msra.mxu0 0.0
    %819 = vmatprep.subr.mxu0 0.0
    %820 = vmatpush1.msra.mxu0 0.0
    %821 = vmatprep.subr.mxu0 0.0
    %822 = vmatpush1.msra.mxu0 0.0
    %823 = vmatprep.subr.mxu0 0.0
    %824 = vmatpush1.msra.mxu0 0.0
    %825 = vmatprep.subr.mxu0 0.0
    %826 = vmatpush1.msra.mxu0 0.0
    %827 = vmatprep.subr.mxu0 0.0
    %828 = vmatpush1.msra.mxu0 0.0
    %829 = vmatprep.subr.mxu0 0.0
    %830 = vmatpush1.msra.mxu0 0.0
    %831 = vmatprep.subr.mxu0 0.0
    %832 = vmatpush1.msra.mxu0 0.0
    %833 = vmatprep.subr.mxu0 0.0
    %834 = vmatpush1.msra.mxu0 0.0
    %835 = vmatprep.subr.mxu0 0.0
    %836 = vmatpush1.msra.mxu0 0.0
    %837 = vmatprep.subr.mxu0 0.0
    %838 = vmatpush1.msra.mxu0 %v86
    %839 = vmatprep.subr.mxu0 0.0
    %840 = vmatpush1.msra.mxu0 %v85
    %841 = vmatprep.subr.mxu0 0.0
    %842 = vmatpush1.msra.mxu0 %v84
    %843 = vmatprep.subr.mxu0 0.0
    %844 = vmatpush1.msra.mxu0 %v83
    %845 = vmatprep.subr.mxu0 0.0
    %846 = vmatpush2.msra.mxu0 0.0
    %847 = vmatprep.subr.mxu0 0.0
    %848 = vmatpush2.msra.mxu0 0.0
    %849 = vmatprep.subr.mxu0 0.0
    %850 = vmatpush2.msra.mxu0 0.0
    %851 = vmatprep.subr.mxu0 0.0
    %852 = vmatpush2.msra.mxu0 0.0
    %853 = vmatprep.subr.mxu0 0.0
    %854 = vmatpush2.msra.mxu0 0.0
    %855 = vmatprep.subr.mxu0 0.0
    %856 = vmatpush2.msra.mxu0 0.0
    %857 = vmatprep.subr.mxu0 0.0
    %858 = vmatpush2.msra.mxu0 0.0
    %859 = vmatprep.subr.mxu0 0.0
    %860 = vmatpush2.msra.mxu0 0.0
    %861 = vmatprep.subr.mxu0 0.0
    %862 = vmatpush2.msra.mxu0 0.0
    %863 = vmatprep.subr.mxu0 0.0
    %864 = vmatpush2.msra.mxu0 0.0
    %865 = vmatprep.subr.mxu0 0.0
    %866 = vmatpush2.msra.mxu0 0.0
    %867 = vmatprep.subr.mxu0 0.0
    %868 = vmatpush2.msra.mxu0 0.0
    %869 = vmatprep.subr.mxu0 0.0
    %870 = vmatpush2.msra.mxu0 0.0
    %871 = vmatprep.subr.mxu0 0.0
    %872 = vmatpush2.msra.mxu0 0.0
    %873 = vmatprep.subr.mxu0 0.0
    %874 = vmatpush2.msra.mxu0 0.0
    %875 = vmatprep.subr.mxu0 0.0
    %876 = vmatpush2.msra.mxu0 0.0
    %877 = vmatprep.mubr.f32.mxu0 0.0
    %878 = vmatmul.mubr.f32.gmra.mxu0 %v811
    %v879 = vpop.f32.mrf.mxu0
    %v880 = vadd.f32 %v229, %v879
    %v881 = vpop.f32.mrf.mxu0
    %882 = vdwg.mxu0
    %v883 = vadd.f32 %v212, %v880
    %v884 = vxor.u32 %v883, 2147483648
    %v885 = vmul.f32 %v884, 1.442695
    %v886 = vpow.pop %v885
    %v887 = vadd.f32 %v886, 1.0
    %v888 = vrcp.pop %v887
    %v889 = vmul.f32 1.0, %v888
    %891 = vrot.lane.b32.xlu0 %v880, 64
    %v892 = vpop.permute.xlu0 %891
    %v894 = vmul.f32 %v889, %v892
    %896 = vrot.lane.b32.xlu0 %v894, 64
    %v897 = vpop.permute.xlu0 %896
    %v899 = vadd.f32 %v212, %v897
    %v900 = vtanh.pop %v899
    %902 = vrot.lane.b32.xlu0 %v900, 64
    %v903 = vpop.permute.xlu0 %902
    %v905 = vsub.f32 %v809, %v903
    %907 = vrot.lane.b32.xlu0 %v905, 32
    %v908 = vpop.permute.xlu0 %907
    %v910 = vmul.f32 %v889, %v908
    %912 = vrot.lane.b32.xlu0 %v910, 32
    %v913 = vpop.permute.xlu0 %912
    %v915 = vadd.f32 %v900, %v913
    %s916 = scalar_lea.vmem %s1, 40
    %v917 = vld [vmem:[%s916] sm:$0xff]
    %919 = vrot.lane.b32.xlu0 %v915, 64
    %v920 = vpop.permute.xlu0 %919
    %v922 = vmul.f32 %v917, %v920
    %s923 = scalar_lea.vmem [#allocation2], 40
    %v924 = vld [vmem:[%s923] sm:$0xff]
    %v925 = vmul.f32 %v924, %v809
    %v926 = vadd.f32 %v922, %v925
    %v928 = vsel %vm95, %v926, 0
    %930 = vmatprep.subr.mxu0 0.0
    %931 = vmatpush1.msra.mxu0 0.0
    %932 = vmatprep.subr.mxu0 0.0
    %933 = vmatpush1.msra.mxu0 0.0
    %934 = vmatprep.subr.mxu0 0.0
    %935 = vmatpush1.msra.mxu0 0.0
    %936 = vmatprep.subr.mxu0 0.0
    %937 = vmatpush1.msra.mxu0 0.0
    %938 = vmatprep.subr.mxu0 0.0
    %939 = vmatpush1.msra.mxu0 0.0
    %940 = vmatprep.subr.mxu0 0.0
    %941 = vmatpush1.msra.mxu0 0.0
    %942 = vmatprep.subr.mxu0 0.0
    %943 = vmatpush1.msra.mxu0 0.0
    %944 = vmatprep.subr.mxu0 0.0
    %945 = vmatpush1.msra.mxu0 0.0
    %946 = vmatprep.subr.mxu0 0.0
    %947 = vmatpush1.msra.mxu0 0.0
    %948 = vmatprep.subr.mxu0 0.0
    %949 = vmatpush1.msra.mxu0 0.0
    %950 = vmatprep.subr.mxu0 0.0
    %951 = vmatpush1.msra.mxu0 0.0
    %952 = vmatprep.subr.mxu0 0.0
    %953 = vmatpush1.msra.mxu0 0.0
    %954 = vmatprep.subr.mxu0 0.0
    %955 = vmatpush1.msra.mxu0 %v86
    %956 = vmatprep.subr.mxu0 0.0
    %957 = vmatpush1.msra.mxu0 %v85
    %958 = vmatprep.subr.mxu0 0.0
    %959 = vmatpush1.msra.mxu0 %v84
    %960 = vmatprep.subr.mxu0 0.0
    %961 = vmatpush1.msra.mxu0 %v83
    %962 = vmatprep.subr.mxu0 0.0
    %963 = vmatpush2.msra.mxu0 0.0
    %964 = vmatprep.subr.mxu0 0.0
    %965 = vmatpush2.msra.mxu0 0.0
    %966 = vmatprep.subr.mxu0 0.0
    %967 = vmatpush2.msra.mxu0 0.0
    %968 = vmatprep.subr.mxu0 0.0
    %969 = vmatpush2.msra.mxu0 0.0
    %970 = vmatprep.subr.mxu0 0.0
    %971 = vmatpush2.msra.mxu0 0.0
    %972 = vmatprep.subr.mxu0 0.0
    %973 = vmatpush2.msra.mxu0 0.0
    %974 = vmatprep.subr.mxu0 0.0
    %975 = vmatpush2.msra.mxu0 0.0
    %976 = vmatprep.subr.mxu0 0.0
    %977 = vmatpush2.msra.mxu0 0.0
    %978 = vmatprep.subr.mxu0 0.0
    %979 = vmatpush2.msra.mxu0 0.0
    %980 = vmatprep.subr.mxu0 0.0
    %981 = vmatpush2.msra.mxu0 0.0
    %982 = vmatprep.subr.mxu0 0.0
    %983 = vmatpush2.msra.mxu0 0.0
    %984 = vmatprep.subr.mxu0 0.0
    %985 = vmatpush2.msra.mxu0 0.0
    %986 = vmatprep.subr.mxu0 0.0
    %987 = vmatpush2.msra.mxu0 0.0
    %988 = vmatprep.subr.mxu0 0.0
    %989 = vmatpush2.msra.mxu0 0.0
    %990 = vmatprep.subr.mxu0 0.0
    %991 = vmatpush2.msra.mxu0 0.0
    %992 = vmatprep.subr.mxu0 0.0
    %993 = vmatpush2.msra.mxu0 0.0
    %994 = vmatprep.mubr.f32.mxu0 0.0
    %995 = vmatmul.mubr.f32.gmra.mxu0 %v928
    %v996 = vpop.f32.mrf.mxu0
    %v997 = vadd.f32 %v229, %v996
    %v998 = vpop.f32.mrf.mxu0
    %999 = vdwg.mxu0
    %v1000 = vadd.f32 %v217, %v997
    %v1001 = vxor.u32 %v1000, 2147483648
    %v1002 = vmul.f32 %v1001, 1.442695
    %v1003 = vpow.pop %v1002
    %v1004 = vadd.f32 %v1003, 1.0
    %v1005 = vrcp.pop %v1004
    %v1006 = vmul.f32 1.0, %v1005
    %1008 = vrot.lane.b32.xlu0 %v997, 64
    %v1009 = vpop.permute.xlu0 %1008
    %v1011 = vmul.f32 %v1006, %v1009
    %1013 = vrot.lane.b32.xlu0 %v1011, 64
    %v1014 = vpop.permute.xlu0 %1013
    %v1016 = vadd.f32 %v217, %v1014
    %v1017 = vtanh.pop %v1016
    %1019 = vrot.lane.b32.xlu0 %v1017, 64
    %v1020 = vpop.permute.xlu0 %1019
    %v1022 = vsub.f32 %v926, %v1020
    %1024 = vrot.lane.b32.xlu0 %v1022, 32
    %v1025 = vpop.permute.xlu0 %1024
    %v1027 = vmul.f32 %v1006, %v1025
    %1029 = vrot.lane.b32.xlu0 %v1027, 32
    %v1030 = vpop.permute.xlu0 %1029
    %v1032 = vadd.f32 %v1017, %v1030
    %s1033 = scalar_lea.vmem %s1, 48
    %v1034 = vld [vmem:[%s1033] sm:$0xff]
    %1036 = vrot.lane.b32.xlu0 %v1032, 64
    %v1037 = vpop.permute.xlu0 %1036
    %v1039 = vmul.f32 %v1034, %v1037
    %s1040 = scalar_lea.vmem [#allocation2], 48
    %v1041 = vld [vmem:[%s1040] sm:$0xff]
    %v1042 = vmul.f32 %v1041, %v926
    %v1043 = vadd.f32 %v1039, %v1042
    %v1045 = vsel %vm95, %v1043, 0
    %1047 = vmatprep.subr.mxu0 0.0
    %1048 = vmatpush1.msra.mxu0 0.0
    %1049 = vmatprep.subr.mxu0 0.0
    %1050 = vmatpush1.msra.mxu0 0.0
    %1051 = vmatprep.subr.mxu0 0.0
    %1052 = vmatpush1.msra.mxu0 0.0
    %1053 = vmatprep.subr.mxu0 0.0
    %1054 = vmatpush1.msra.mxu0 0.0
    %1055 = vmatprep.subr.mxu0 0.0
    %1056 = vmatpush1.msra.mxu0 0.0
    %1057 = vmatprep.subr.mxu0 0.0
    %1058 = vmatpush1.msra.mxu0 0.0
    %1059 = vmatprep.subr.mxu0 0.0
    %1060 = vmatpush1.msra.mxu0 0.0
    %1061 = vmatprep.subr.mxu0 0.0
    %1062 = vmatpush1.msra.mxu0 0.0
    %1063 = vmatprep.subr.mxu0 0.0
    %1064 = vmatpush1.msra.mxu0 0.0
    %1065 = vmatprep.subr.mxu0 0.0
    %1066 = vmatpush1.msra.mxu0 0.0
    %1067 = vmatprep.subr.mxu0 0.0
    %1068 = vmatpush1.msra.mxu0 0.0
    %1069 = vmatprep.subr.mxu0 0.0
    %1070 = vmatpush1.msra.mxu0 0.0
    %1071 = vmatprep.subr.mxu0 0.0
    %1072 = vmatpush1.msra.mxu0 %v86
    %1073 = vmatprep.subr.mxu0 0.0
    %1074 = vmatpush1.msra.mxu0 %v85
    %1075 = vmatprep.subr.mxu0 0.0
    %1076 = vmatpush1.msra.mxu0 %v84
    %1077 = vmatprep.subr.mxu0 0.0
    %1078 = vmatpush1.msra.mxu0 %v83
    %1079 = vmatprep.subr.mxu0 0.0
    %1080 = vmatpush2.msra.mxu0 0.0
    %1081 = vmatprep.subr.mxu0 0.0
    %1082 = vmatpush2.msra.mxu0 0.0
    %1083 = vmatprep.subr.mxu0 0.0
    %1084 = vmatpush2.msra.mxu0 0.0
    %1085 = vmatprep.subr.mxu0 0.0
    %1086 = vmatpush2.msra.mxu0 0.0
    %1087 = vmatprep.subr.mxu0 0.0
    %1088 = vmatpush2.msra.mxu0 0.0
    %1089 = vmatprep.subr.mxu0 0.0
    %1090 = vmatpush2.msra.mxu0 0.0
    %1091 = vmatprep.subr.mxu0 0.0
    %1092 = vmatpush2.msra.mxu0 0.0
    %1093 = vmatprep.subr.mxu0 0.0
    %1094 = vmatpush2.msra.mxu0 0.0
    %1095 = vmatprep.subr.mxu0 0.0
    %1096 = vmatpush2.msra.mxu0 0.0
    %1097 = vmatprep.subr.mxu0 0.0
    %1098 = vmatpush2.msra.mxu0 0.0
    %1099 = vmatprep.subr.mxu0 0.0
    %1100 = vmatpush2.msra.mxu0 0.0
    %1101 = vmatprep.subr.mxu0 0.0
    %1102 = vmatpush2.msra.mxu0 0.0
    %1103 = vmatprep.subr.mxu0 0.0
    %1104 = vmatpush2.msra.mxu0 0.0
    %1105 = vmatprep.subr.mxu0 0.0
    %1106 = vmatpush2.msra.mxu0 0.0
    %1107 = vmatprep.subr.mxu0 0.0
    %1108 = vmatpush2.msra.mxu0 0.0
    %1109 = vmatprep.subr.mxu0 0.0
    %1110 = vmatpush2.msra.mxu0 0.0
    %1111 = vmatprep.mubr.f32.mxu0 0.0
    %1112 = vmatmul.mubr.f32.gmra.mxu0 %v1045
    %v1113 = vpop.f32.mrf.mxu0
    %v1114 = vadd.f32 %v229, %v1113
    %v1115 = vpop.f32.mrf.mxu0
    %1116 = vdwg.mxu0
    %v1117 = vadd.f32 %v222, %v1114
    %v1118 = vxor.u32 %v1117, 2147483648
    %v1119 = vmul.f32 %v1118, 1.442695
    %v1120 = vpow.pop %v1119
    %v1121 = vadd.f32 %v1120, 1.0
    %v1122 = vrcp.pop %v1121
    %v1123 = vmul.f32 1.0, %v1122
    %1125 = vrot.lane.b32.xlu0 %v1114, 64
    %v1126 = vpop.permute.xlu0 %1125
    %v1128 = vmul.f32 %v1123, %v1126
    %1130 = vrot.lane.b32.xlu0 %v1128, 64
    %v1131 = vpop.permute.xlu0 %1130
    %v1133 = vadd.f32 %v222, %v1131
    %v1134 = vtanh.pop %v1133
    %1136 = vrot.lane.b32.xlu0 %v1134, 64
    %v1137 = vpop.permute.xlu0 %1136
    %v1139 = vsub.f32 %v1043, %v1137
    %1141 = vrot.lane.b32.xlu0 %v1139, 32
    %v1142 = vpop.permute.xlu0 %1141
    %v1144 = vmul.f32 %v1123, %v1142
    %1146 = vrot.lane.b32.xlu0 %v1144, 32
    %v1147 = vpop.permute.xlu0 %1146
    %v1149 = vadd.f32 %v1134, %v1147
    %s1150 = scalar_lea.vmem %s1, 56
    %v1151 = vld [vmem:[%s1150] sm:$0xff]
    %1153 = vrot.lane.b32.xlu0 %v1149, 64
    %v1154 = vpop.permute.xlu0 %1153
    %v1156 = vmul.f32 %v1151, %v1154
    %s1157 = scalar_lea.vmem [#allocation2], 56
    %v1158 = vld [vmem:[%s1157] sm:$0xff]
    %v1159 = vmul.f32 %v1158, %v1043
    %v1160 = vadd.f32 %v1156, %v1159
    %1161 = vst.msk [vmem:[#allocation9] sm:$0xff] %vm95, %v1160
    %s1162 = scalar_lea.vmem [#allocation5], 32
    %v1163 = vld [vmem:[%s1162] sm:$0xff]
    %v1164 = vld [vmem:[%s1162 + $0x8] sm:$0xff]
    %v1165 = vld [vmem:[%s1162 + $0x10] sm:$0xff]
    %v1166 = vld [vmem:[%s1162 + $0x18] sm:$0xff]
    %s1167 = scalar_lea.vmem [#allocation7], 32
    %v1168 = vld [vmem:[%s1167] sm:$0xff]
    %v1169 = vld [vmem:[%s1167 + $0x8] sm:$0xff]
    %v1170 = vld [vmem:[%s1167 + $0x10] sm:$0xff]
    %v1171 = vld [vmem:[%s1167 + $0x18] sm:$0xff]
    %s1172 = scalar_lea.vmem %s5, 1
    %v1173 = vld [vmem:[%s1172] sm:$0x1]
    %s1174 = scalar_lea.vmem %s6, 1
    %v1175 = vld [vmem:[%s1174] sm:$0x1]
    %v1177 = vlaneseq
    %v1178 = vshrl.u32 %v1177, 7
    %v1179 = vsub.s32 0, %v1178
    %v1180 = vrot.slane %v1173, %v1179
    %v1183 = vsel %vm95, %v338, 0
    %v1186 = vsel %vm95, %v454, 0
    %v1189 = vsel %vm95, %v571, 0
    %v1192 = vsel %vm95, %v688, 0
    %v1195 = vsel %vm95, %v805, 0
    %v1198 = vsel %vm95, %v922, 0
    %v1201 = vsel %vm95, %v1039, 0
    %v1204 = vsel %vm95, %v1156, 0
    %1206 = vmatprep.subr.mxu0 0.0
    %1207 = vmatpush1.msra.mxu0 0.0
    %1208 = vmatprep.subr.mxu0 0.0
    %1209 = vmatpush1.msra.mxu0 0.0
    %1210 = vmatprep.subr.mxu0 0.0
    %1211 = vmatpush1.msra.mxu0 0.0
    %1212 = vmatprep.subr.mxu0 0.0
    %1213 = vmatpush1.msra.mxu0 0.0
    %1214 = vmatprep.subr.mxu0 0.0
    %1215 = vmatpush1.msra.mxu0 0.0
    %1216 = vmatprep.subr.mxu0 0.0
    %1217 = vmatpush1.msra.mxu0 0.0
    %1218 = vmatprep.subr.mxu0 0.0
    %1219 = vmatpush1.msra.mxu0 0.0
    %1220 = vmatprep.subr.mxu0 0.0
    %1221 = vmatpush1.msra.mxu0 0.0
    %1222 = vmatprep.subr.mxu0 0.0
    %1223 = vmatpush1.msra.mxu0 0.0
    %1224 = vmatprep.subr.mxu0 0.0
    %1225 = vmatpush1.msra.mxu0 0.0
    %1226 = vmatprep.subr.mxu0 0.0
    %1227 = vmatpush1.msra.mxu0 0.0
    %1228 = vmatprep.subr.mxu0 0.0
    %1229 = vmatpush1.msra.mxu0 0.0
    %1230 = vmatprep.subr.mxu0 0.0
    %1231 = vmatpush1.msra.mxu0 %v1166
    %1232 = vmatprep.subr.mxu0 0.0
    %1233 = vmatpush1.msra.mxu0 %v1165
    %1234 = vmatprep.subr.mxu0 0.0
    %1235 = vmatpush1.msra.mxu0 %v1164
    %1236 = vmatprep.subr.mxu0 0.0
    %1237 = vmatpush1.msra.mxu0 %v1163
    %1238 = vmatprep.subr.mxu0 0.0
    %1239 = vmatpush2.msra.mxu0 0.0
    %1240 = vmatprep.subr.mxu0 0.0
    %1241 = vmatpush2.msra.mxu0 0.0
    %1242 = vmatprep.subr.mxu0 0.0
    %1243 = vmatpush2.msra.mxu0 0.0
    %1244 = vmatprep.subr.mxu0 0.0
    %1245 = vmatpush2.msra.mxu0 0.0
    %1246 = vmatprep.subr.mxu0 0.0
    %1247 = vmatpush2.msra.mxu0 0.0
    %1248 = vmatprep.subr.mxu0 0.0
    %1249 = vmatpush2.msra.mxu0 0.0
    %1250 = vmatprep.subr.mxu0 0.0
    %1251 = vmatpush2.msra.mxu0 0.0
    %1252 = vmatprep.subr.mxu0 0.0
    %1253 = vmatpush2.msra.mxu0 0.0
    %1254 = vmatprep.subr.mxu0 0.0
    %1255 = vmatpush2.msra.mxu0 0.0
    %1256 = vmatprep.subr.mxu0 0.0
    %1257 = vmatpush2.msra.mxu0 0.0
    %1258 = vmatprep.subr.mxu0 0.0
    %1259 = vmatpush2.msra.mxu0 0.0
    %1260 = vmatprep.subr.mxu0 0.0
    %1261 = vmatpush2.msra.mxu0 0.0
    %1262 = vmatprep.subr.mxu0 0.0
    %1263 = vmatpush2.msra.mxu0 0.0
    %1264 = vmatprep.subr.mxu0 0.0
    %1265 = vmatpush2.msra.mxu0 0.0
    %1266 = vmatprep.subr.mxu0 0.0
    %1267 = vmatpush2.msra.mxu0 0.0
    %1268 = vmatprep.subr.mxu0 0.0
    %1269 = vmatpush2.msra.mxu0 0.0
    %1270 = vmatprep.mubr.f32.mxu0 0.0
    %1271 = vmatmul.mubr.f32.gmra.mxu0 %v1183
    %v1272 = vpop.f32.mrf.mxu0
    %v1273 = vadd.f32 %v1180, %v1272
    %v1274 = vpop.f32.mrf.mxu0
    %1275 = vmatprep.mubr.f32.mxu0 0.0
    %1276 = vmatmul.mubr.f32.gmra.mxu0 %v1186
    %v1277 = vpop.f32.mrf.mxu0
    %v1278 = vadd.f32 %v1180, %v1277
    %v1279 = vpop.f32.mrf.mxu0
    %1280 = vmatprep.mubr.f32.mxu0 0.0
    %1281 = vmatmul.mubr.f32.gmra.mxu0 %v1189
    %v1282 = vpop.f32.mrf.mxu0
    %v1283 = vadd.f32 %v1180, %v1282
    %v1284 = vpop.f32.mrf.mxu0
    %1285 = vmatprep.mubr.f32.mxu0 0.0
    %1286 = vmatmul.mubr.f32.gmra.mxu0 %v1192
    %v1287 = vpop.f32.mrf.mxu0
    %v1288 = vadd.f32 %v1180, %v1287
    %v1289 = vpop.f32.mrf.mxu0
    %1290 = vmatprep.mubr.f32.mxu0 0.0
    %1291 = vmatmul.mubr.f32.gmra.mxu0 %v1195
    %v1292 = vpop.f32.mrf.mxu0
    %v1293 = vadd.f32 %v1180, %v1292
    %v1294 = vpop.f32.mrf.mxu0
    %1295 = vmatprep.mubr.f32.mxu0 0.0
    %1296 = vmatmul.mubr.f32.gmra.mxu0 %v1198
    %v1297 = vpop.f32.mrf.mxu0
    %v1298 = vadd.f32 %v1180, %v1297
    %v1299 = vpop.f32.mrf.mxu0
    %1300 = vmatprep.mubr.f32.mxu0 0.0
    %1301 = vmatmul.mubr.f32.gmra.mxu0 %v1201
    %v1302 = vpop.f32.mrf.mxu0
    %v1303 = vadd.f32 %v1180, %v1302
    %v1304 = vpop.f32.mrf.mxu0
    %1305 = vmatprep.mubr.f32.mxu0 0.0
    %1306 = vmatmul.mubr.f32.gmra.mxu0 %v1204
    %v1307 = vpop.f32.mrf.mxu0
    %v1308 = vadd.f32 %v1180, %v1307
    %v1309 = vpop.f32.mrf.mxu0
    %1310 = vdwg.mxu0
    %v1312 = vlaneseq
    %v1313 = vshrl.u32 %v1312, 7
    %v1314 = vsub.s32 0, %v1313
    %v1315 = vrot.slane %v1175, %v1314
    %1317 = vmatprep.subr.mxu0 0.0
    %1318 = vmatpush1.msra.mxu0 0.0
    %1319 = vmatprep.subr.mxu0 0.0
    %1320 = vmatpush1.msra.mxu0 0.0
    %1321 = vmatprep.subr.mxu0 0.0
    %1322 = vmatpush1.msra.mxu0 0.0
    %1323 = vmatprep.subr.mxu0 0.0
    %1324 = vmatpush1.msra.mxu0 0.0
    %1325 = vmatprep.subr.mxu0 0.0
    %1326 = vmatpush1.msra.mxu0 0.0
    %1327 = vmatprep.subr.mxu0 0.0
    %1328 = vmatpush1.msra.mxu0 0.0
    %1329 = vmatprep.subr.mxu0 0.0
    %1330 = vmatpush1.msra.mxu0 0.0
    %1331 = vmatprep.subr.mxu0 0.0
    %1332 = vmatpush1.msra.mxu0 0.0
    %1333 = vmatprep.subr.mxu0 0.0
    %1334 = vmatpush1.msra.mxu0 0.0
    %1335 = vmatprep.subr.mxu0 0.0
    %1336 = vmatpush1.msra.mxu0 0.0
    %1337 = vmatprep.subr.mxu0 0.0
    %1338 = vmatpush1.msra.mxu0 0.0
    %1339 = vmatprep.subr.mxu0 0.0
    %1340 = vmatpush1.msra.mxu0 0.0
    %1341 = vmatprep.subr.mxu0 0.0
    %1342 = vmatpush1.msra.mxu0 %v1171
    %1343 = vmatprep.subr.mxu0 0.0
    %1344 = vmatpush1.msra.mxu0 %v1170
    %1345 = vmatprep.subr.mxu0 0.0
    %1346 = vmatpush1.msra.mxu0 %v1169
    %1347 = vmatprep.subr.mxu0 0.0
    %1348 = vmatpush1.msra.mxu0 %v1168
    %1349 = vmatprep.subr.mxu0 0.0
    %1350 = vmatpush2.msra.mxu0 0.0
    %1351 = vmatprep.subr.mxu0 0.0
    %1352 = vmatpush2.msra.mxu0 0.0
    %1353 = vmatprep.subr.mxu0 0.0
    %1354 = vmatpush2.msra.mxu0 0.0
    %1355 = vmatprep.subr.mxu0 0.0
    %1356 = vmatpush2.msra.mxu0 0.0
    %1357 = vmatprep.subr.mxu0 0.0
    %1358 = vmatpush2.msra.mxu0 0.0
    %1359 = vmatprep.subr.mxu0 0.0
    %1360 = vmatpush2.msra.mxu0 0.0
    %1361 = vmatprep.subr.mxu0 0.0
    %1362 = vmatpush2.msra.mxu0 0.0
    %1363 = vmatprep.subr.mxu0 0.0
    %1364 = vmatpush2.msra.mxu0 0.0
    %1365 = vmatprep.subr.mxu0 0.0
    %1366 = vmatpush2.msra.mxu0 0.0
    %1367 = vmatprep.subr.mxu0 0.0
    %1368 = vmatpush2.msra.mxu0 0.0
    %1369 = vmatprep.subr.mxu0 0.0
    %1370 = vmatpush2.msra.mxu0 0.0
    %1371 = vmatprep.subr.mxu0 0.0
    %1372 = vmatpush2.msra.mxu0 0.0
    %1373 = vmatprep.subr.mxu0 0.0
    %1374 = vmatpush2.msra.mxu0 0.0
    %1375 = vmatprep.subr.mxu0 0.0
    %1376 = vmatpush2.msra.mxu0 0.0
    %1377 = vmatprep.subr.mxu0 0.0
    %1378 = vmatpush2.msra.mxu0 0.0
    %1379 = vmatprep.subr.mxu0 0.0
    %1380 = vmatpush2.msra.mxu0 0.0
    %1381 = vmatprep.mubr.f32.mxu0 0.0
    %1382 = vmatmul.mubr.f32.gmra.mxu0 %v232
    %v1383 = vpop.f32.mrf.mxu0
    %v1384 = vadd.f32 %v1315, %v1383
    %v1385 = vpop.f32.mrf.mxu0
    %1386 = vdwg.mxu0
    %v1387 = vadd.f32 %v1273, %v1384
    %v1388 = vxor.u32 %v1387, 2147483648
    %v1389 = vmul.f32 %v1388, 1.442695
    %v1390 = vpow.pop %v1389
    %v1391 = vadd.f32 %v1390, 1.0
    %v1392 = vrcp.pop %v1391
    %v1393 = vmul.f32 1.0, %v1392
    %1395 = vrot.lane.b32.xlu0 %v1384, 64
    %v1396 = vpop.permute.xlu0 %1395
    %v1398 = vmul.f32 %v1393, %v1396
    %1400 = vrot.lane.b32.xlu0 %v1398, 64
    %v1401 = vpop.permute.xlu0 %1400
    %v1403 = vadd.f32 %v1273, %v1401
    %v1404 = vtanh.pop %v1403
    %v1405 = vsub.f32 0.0, %v1404
    %1407 = vrot.lane.b32.xlu0 %v1405, 96
    %v1408 = vpop.permute.xlu0 %1407
    %v1410 = vmul.f32 %v1393, %v1408
    %1412 = vrot.lane.b32.xlu0 %v1410, 32
    %v1413 = vpop.permute.xlu0 %1412
    %v1415 = vadd.f32 %v1404, %v1413
    %v1416 = vld [vmem:[%s1] sm:$0xff]
    %1418 = vrot.lane.b32.xlu0 %v1415, 64
    %v1419 = vpop.permute.xlu0 %1418
    %v1421 = vmul.f32 %v1416, %v1419
    %v1422 = vld [vmem:[#allocation2] sm:$0xff]
    %v1423 = vmul.f32 %v1422, 0.0
    %v1424 = vadd.f32 %v1421, %v1423
    %v1426 = vsel %vm95, %v1424, 0
    %1428 = vmatprep.subr.mxu0 0.0
    %1429 = vmatpush1.msra.mxu0 0.0
    %1430 = vmatprep.subr.mxu0 0.0
    %1431 = vmatpush1.msra.mxu0 0.0
    %1432 = vmatprep.subr.mxu0 0.0
    %1433 = vmatpush1.msra.mxu0 0.0
    %1434 = vmatprep.subr.mxu0 0.0
    %1435 = vmatpush1.msra.mxu0 0.0
    %1436 = vmatprep.subr.mxu0 0.0
    %1437 = vmatpush1.msra.mxu0 0.0
    %1438 = vmatprep.subr.mxu0 0.0
    %1439 = vmatpush1.msra.mxu0 0.0
    %1440 = vmatprep.subr.mxu0 0.0
    %1441 = vmatpush1.msra.mxu0 0.0
    %1442 = vmatprep.subr.mxu0 0.0
    %1443 = vmatpush1.msra.mxu0 0.0
    %1444 = vmatprep.subr.mxu0 0.0
    %1445 = vmatpush1.msra.mxu0 0.0
    %1446 = vmatprep.subr.mxu0 0.0
    %1447 = vmatpush1.msra.mxu0 0.0
    %1448 = vmatprep.subr.mxu0 0.0
    %1449 = vmatpush1.msra.mxu0 0.0
    %1450 = vmatprep.subr.mxu0 0.0
    %1451 = vmatpush1.msra.mxu0 0.0
    %1452 = vmatprep.subr.mxu0 0.0
    %1453 = vmatpush1.msra.mxu0 %v1171
    %1454 = vmatprep.subr.mxu0 0.0
    %1455 = vmatpush1.msra.mxu0 %v1170
    %1456 = vmatprep.subr.mxu0 0.0
    %1457 = vmatpush1.msra.mxu0 %v1169
    %1458 = vmatprep.subr.mxu0 0.0
    %1459 = vmatpush1.msra.mxu0 %v1168
    %1460 = vmatprep.subr.mxu0 0.0
    %1461 = vmatpush2.msra.mxu0 0.0
    %1462 = vmatprep.subr.mxu0 0.0
    %1463 = vmatpush2.msra.mxu0 0.0
    %1464 = vmatprep.subr.mxu0 0.0
    %1465 = vmatpush2.msra.mxu0 0.0
    %1466 = vmatprep.subr.mxu0 0.0
    %1467 = vmatpush2.msra.mxu0 0.0
    %1468 = vmatprep.subr.mxu0 0.0
    %1469 = vmatpush2.msra.mxu0 0.0
    %1470 = vmatprep.subr.mxu0 0.0
    %1471 = vmatpush2.msra.mxu0 0.0
    %1472 = vmatprep.subr.mxu0 0.0
    %1473 = vmatpush2.msra.mxu0 0.0
    %1474 = vmatprep.subr.mxu0 0.0
    %1475 = vmatpush2.msra.mxu0 0.0
    %1476 = vmatprep.subr.mxu0 0.0
    %1477 = vmatpush2.msra.mxu0 0.0
    %1478 = vmatprep.subr.mxu0 0.0
    %1479 = vmatpush2.msra.mxu0 0.0
    %1480 = vmatprep.subr.mxu0 0.0
    %1481 = vmatpush2.msra.mxu0 0.0
    %1482 = vmatprep.subr.mxu0 0.0
    %1483 = vmatpush2.msra.mxu0 0.0
    %1484 = vmatprep.subr.mxu0 0.0
    %1485 = vmatpush2.msra.mxu0 0.0
    %1486 = vmatprep.subr.mxu0 0.0
    %1487 = vmatpush2.msra.mxu0 0.0
    %1488 = vmatprep.subr.mxu0 0.0
    %1489 = vmatpush2.msra.mxu0 0.0
    %1490 = vmatprep.subr.mxu0 0.0
    %1491 = vmatpush2.msra.mxu0 0.0
    %1492 = vmatprep.mubr.f32.mxu0 0.0
    %1493 = vmatmul.mubr.f32.gmra.mxu0 %v1426
    %v1494 = vpop.f32.mrf.mxu0
    %v1495 = vadd.f32 %v1315, %v1494
    %v1496 = vpop.f32.mrf.mxu0
    %1497 = vdwg.mxu0
    %v1498 = vadd.f32 %v1278, %v1495
    %v1499 = vxor.u32 %v1498, 2147483648
    %v1500 = vmul.f32 %v1499, 1.442695
    %v1501 = vpow.pop %v1500
    %v1502 = vadd.f32 %v1501, 1.0
    %v1503 = vrcp.pop %v1502
    %v1504 = vmul.f32 1.0, %v1503
    %1506 = vrot.lane.b32.xlu0 %v1495, 64
    %v1507 = vpop.permute.xlu0 %1506
    %v1509 = vmul.f32 %v1504, %v1507
    %1511 = vrot.lane.b32.xlu0 %v1509, 64
    %v1512 = vpop.permute.xlu0 %1511
    %v1514 = vadd.f32 %v1278, %v1512
    %v1515 = vtanh.pop %v1514
    %1517 = vrot.lane.b32.xlu0 %v1515, 64
    %v1518 = vpop.permute.xlu0 %1517
    %v1520 = vsub.f32 %v1424, %v1518
    %1522 = vrot.lane.b32.xlu0 %v1520, 32
    %v1523 = vpop.permute.xlu0 %1522
    %v1525 = vmul.f32 %v1504, %v1523
    %1527 = vrot.lane.b32.xlu0 %v1525, 32
    %v1528 = vpop.permute.xlu0 %1527
    %v1530 = vadd.f32 %v1515, %v1528
    %v1531 = vld [vmem:[%s448] sm:$0xff]
    %1533 = vrot.lane.b32.xlu0 %v1530, 64
    %v1534 = vpop.permute.xlu0 %1533
    %v1536 = vmul.f32 %v1531, %v1534
    %v1537 = vld [vmem:[%s455] sm:$0xff]
    %v1538 = vmul.f32 %v1537, %v1424
    %v1539 = vadd.f32 %v1536, %v1538
    %v1541 = vsel %vm95, %v1539, 0
    %1543 = vmatprep.subr.mxu0 0.0
    %1544 = vmatpush1.msra.mxu0 0.0
    %1545 = vmatprep.subr.mxu0 0.0
    %1546 = vmatpush1.msra.mxu0 0.0
    %1547 = vmatprep.subr.mxu0 0.0
    %1548 = vmatpush1.msra.mxu0 0.0
    %1549 = vmatprep.subr.mxu0 0.0
    %1550 = vmatpush1.msra.mxu0 0.0
    %1551 = vmatprep.subr.mxu0 0.0
    %1552 = vmatpush1.msra.mxu0 0.0
    %1553 = vmatprep.subr.mxu0 0.0
    %1554 = vmatpush1.msra.mxu0 0.0
    %1555 = vmatprep.subr.mxu0 0.0
    %1556 = vmatpush1.msra.mxu0 0.0
    %1557 = vmatprep.subr.mxu0 0.0
    %1558 = vmatpush1.msra.mxu0 0.0
    %1559 = vmatprep.subr.mxu0 0.0
    %1560 = vmatpush1.msra.mxu0 0.0
    %1561 = vmatprep.subr.mxu0 0.0
    %1562 = vmatpush1.msra.mxu0 0.0
    %1563 = vmatprep.subr.mxu0 0.0
    %1564 = vmatpush1.msra.mxu0 0.0
    %1565 = vmatprep.subr.mxu0 0.0
    %1566 = vmatpush1.msra.mxu0 0.0
    %1567 = vmatprep.subr.mxu0 0.0
    %1568 = vmatpush1.msra.mxu0 %v1171
    %1569 = vmatprep.subr.mxu0 0.0
    %1570 = vmatpush1.msra.mxu0 %v1170
    %1571 = vmatprep.subr.mxu0 0.0
    %1572 = vmatpush1.msra.mxu0 %v1169
    %1573 = vmatprep.subr.mxu0 0.0
    %1574 = vmatpush1.msra.mxu0 %v1168
    %1575 = vmatprep.subr.mxu0 0.0
    %1576 = vmatpush2.msra.mxu0 0.0
    %1577 = vmatprep.subr.mxu0 0.0
    %1578 = vmatpush2.msra.mxu0 0.0
    %1579 = vmatprep.subr.mxu0 0.0
    %1580 = vmatpush2.msra.mxu0 0.0
    %1581 = vmatprep.subr.mxu0 0.0
    %1582 = vmatpush2.msra.mxu0 0.0
    %1583 = vmatprep.subr.mxu0 0.0
    %1584 = vmatpush2.msra.mxu0 0.0
    %1585 = vmatprep.subr.mxu0 0.0
    %1586 = vmatpush2.msra.mxu0 0.0
    %1587 = vmatprep.subr.mxu0 0.0
    %1588 = vmatpush2.msra.mxu0 0.0
    %1589 = vmatprep.subr.mxu0 0.0
    %1590 = vmatpush2.msra.mxu0 0.0
    %1591 = vmatprep.subr.mxu0 0.0
    %1592 = vmatpush2.msra.mxu0 0.0
    %1593 = vmatprep.subr.mxu0 0.0
    %1594 = vmatpush2.msra.mxu0 0.0
    %1595 = vmatprep.subr.mxu0 0.0
    %1596 = vmatpush2.msra.mxu0 0.0
    %1597 = vmatprep.subr.mxu0 0.0
    %1598 = vmatpush2.msra.mxu0 0.0
    %1599 = vmatprep.subr.mxu0 0.0
    %1600 = vmatpush2.msra.mxu0 0.0
    %1601 = vmatprep.subr.mxu0 0.0
    %1602 = vmatpush2.msra.mxu0 0.0
    %1603 = vmatprep.subr.mxu0 0.0
    %1604 = vmatpush2.msra.mxu0 0.0
    %1605 = vmatprep.subr.mxu0 0.0
    %1606 = vmatpush2.msra.mxu0 0.0
    %1607 = vmatprep.mubr.f32.mxu0 0.0
    %1608 = vmatmul.mubr.f32.gmra.mxu0 %v1541
    %v1609 = vpop.f32.mrf.mxu0
    %v1610 = vadd.f32 %v1315, %v1609
    %v1611 = vpop.f32.mrf.mxu0
    %1612 = vdwg.mxu0
    %v1613 = vadd.f32 %v1283, %v1610
    %v1614 = vxor.u32 %v1613, 2147483648
    %v1615 = vmul.f32 %v1614, 1.442695
    %v1616 = vpow.pop %v1615
    %v1617 = vadd.f32 %v1616, 1.0
    %v1618 = vrcp.pop %v1617
    %v1619 = vmul.f32 1.0, %v1618
    %1621 = vrot.lane.b32.xlu0 %v1610, 64
    %v1622 = vpop.permute.xlu0 %1621
    %v1624 = vmul.f32 %v1619, %v1622
    %1626 = vrot.lane.b32.xlu0 %v1624, 64
    %v1627 = vpop.permute.xlu0 %1626
    %v1629 = vadd.f32 %v1283, %v1627
    %v1630 = vtanh.pop %v1629
    %1632 = vrot.lane.b32.xlu0 %v1630, 64
    %v1633 = vpop.permute.xlu0 %1632
    %v1635 = vsub.f32 %v1539, %v1633
    %1637 = vrot.lane.b32.xlu0 %v1635, 32
    %v1638 = vpop.permute.xlu0 %1637
    %v1640 = vmul.f32 %v1619, %v1638
    %1642 = vrot.lane.b32.xlu0 %v1640, 32
    %v1643 = vpop.permute.xlu0 %1642
    %v1645 = vadd.f32 %v1630, %v1643
    %v1646 = vld [vmem:[%s565] sm:$0xff]
    %1648 = vrot.lane.b32.xlu0 %v1645, 64
    %v1649 = vpop.permute.xlu0 %1648
    %v1651 = vmul.f32 %v1646, %v1649
    %v1652 = vld [vmem:[%s572] sm:$0xff]
    %v1653 = vmul.f32 %v1652, %v1539
    %v1654 = vadd.f32 %v1651, %v1653
    %v1656 = vsel %vm95, %v1654, 0
    %1658 = vmatprep.subr.mxu0 0.0
    %1659 = vmatpush1.msra.mxu0 0.0
    %1660 = vmatprep.subr.mxu0 0.0
    %1661 = vmatpush1.msra.mxu0 0.0
    %1662 = vmatprep.subr.mxu0 0.0
    %1663 = vmatpush1.msra.mxu0 0.0
    %1664 = vmatprep.subr.mxu0 0.0
    %1665 = vmatpush1.msra.mxu0 0.0
    %1666 = vmatprep.subr.mxu0 0.0
    %1667 = vmatpush1.msra.mxu0 0.0
    %1668 = vmatprep.subr.mxu0 0.0
    %1669 = vmatpush1.msra.mxu0 0.0
    %1670 = vmatprep.subr.mxu0 0.0
    %1671 = vmatpush1.msra.mxu0 0.0
    %1672 = vmatprep.subr.mxu0 0.0
    %1673 = vmatpush1.msra.mxu0 0.0
    %1674 = vmatprep.subr.mxu0 0.0
    %1675 = vmatpush1.msra.mxu0 0.0
    %1676 = vmatprep.subr.mxu0 0.0
    %1677 = vmatpush1.msra.mxu0 0.0
    %1678 = vmatprep.subr.mxu0 0.0
    %1679 = vmatpush1.msra.mxu0 0.0
    %1680 = vmatprep.subr.mxu0 0.0
    %1681 = vmatpush1.msra.mxu0 0.0
    %1682 = vmatprep.subr.mxu0 0.0
    %1683 = vmatpush1.msra.mxu0 %v1171
    %1684 = vmatprep.subr.mxu0 0.0
    %1685 = vmatpush1.msra.mxu0 %v1170
    %1686 = vmatprep.subr.mxu0 0.0
    %1687 = vmatpush1.msra.mxu0 %v1169
    %1688 = vmatprep.subr.mxu0 0.0
    %1689 = vmatpush1.msra.mxu0 %v1168
    %1690 = vmatprep.subr.mxu0 0.0
    %1691 = vmatpush2.msra.mxu0 0.0
    %1692 = vmatprep.subr.mxu0 0.0
    %1693 = vmatpush2.msra.mxu0 0.0
    %1694 = vmatprep.subr.mxu0 0.0
    %1695 = vmatpush2.msra.mxu0 0.0
    %1696 = vmatprep.subr.mxu0 0.0
    %1697 = vmatpush2.msra.mxu0 0.0
    %1698 = vmatprep.subr.mxu0 0.0
    %1699 = vmatpush2.msra.mxu0 0.0
    %1700 = vmatprep.subr.mxu0 0.0
    %1701 = vmatpush2.msra.mxu0 0.0
    %1702 = vmatprep.subr.mxu0 0.0
    %1703 = vmatpush2.msra.mxu0 0.0
    %1704 = vmatprep.subr.mxu0 0.0
    %1705 = vmatpush2.msra.mxu0 0.0
    %1706 = vmatprep.subr.mxu0 0.0
    %1707 = vmatpush2.msra.mxu0 0.0
    %1708 = vmatprep.subr.mxu0 0.0
    %1709 = vmatpush2.msra.mxu0 0.0
    %1710 = vmatprep.subr.mxu0 0.0
    %1711 = vmatpush2.msra.mxu0 0.0
    %1712 = vmatprep.subr.mxu0 0.0
    %1713 = vmatpush2.msra.mxu0 0.0
    %1714 = vmatprep.subr.mxu0 0.0
    %1715 = vmatpush2.msra.mxu0 0.0
    %1716 = vmatprep.subr.mxu0 0.0
    %1717 = vmatpush2.msra.mxu0 0.0
    %1718 = vmatprep.subr.mxu0 0.0
    %1719 = vmatpush2.msra.mxu0 0.0
    %1720 = vmatprep.subr.mxu0 0.0
    %1721 = vmatpush2.msra.mxu0 0.0
    %1722 = vmatprep.mubr.f32.mxu0 0.0
    %1723 = vmatmul.mubr.f32.gmra.mxu0 %v1656
    %v1724 = vpop.f32.mrf.mxu0
    %v1725 = vadd.f32 %v1315, %v1724
    %v1726 = vpop.f32.mrf.mxu0
    %1727 = vdwg.mxu0
    %v1728 = vadd.f32 %v1288, %v1725
    %v1729 = vxor.u32 %v1728, 2147483648
    %v1730 = vmul.f32 %v1729, 1.442695
    %v1731 = vpow.pop %v1730
    %v1732 = vadd.f32 %v1731, 1.0
    %v1733 = vrcp.pop %v1732
    %v1734 = vmul.f32 1.0, %v1733
    %1736 = vrot.lane.b32.xlu0 %v1725, 64
    %v1737 = vpop.permute.xlu0 %1736
    %v1739 = vmul.f32 %v1734, %v1737
    %1741 = vrot.lane.b32.xlu0 %v1739, 64
    %v1742 = vpop.permute.xlu0 %1741
    %v1744 = vadd.f32 %v1288, %v1742
    %v1745 = vtanh.pop %v1744
    %1747 = vrot.lane.b32.xlu0 %v1745, 64
    %v1748 = vpop.permute.xlu0 %1747
    %v1750 = vsub.f32 %v1654, %v1748
    %1752 = vrot.lane.b32.xlu0 %v1750, 32
    %v1753 = vpop.permute.xlu0 %1752
    %v1755 = vmul.f32 %v1734, %v1753
    %1757 = vrot.lane.b32.xlu0 %v1755, 32
    %v1758 = vpop.permute.xlu0 %1757
    %v1760 = vadd.f32 %v1745, %v1758
    %v1761 = vld [vmem:[%s682] sm:$0xff]
    %1763 = vrot.lane.b32.xlu0 %v1760, 64
    %v1764 = vpop.permute.xlu0 %1763
    %v1766 = vmul.f32 %v1761, %v1764
    %v1767 = vld [vmem:[%s689] sm:$0xff]
    %v1768 = vmul.f32 %v1767, %v1654
    %v1769 = vadd.f32 %v1766, %v1768
    %v1771 = vsel %vm95, %v1769, 0
    %1773 = vmatprep.subr.mxu0 0.0
    %1774 = vmatpush1.msra.mxu0 0.0
    %1775 = vmatprep.subr.mxu0 0.0
    %1776 = vmatpush1.msra.mxu0 0.0
    %1777 = vmatprep.subr.mxu0 0.0
    %1778 = vmatpush1.msra.mxu0 0.0
    %1779 = vmatprep.subr.mxu0 0.0
    %1780 = vmatpush1.msra.mxu0 0.0
    %1781 = vmatprep.subr.mxu0 0.0
    %1782 = vmatpush1.msra.mxu0 0.0
    %1783 = vmatprep.subr.mxu0 0.0
    %1784 = vmatpush1.msra.mxu0 0.0
    %1785 = vmatprep.subr.mxu0 0.0
    %1786 = vmatpush1.msra.mxu0 0.0
    %1787 = vmatprep.subr.mxu0 0.0
    %1788 = vmatpush1.msra.mxu0 0.0
    %1789 = vmatprep.subr.mxu0 0.0
    %1790 = vmatpush1.msra.mxu0 0.0
    %1791 = vmatprep.subr.mxu0 0.0
    %1792 = vmatpush1.msra.mxu0 0.0
    %1793 = vmatprep.subr.mxu0 0.0
    %1794 = vmatpush1.msra.mxu0 0.0
    %1795 = vmatprep.subr.mxu0 0.0
    %1796 = vmatpush1.msra.mxu0 0.0
    %1797 = vmatprep.subr.mxu0 0.0
    %1798 = vmatpush1.msra.mxu0 %v1171
    %1799 = vmatprep.subr.mxu0 0.0
    %1800 = vmatpush1.msra.mxu0 %v1170
    %1801 = vmatprep.subr.mxu0 0.0
    %1802 = vmatpush1.msra.mxu0 %v1169
    %1803 = vmatprep.subr.mxu0 0.0
    %1804 = vmatpush1.msra.mxu0 %v1168
    %1805 = vmatprep.subr.mxu0 0.0
    %1806 = vmatpush2.msra.mxu0 0.0
    %1807 = vmatprep.subr.mxu0 0.0
    %1808 = vmatpush2.msra.mxu0 0.0
    %1809 = vmatprep.subr.mxu0 0.0
    %1810 = vmatpush2.msra.mxu0 0.0
    %1811 = vmatprep.subr.mxu0 0.0
    %1812 = vmatpush2.msra.mxu0 0.0
    %1813 = vmatprep.subr.mxu0 0.0
    %1814 = vmatpush2.msra.mxu0 0.0
    %1815 = vmatprep.subr.mxu0 0.0
    %1816 = vmatpush2.msra.mxu0 0.0
    %1817 = vmatprep.subr.mxu0 0.0
    %1818 = vmatpush2.msra.mxu0 0.0
    %1819 = vmatprep.subr.mxu0 0.0
    %1820 = vmatpush2.msra.mxu0 0.0
    %1821 = vmatprep.subr.mxu0 0.0
    %1822 = vmatpush2.msra.mxu0 0.0
    %1823 = vmatprep.subr.mxu0 0.0
    %1824 = vmatpush2.msra.mxu0 0.0
    %1825 = vmatprep.subr.mxu0 0.0
    %1826 = vmatpush2.msra.mxu0 0.0
    %1827 = vmatprep.subr.mxu0 0.0
    %1828 = vmatpush2.msra.mxu0 0.0
    %1829 = vmatprep.subr.mxu0 0.0
    %1830 = vmatpush2.msra.mxu0 0.0
    %1831 = vmatprep.subr.mxu0 0.0
    %1832 = vmatpush2.msra.mxu0 0.0
    %1833 = vmatprep.subr.mxu0 0.0
    %1834 = vmatpush2.msra.mxu0 0.0
    %1835 = vmatprep.subr.mxu0 0.0
    %1836 = vmatpush2.msra.mxu0 0.0
    %1837 = vmatprep.mubr.f32.mxu0 0.0
    %1838 = vmatmul.mubr.f32.gmra.mxu0 %v1771
    %v1839 = vpop.f32.mrf.mxu0
    %v1840 = vadd.f32 %v1315, %v1839
    %v1841 = vpop.f32.mrf.mxu0
    %1842 = vdwg.mxu0
    %v1843 = vadd.f32 %v1293, %v1840
    %v1844 = vxor.u32 %v1843, 2147483648
    %v1845 = vmul.f32 %v1844, 1.442695
    %v1846 = vpow.pop %v1845
    %v1847 = vadd.f32 %v1846, 1.0
    %v1848 = vrcp.pop %v1847
    %v1849 = vmul.f32 1.0, %v1848
    %1851 = vrot.lane.b32.xlu0 %v1840, 64
    %v1852 = vpop.permute.xlu0 %1851
    %v1854 = vmul.f32 %v1849, %v1852
    %1856 = vrot.lane.b32.xlu0 %v1854, 64
    %v1857 = vpop.permute.xlu0 %1856
    %v1859 = vadd.f32 %v1293, %v1857
    %v1860 = vtanh.pop %v1859
    %1862 = vrot.lane.b32.xlu0 %v1860, 64
    %v1863 = vpop.permute.xlu0 %1862
    %v1865 = vsub.f32 %v1769, %v1863
    %1867 = vrot.lane.b32.xlu0 %v1865, 32
    %v1868 = vpop.permute.xlu0 %1867
    %v1870 = vmul.f32 %v1849, %v1868
    %1872 = vrot.lane.b32.xlu0 %v1870, 32
    %v1873 = vpop.permute.xlu0 %1872
    %v1875 = vadd.f32 %v1860, %v1873
    %v1876 = vld [vmem:[%s799] sm:$0xff]
    %1878 = vrot.lane.b32.xlu0 %v1875, 64
    %v1879 = vpop.permute.xlu0 %1878
    %v1881 = vmul.f32 %v1876, %v1879
    %v1882 = vld [vmem:[%s806] sm:$0xff]
    %v1883 = vmul.f32 %v1882, %v1769
    %v1884 = vadd.f32 %v1881, %v1883
    %v1886 = vsel %vm95, %v1884, 0
    %1888 = vmatprep.subr.mxu0 0.0
    %1889 = vmatpush1.msra.mxu0 0.0
    %1890 = vmatprep.subr.mxu0 0.0
    %1891 = vmatpush1.msra.mxu0 0.0
    %1892 = vmatprep.subr.mxu0 0.0
    %1893 = vmatpush1.msra.mxu0 0.0
    %1894 = vmatprep.subr.mxu0 0.0
    %1895 = vmatpush1.msra.mxu0 0.0
    %1896 = vmatprep.subr.mxu0 0.0
    %1897 = vmatpush1.msra.mxu0 0.0
    %1898 = vmatprep.subr.mxu0 0.0
    %1899 = vmatpush1.msra.mxu0 0.0
    %1900 = vmatprep.subr.mxu0 0.0
    %1901 = vmatpush1.msra.mxu0 0.0
    %1902 = vmatprep.subr.mxu0 0.0
    %1903 = vmatpush1.msra.mxu0 0.0
    %1904 = vmatprep.subr.mxu0 0.0
    %1905 = vmatpush1.msra.mxu0 0.0
    %1906 = vmatprep.subr.mxu0 0.0
    %1907 = vmatpush1.msra.mxu0 0.0
    %1908 = vmatprep.subr.mxu0 0.0
    %1909 = vmatpush1.msra.mxu0 0.0
    %1910 = vmatprep.subr.mxu0 0.0
    %1911 = vmatpush1.msra.mxu0 0.0
    %1912 = vmatprep.subr.mxu0 0.0
    %1913 = vmatpush1.msra.mxu0 %v1171
    %1914 = vmatprep.subr.mxu0 0.0
    %1915 = vmatpush1.msra.mxu0 %v1170
    %1916 = vmatprep.subr.mxu0 0.0
    %1917 = vmatpush1.msra.mxu0 %v1169
    %1918 = vmatprep.subr.mxu0 0.0
    %1919 = vmatpush1.msra.mxu0 %v1168
    %1920 = vmatprep.subr.mxu0 0.0
    %1921 = vmatpush2.msra.mxu0 0.0
    %1922 = vmatprep.subr.mxu0 0.0
    %1923 = vmatpush2.msra.mxu0 0.0
    %1924 = vmatprep.subr.mxu0 0.0
    %1925 = vmatpush2.msra.mxu0 0.0
    %1926 = vmatprep.subr.mxu0 0.0
    %1927 = vmatpush2.msra.mxu0 0.0
    %1928 = vmatprep.subr.mxu0 0.0
    %1929 = vmatpush2.msra.mxu0 0.0
    %1930 = vmatprep.subr.mxu0 0.0
    %1931 = vmatpush2.msra.mxu0 0.0
    %1932 = vmatprep.subr.mxu0 0.0
    %1933 = vmatpush2.msra.mxu0 0.0
    %1934 = vmatprep.subr.mxu0 0.0
    %1935 = vmatpush2.msra.mxu0 0.0
    %1936 = vmatprep.subr.mxu0 0.0
    %1937 = vmatpush2.msra.mxu0 0.0
    %1938 = vmatprep.subr.mxu0 0.0
    %1939 = vmatpush2.msra.mxu0 0.0
    %1940 = vmatprep.subr.mxu0 0.0
    %1941 = vmatpush2.msra.mxu0 0.0
    %1942 = vmatprep.subr.mxu0 0.0
    %1943 = vmatpush2.msra.mxu0 0.0
    %1944 = vmatprep.subr.mxu0 0.0
    %1945 = vmatpush2.msra.mxu0 0.0
    %1946 = vmatprep.subr.mxu0 0.0
    %1947 = vmatpush2.msra.mxu0 0.0
    %1948 = vmatprep.subr.mxu0 0.0
    %1949 = vmatpush2.msra.mxu0 0.0
    %1950 = vmatprep.subr.mxu0 0.0
    %1951 = vmatpush2.msra.mxu0 0.0
    %1952 = vmatprep.mubr.f32.mxu0 0.0
    %1953 = vmatmul.mubr.f32.gmra.mxu0 %v1886
    %v1954 = vpop.f32.mrf.mxu0
    %v1955 = vadd.f32 %v1315, %v1954
    %v1956 = vpop.f32.mrf.mxu0
    %1957 = vdwg.mxu0
    %v1958 = vadd.f32 %v1298, %v1955
    %v1959 = vxor.u32 %v1958, 2147483648
    %v1960 = vmul.f32 %v1959, 1.442695
    %v1961 = vpow.pop %v1960
    %v1962 = vadd.f32 %v1961, 1.0
    %v1963 = vrcp.pop %v1962
    %v1964 = vmul.f32 1.0, %v1963
    %1966 = vrot.lane.b32.xlu0 %v1955, 64
    %v1967 = vpop.permute.xlu0 %1966
    %v1969 = vmul.f32 %v1964, %v1967
    %1971 = vrot.lane.b32.xlu0 %v1969, 64
    %v1972 = vpop.permute.xlu0 %1971
    %v1974 = vadd.f32 %v1298, %v1972
    %v1975 = vtanh.pop %v1974
    %1977 = vrot.lane.b32.xlu0 %v1975, 64
    %v1978 = vpop.permute.xlu0 %1977
    %v1980 = vsub.f32 %v1884, %v1978
    %1982 = vrot.lane.b32.xlu0 %v1980, 32
    %v1983 = vpop.permute.xlu0 %1982
    %v1985 = vmul.f32 %v1964, %v1983
    %1987 = vrot.lane.b32.xlu0 %v1985, 32
    %v1988 = vpop.permute.xlu0 %1987
    %v1990 = vadd.f32 %v1975, %v1988
    %v1991 = vld [vmem:[%s916] sm:$0xff]
    %1993 = vrot.lane.b32.xlu0 %v1990, 64
    %v1994 = vpop.permute.xlu0 %1993
    %v1996 = vmul.f32 %v1991, %v1994
    %v1997 = vld [vmem:[%s923] sm:$0xff]
    %v1998 = vmul.f32 %v1997, %v1884
    %v1999 = vadd.f32 %v1996, %v1998
    %v2001 = vsel %vm95, %v1999, 0
    %2003 = vmatprep.subr.mxu0 0.0
    %2004 = vmatpush1.msra.mxu0 0.0
    %2005 = vmatprep.subr.mxu0 0.0
    %2006 = vmatpush1.msra.mxu0 0.0
    %2007 = vmatprep.subr.mxu0 0.0
    %2008 = vmatpush1.msra.mxu0 0.0
    %2009 = vmatprep.subr.mxu0 0.0
    %2010 = vmatpush1.msra.mxu0 0.0
    %2011 = vmatprep.subr.mxu0 0.0
    %2012 = vmatpush1.msra.mxu0 0.0
    %2013 = vmatprep.subr.mxu0 0.0
    %2014 = vmatpush1.msra.mxu0 0.0
    %2015 = vmatprep.subr.mxu0 0.0
    %2016 = vmatpush1.msra.mxu0 0.0
    %2017 = vmatprep.subr.mxu0 0.0
    %2018 = vmatpush1.msra.mxu0 0.0
    %2019 = vmatprep.subr.mxu0 0.0
    %2020 = vmatpush1.msra.mxu0 0.0
    %2021 = vmatprep.subr.mxu0 0.0
    %2022 = vmatpush1.msra.mxu0 0.0
    %2023 = vmatprep.subr.mxu0 0.0
    %2024 = vmatpush1.msra.mxu0 0.0
    %2025 = vmatprep.subr.mxu0 0.0
    %2026 = vmatpush1.msra.mxu0 0.0
    %2027 = vmatprep.subr.mxu0 0.0
    %2028 = vmatpush1.msra.mxu0 %v1171
    %2029 = vmatprep.subr.mxu0 0.0
    %2030 = vmatpush1.msra.mxu0 %v1170
    %2031 = vmatprep.subr.mxu0 0.0
    %2032 = vmatpush1.msra.mxu0 %v1169
    %2033 = vmatprep.subr.mxu0 0.0
    %2034 = vmatpush1.msra.mxu0 %v1168
    %2035 = vmatprep.subr.mxu0 0.0
    %2036 = vmatpush2.msra.mxu0 0.0
    %2037 = vmatprep.subr.mxu0 0.0
    %2038 = vmatpush2.msra.mxu0 0.0
    %2039 = vmatprep.subr.mxu0 0.0
    %2040 = vmatpush2.msra.mxu0 0.0
    %2041 = vmatprep.subr.mxu0 0.0
    %2042 = vmatpush2.msra.mxu0 0.0
    %2043 = vmatprep.subr.mxu0 0.0
    %2044 = vmatpush2.msra.mxu0 0.0
    %2045 = vmatprep.subr.mxu0 0.0
    %2046 = vmatpush2.msra.mxu0 0.0
    %2047 = vmatprep.subr.mxu0 0.0
    %2048 = vmatpush2.msra.mxu0 0.0
    %2049 = vmatprep.subr.mxu0 0.0
    %2050 = vmatpush2.msra.mxu0 0.0
    %2051 = vmatprep.subr.mxu0 0.0
    %2052 = vmatpush2.msra.mxu0 0.0
    %2053 = vmatprep.subr.mxu0 0.0
    %2054 = vmatpush2.msra.mxu0 0.0
    %2055 = vmatprep.subr.mxu0 0.0
    %2056 = vmatpush2.msra.mxu0 0.0
    %2057 = vmatprep.subr.mxu0 0.0
    %2058 = vmatpush2.msra.mxu0 0.0
    %2059 = vmatprep.subr.mxu0 0.0
    %2060 = vmatpush2.msra.mxu0 0.0
    %2061 = vmatprep.subr.mxu0 0.0
    %2062 = vmatpush2.msra.mxu0 0.0
    %2063 = vmatprep.subr.mxu0 0.0
    %2064 = vmatpush2.msra.mxu0 0.0
    %2065 = vmatprep.subr.mxu0 0.0
    %2066 = vmatpush2.msra.mxu0 0.0
    %2067 = vmatprep.mubr.f32.mxu0 0.0
    %2068 = vmatmul.mubr.f32.gmra.mxu0 %v2001
    %v2069 = vpop.f32.mrf.mxu0
    %v2070 = vadd.f32 %v1315, %v2069
    %v2071 = vpop.f32.mrf.mxu0
    %2072 = vdwg.mxu0
    %v2073 = vadd.f32 %v1303, %v2070
    %v2074 = vxor.u32 %v2073, 2147483648
    %v2075 = vmul.f32 %v2074, 1.442695
    %v2076 = vpow.pop %v2075
    %v2077 = vadd.f32 %v2076, 1.0
    %v2078 = vrcp.pop %v2077
    %v2079 = vmul.f32 1.0, %v2078
    %2081 = vrot.lane.b32.xlu0 %v2070, 64
    %v2082 = vpop.permute.xlu0 %2081
    %v2084 = vmul.f32 %v2079, %v2082
    %2086 = vrot.lane.b32.xlu0 %v2084, 64
    %v2087 = vpop.permute.xlu0 %2086
    %v2089 = vadd.f32 %v1303, %v2087
    %v2090 = vtanh.pop %v2089
    %2092 = vrot.lane.b32.xlu0 %v2090, 64
    %v2093 = vpop.permute.xlu0 %2092
    %v2095 = vsub.f32 %v1999, %v2093
    %2097 = vrot.lane.b32.xlu0 %v2095, 32
    %v2098 = vpop.permute.xlu0 %2097
    %v2100 = vmul.f32 %v2079, %v2098
    %2102 = vrot.lane.b32.xlu0 %v2100, 32
    %v2103 = vpop.permute.xlu0 %2102
    %v2105 = vadd.f32 %v2090, %v2103
    %v2106 = vld [vmem:[%s1033] sm:$0xff]
    %2108 = vrot.lane.b32.xlu0 %v2105, 64
    %v2109 = vpop.permute.xlu0 %2108
    %v2111 = vmul.f32 %v2106, %v2109
    %v2112 = vld [vmem:[%s1040] sm:$0xff]
    %v2113 = vmul.f32 %v2112, %v1999
    %v2114 = vadd.f32 %v2111, %v2113
    %v2116 = vsel %vm95, %v2114, 0
    %2118 = vmatprep.subr.mxu0 0.0
    %2119 = vmatpush1.msra.mxu0 0.0
    %2120 = vmatprep.subr.mxu0 0.0
    %2121 = vmatpush1.msra.mxu0 0.0
    %2122 = vmatprep.subr.mxu0 0.0
    %2123 = vmatpush1.msra.mxu0 0.0
    %2124 = vmatprep.subr.mxu0 0.0
    %2125 = vmatpush1.msra.mxu0 0.0
    %2126 = vmatprep.subr.mxu0 0.0
    %2127 = vmatpush1.msra.mxu0 0.0
    %2128 = vmatprep.subr.mxu0 0.0
    %2129 = vmatpush1.msra.mxu0 0.0
    %2130 = vmatprep.subr.mxu0 0.0
    %2131 = vmatpush1.msra.mxu0 0.0
    %2132 = vmatprep.subr.mxu0 0.0
    %2133 = vmatpush1.msra.mxu0 0.0
    %2134 = vmatprep.subr.mxu0 0.0
    %2135 = vmatpush1.msra.mxu0 0.0
    %2136 = vmatprep.subr.mxu0 0.0
    %2137 = vmatpush1.msra.mxu0 0.0
    %2138 = vmatprep.subr.mxu0 0.0
    %2139 = vmatpush1.msra.mxu0 0.0
    %2140 = vmatprep.subr.mxu0 0.0
    %2141 = vmatpush1.msra.mxu0 0.0
    %2142 = vmatprep.subr.mxu0 0.0
    %2143 = vmatpush1.msra.mxu0 %v1171
    %2144 = vmatprep.subr.mxu0 0.0
    %2145 = vmatpush1.msra.mxu0 %v1170
    %2146 = vmatprep.subr.mxu0 0.0
    %2147 = vmatpush1.msra.mxu0 %v1169
    %2148 = vmatprep.subr.mxu0 0.0
    %2149 = vmatpush1.msra.mxu0 %v1168
    %2150 = vmatprep.subr.mxu0 0.0
    %2151 = vmatpush2.msra.mxu0 0.0
    %2152 = vmatprep.subr.mxu0 0.0
    %2153 = vmatpush2.msra.mxu0 0.0
    %2154 = vmatprep.subr.mxu0 0.0
    %2155 = vmatpush2.msra.mxu0 0.0
    %2156 = vmatprep.subr.mxu0 0.0
    %2157 = vmatpush2.msra.mxu0 0.0
    %2158 = vmatprep.subr.mxu0 0.0
    %2159 = vmatpush2.msra.mxu0 0.0
    %2160 = vmatprep.subr.mxu0 0.0
    %2161 = vmatpush2.msra.mxu0 0.0
    %2162 = vmatprep.subr.mxu0 0.0
    %2163 = vmatpush2.msra.mxu0 0.0
    %2164 = vmatprep.subr.mxu0 0.0
    %2165 = vmatpush2.msra.mxu0 0.0
    %2166 = vmatprep.subr.mxu0 0.0
    %2167 = vmatpush2.msra.mxu0 0.0
    %2168 = vmatprep.subr.mxu0 0.0
    %2169 = vmatpush2.msra.mxu0 0.0
    %2170 = vmatprep.subr.mxu0 0.0
    %2171 = vmatpush2.msra.mxu0 0.0
    %2172 = vmatprep.subr.mxu0 0.0
    %2173 = vmatpush2.msra.mxu0 0.0
    %2174 = vmatprep.subr.mxu0 0.0
    %2175 = vmatpush2.msra.mxu0 0.0
    %2176 = vmatprep.subr.mxu0 0.0
    %2177 = vmatpush2.msra.mxu0 0.0
    %2178 = vmatprep.subr.mxu0 0.0
    %2179 = vmatpush2.msra.mxu0 0.0
    %2180 = vmatprep.subr.mxu0 0.0
    %2181 = vmatpush2.msra.mxu0 0.0
    %2182 = vmatprep.mubr.f32.mxu0 0.0
    %2183 = vmatmul.mubr.f32.gmra.mxu0 %v2116
    %v2184 = vpop.f32.mrf.mxu0
    %v2185 = vadd.f32 %v1315, %v2184
    %v2186 = vpop.f32.mrf.mxu0
    %2187 = vdwg.mxu0
    %v2188 = vadd.f32 %v1308, %v2185
    %v2189 = vxor.u32 %v2188, 2147483648
    %v2190 = vmul.f32 %v2189, 1.442695
    %v2191 = vpow.pop %v2190
    %v2192 = vadd.f32 %v2191, 1.0
    %v2193 = vrcp.pop %v2192
    %v2194 = vmul.f32 1.0, %v2193
    %2196 = vrot.lane.b32.xlu0 %v2185, 64
    %v2197 = vpop.permute.xlu0 %2196
    %v2199 = vmul.f32 %v2194, %v2197
    %2201 = vrot.lane.b32.xlu0 %v2199, 64
    %v2202 = vpop.permute.xlu0 %2201
    %v2204 = vadd.f32 %v1308, %v2202
    %v2205 = vtanh.pop %v2204
    %2207 = vrot.lane.b32.xlu0 %v2205, 64
    %v2208 = vpop.permute.xlu0 %2207
    %v2210 = vsub.f32 %v2114, %v2208
    %2212 = vrot.lane.b32.xlu0 %v2210, 32
    %v2213 = vpop.permute.xlu0 %2212
    %v2215 = vmul.f32 %v2194, %v2213
    %2217 = vrot.lane.b32.xlu0 %v2215, 32
    %v2218 = vpop.permute.xlu0 %2217
    %v2220 = vadd.f32 %v2205, %v2218
    %v2221 = vld [vmem:[%s1150] sm:$0xff]
    %2223 = vrot.lane.b32.xlu0 %v2220, 64
    %v2224 = vpop.permute.xlu0 %2223
    %v2226 = vmul.f32 %v2221, %v2224
    %v2227 = vld [vmem:[%s1157] sm:$0xff]
    %v2228 = vmul.f32 %v2227, %v2114
    %v2229 = vadd.f32 %v2226, %v2228
    %2231 = vrot.lane.b32.xlu0 %v2229, 32
    %v2232 = vpop.permute.xlu0 %2231
    %vm2234 = vcmask 523520
    %2235 = vst.msk [vmem:[#allocation9] sm:$0xff] %vm2234, %v2232
    %s2236 = scalar_lea.vmem [#allocation5], 64
    %v2237 = vld [vmem:[%s2236] sm:$0xff]
    %v2238 = vld [vmem:[%s2236 + $0x8] sm:$0xff]
    %v2239 = vld [vmem:[%s2236 + $0x10] sm:$0xff]
    %v2240 = vld [vmem:[%s2236 + $0x18] sm:$0xff]
    %s2241 = scalar_lea.vmem [#allocation7], 64
    %v2242 = vld [vmem:[%s2241] sm:$0xff]
    %v2243 = vld [vmem:[%s2241 + $0x8] sm:$0xff]
    %v2244 = vld [vmem:[%s2241 + $0x10] sm:$0xff]
    %v2245 = vld [vmem:[%s2241 + $0x18] sm:$0xff]
    %s2246 = scalar_lea.vmem %s5, 2
    %v2247 = vld [vmem:[%s2246] sm:$0x1]
    %s2248 = scalar_lea.vmem %s6, 2
    %v2249 = vld [vmem:[%s2248] sm:$0x1]
    %v2251 = vlaneseq
    %v2252 = vshrl.u32 %v2251, 7
    %v2253 = vsub.s32 0, %v2252
    %v2254 = vrot.slane %v2247, %v2253
    %v2257 = vsel %vm95, %v1421, 0
    %v2260 = vsel %vm95, %v1536, 0
    %v2263 = vsel %vm95, %v1651, 0
    %v2266 = vsel %vm95, %v1766, 0
    %v2269 = vsel %vm95, %v1881, 0
    %v2272 = vsel %vm95, %v1996, 0
    %v2275 = vsel %vm95, %v2111, 0
    %v2278 = vsel %vm95, %v2226, 0
    %2280 = vmatprep.subr.mxu0 0.0
    %2281 = vmatpush1.msra.mxu0 0.0
    %2282 = vmatprep.subr.mxu0 0.0
    %2283 = vmatpush1.msra.mxu0 0.0
    %2284 = vmatprep.subr.mxu0 0.0
    %2285 = vmatpush1.msra.mxu0 0.0
    %2286 = vmatprep.subr.mxu0 0.0
    %2287 = vmatpush1.msra.mxu0 0.0
    %2288 = vmatprep.subr.mxu0 0.0
    %2289 = vmatpush1.msra.mxu0 0.0
    %2290 = vmatprep.subr.mxu0 0.0
    %2291 = vmatpush1.msra.mxu0 0.0
    %2292 = vmatprep.subr.mxu0 0.0
    %2293 = vmatpush1.msra.mxu0 0.0
    %2294 = vmatprep.subr.mxu0 0.0
    %2295 = vmatpush1.msra.mxu0 0.0
    %2296 = vmatprep.subr.mxu0 0.0
    %2297 = vmatpush1.msra.mxu0 0.0
    %2298 = vmatprep.subr.mxu0 0.0
    %2299 = vmatpush1.msra.mxu0 0.0
    %2300 = vmatprep.subr.mxu0 0.0
    %2301 = vmatpush1.msra.mxu0 0.0
    %2302 = vmatprep.subr.mxu0 0.0
    %2303 = vmatpush1.msra.mxu0 0.0
    %2304 = vmatprep.subr.mxu0 0.0
    %2305 = vmatpush1.msra.mxu0 %v2240
    %2306 = vmatprep.subr.mxu0 0.0
    %2307 = vmatpush1.msra.mxu0 %v2239
    %2308 = vmatprep.subr.mxu0 0.0
    %2309 = vmatpush1.msra.mxu0 %v2238
    %2310 = vmatprep.subr.mxu0 0.0
    %2311 = vmatpush1.msra.mxu0 %v2237
    %2312 = vmatprep.subr.mxu0 0.0
    %2313 = vmatpush2.msra.mxu0 0.0
    %2314 = vmatprep.subr.mxu0 0.0
    %2315 = vmatpush2.msra.mxu0 0.0
    %2316 = vmatprep.subr.mxu0 0.0
    %2317 = vmatpush2.msra.mxu0 0.0
    %2318 = vmatprep.subr.mxu0 0.0
    %2319 = vmatpush2.msra.mxu0 0.0
    %2320 = vmatprep.subr.mxu0 0.0
    %2321 = vmatpush2.msra.mxu0 0.0
    %2322 = vmatprep.subr.mxu0 0.0
    %2323 = vmatpush2.msra.mxu0 0.0
    %2324 = vmatprep.subr.mxu0 0.0
    %2325 = vmatpush2.msra.mxu0 0.0
    %2326 = vmatprep.subr.mxu0 0.0
    %2327 = vmatpush2.msra.mxu0 0.0
    %2328 = vmatprep.subr.mxu0 0.0
    %2329 = vmatpush2.msra.mxu0 0.0
    %2330 = vmatprep.subr.mxu0 0.0
    %2331 = vmatpush2.msra.mxu0 0.0
    %2332 = vmatprep.subr.mxu0 0.0
    %2333 = vmatpush2.msra.mxu0 0.0
    %2334 = vmatprep.subr.mxu0 0.0
    %2335 = vmatpush2.msra.mxu0 0.0
    %2336 = vmatprep.subr.mxu0 0.0
    %2337 = vmatpush2.msra.mxu0 0.0
    %2338 = vmatprep.subr.mxu0 0.0
    %2339 = vmatpush2.msra.mxu0 0.0
    %2340 = vmatprep.subr.mxu0 0.0
    %2341 = vmatpush2.msra.mxu0 0.0
    %2342 = vmatprep.subr.mxu0 0.0
    %2343 = vmatpush2.msra.mxu0 0.0
    %2344 = vmatprep.mubr.f32.mxu0 0.0
    %2345 = vmatmul.mubr.f32.gmra.mxu0 %v2257
    %v2346 = vpop.f32.mrf.mxu0
    %v2347 = vadd.f32 %v2254, %v2346
    %v2348 = vpop.f32.mrf.mxu0
    %2349 = vmatprep.mubr.f32.mxu0 0.0
    %2350 = vmatmul.mubr.f32.gmra.mxu0 %v2260
    %v2351 = vpop.f32.mrf.mxu0
    %v2352 = vadd.f32 %v2254, %v2351
    %v2353 = vpop.f32.mrf.mxu0
    %2354 = vmatprep.mubr.f32.mxu0 0.0
    %2355 = vmatmul.mubr.f32.gmra.mxu0 %v2263
    %v2356 = vpop.f32.mrf.mxu0
    %v2357 = vadd.f32 %v2254, %v2356
    %v2358 = vpop.f32.mrf.mxu0
    %2359 = vmatprep.mubr.f32.mxu0 0.0
    %2360 = vmatmul.mubr.f32.gmra.mxu0 %v2266
    %v2361 = vpop.f32.mrf.mxu0
    %v2362 = vadd.f32 %v2254, %v2361
    %v2363 = vpop.f32.mrf.mxu0
    %2364 = vmatprep.mubr.f32.mxu0 0.0
    %2365 = vmatmul.mubr.f32.gmra.mxu0 %v2269
    %v2366 = vpop.f32.mrf.mxu0
    %v2367 = vadd.f32 %v2254, %v2366
    %v2368 = vpop.f32.mrf.mxu0
    %2369 = vmatprep.mubr.f32.mxu0 0.0
    %2370 = vmatmul.mubr.f32.gmra.mxu0 %v2272
    %v2371 = vpop.f32.mrf.mxu0
    %v2372 = vadd.f32 %v2254, %v2371
    %v2373 = vpop.f32.mrf.mxu0
    %2374 = vmatprep.mubr.f32.mxu0 0.0
    %2375 = vmatmul.mubr.f32.gmra.mxu0 %v2275
    %v2376 = vpop.f32.mrf.mxu0
    %v2377 = vadd.f32 %v2254, %v2376
    %v2378 = vpop.f32.mrf.mxu0
    %2379 = vmatprep.mubr.f32.mxu0 0.0
    %2380 = vmatmul.mubr.f32.gmra.mxu0 %v2278
    %v2381 = vpop.f32.mrf.mxu0
    %v2382 = vadd.f32 %v2254, %v2381
    %v2383 = vpop.f32.mrf.mxu0
    %2384 = vdwg.mxu0
    %v2386 = vlaneseq
    %v2387 = vshrl.u32 %v2386, 7
    %v2388 = vsub.s32 0, %v2387
    %v2389 = vrot.slane %v2249, %v2388
    %2391 = vmatprep.subr.mxu0 0.0
    %2392 = vmatpush1.msra.mxu0 0.0
    %2393 = vmatprep.subr.mxu0 0.0
    %2394 = vmatpush1.msra.mxu0 0.0
    %2395 = vmatprep.subr.mxu0 0.0
    %2396 = vmatpush1.msra.mxu0 0.0
    %2397 = vmatprep.subr.mxu0 0.0
    %2398 = vmatpush1.msra.mxu0 0.0
    %2399 = vmatprep.subr.mxu0 0.0
    %2400 = vmatpush1.msra.mxu0 0.0
    %2401 = vmatprep.subr.mxu0 0.0
    %2402 = vmatpush1.msra.mxu0 0.0
    %2403 = vmatprep.subr.mxu0 0.0
    %2404 = vmatpush1.msra.mxu0 0.0
    %2405 = vmatprep.subr.mxu0 0.0
    %2406 = vmatpush1.msra.mxu0 0.0
    %2407 = vmatprep.subr.mxu0 0.0
    %2408 = vmatpush1.msra.mxu0 0.0
    %2409 = vmatprep.subr.mxu0 0.0
    %2410 = vmatpush1.msra.mxu0 0.0
    %2411 = vmatprep.subr.mxu0 0.0
    %2412 = vmatpush1.msra.mxu0 0.0
    %2413 = vmatprep.subr.mxu0 0.0
    %2414 = vmatpush1.msra.mxu0 0.0
    %2415 = vmatprep.subr.mxu0 0.0
    %2416 = vmatpush1.msra.mxu0 %v2245
    %2417 = vmatprep.subr.mxu0 0.0
    %2418 = vmatpush1.msra.mxu0 %v2244
    %2419 = vmatprep.subr.mxu0 0.0
    %2420 = vmatpush1.msra.mxu0 %v2243
    %2421 = vmatprep.subr.mxu0 0.0
    %2422 = vmatpush1.msra.mxu0 %v2242
    %2423 = vmatprep.subr.mxu0 0.0
    %2424 = vmatpush2.msra.mxu0 0.0
    %2425 = vmatprep.subr.mxu0 0.0
    %2426 = vmatpush2.msra.mxu0 0.0
    %2427 = vmatprep.subr.mxu0 0.0
    %2428 = vmatpush2.msra.mxu0 0.0
    %2429 = vmatprep.subr.mxu0 0.0
    %2430 = vmatpush2.msra.mxu0 0.0
    %2431 = vmatprep.subr.mxu0 0.0
    %2432 = vmatpush2.msra.mxu0 0.0
    %2433 = vmatprep.subr.mxu0 0.0
    %2434 = vmatpush2.msra.mxu0 0.0
    %2435 = vmatprep.subr.mxu0 0.0
    %2436 = vmatpush2.msra.mxu0 0.0
    %2437 = vmatprep.subr.mxu0 0.0
    %2438 = vmatpush2.msra.mxu0 0.0
    %2439 = vmatprep.subr.mxu0 0.0
    %2440 = vmatpush2.msra.mxu0 0.0
    %2441 = vmatprep.subr.mxu0 0.0
    %2442 = vmatpush2.msra.mxu0 0.0
    %2443 = vmatprep.subr.mxu0 0.0
    %2444 = vmatpush2.msra.mxu0 0.0
    %2445 = vmatprep.subr.mxu0 0.0
    %2446 = vmatpush2.msra.mxu0 0.0
    %2447 = vmatprep.subr.mxu0 0.0
    %2448 = vmatpush2.msra.mxu0 0.0
    %2449 = vmatprep.subr.mxu0 0.0
    %2450 = vmatpush2.msra.mxu0 0.0
    %2451 = vmatprep.subr.mxu0 0.0
    %2452 = vmatpush2.msra.mxu0 0.0
    %2453 = vmatprep.subr.mxu0 0.0
    %2454 = vmatpush2.msra.mxu0 0.0
    %2455 = vmatprep.mubr.f32.mxu0 0.0
    %2456 = vmatmul.mubr.f32.gmra.mxu0 %v232
    %v2457 = vpop.f32.mrf.mxu0
    %v2458 = vadd.f32 %v2389, %v2457
    %v2459 = vpop.f32.mrf.mxu0
    %2460 = vdwg.mxu0
    %v2461 = vadd.f32 %v2347, %v2458
    %v2462 = vxor.u32 %v2461, 2147483648
    %v2463 = vmul.f32 %v2462, 1.442695
    %v2464 = vpow.pop %v2463
    %v2465 = vadd.f32 %v2464, 1.0
    %v2466 = vrcp.pop %v2465
    %v2467 = vmul.f32 1.0, %v2466
    %2469 = vrot.lane.b32.xlu0 %v2458, 64
    %v2470 = vpop.permute.xlu0 %2469
    %v2472 = vmul.f32 %v2467, %v2470
    %2474 = vrot.lane.b32.xlu0 %v2472, 64
    %v2475 = vpop.permute.xlu0 %2474
    %v2477 = vadd.f32 %v2347, %v2475
    %v2478 = vtanh.pop %v2477
    %v2479 = vsub.f32 0.0, %v2478
    %2481 = vrot.lane.b32.xlu0 %v2479, 96
    %v2482 = vpop.permute.xlu0 %2481
    %v2484 = vmul.f32 %v2467, %v2482
    %2486 = vrot.lane.b32.xlu0 %v2484, 32
    %v2487 = vpop.permute.xlu0 %2486
    %v2489 = vadd.f32 %v2478, %v2487
    %v2490 = vld [vmem:[%s1] sm:$0xff]
    %2492 = vrot.lane.b32.xlu0 %v2489, 64
    %v2493 = vpop.permute.xlu0 %2492
    %v2495 = vmul.f32 %v2490, %v2493
    %v2496 = vld [vmem:[#allocation2] sm:$0xff]
    %v2497 = vmul.f32 %v2496, 0.0
    %v2498 = vadd.f32 %v2495, %v2497
    %v2500 = vsel %vm95, %v2498, 0
    %2502 = vmatprep.subr.mxu0 0.0
    %2503 = vmatpush1.msra.mxu0 0.0
    %2504 = vmatprep.subr.mxu0 0.0
    %2505 = vmatpush1.msra.mxu0 0.0
    %2506 = vmatprep.subr.mxu0 0.0
    %2507 = vmatpush1.msra.mxu0 0.0
    %2508 = vmatprep.subr.mxu0 0.0
    %2509 = vmatpush1.msra.mxu0 0.0
    %2510 = vmatprep.subr.mxu0 0.0
    %2511 = vmatpush1.msra.mxu0 0.0
    %2512 = vmatprep.subr.mxu0 0.0
    %2513 = vmatpush1.msra.mxu0 0.0
    %2514 = vmatprep.subr.mxu0 0.0
    %2515 = vmatpush1.msra.mxu0 0.0
    %2516 = vmatprep.subr.mxu0 0.0
    %2517 = vmatpush1.msra.mxu0 0.0
    %2518 = vmatprep.subr.mxu0 0.0
    %2519 = vmatpush1.msra.mxu0 0.0
    %2520 = vmatprep.subr.mxu0 0.0
    %2521 = vmatpush1.msra.mxu0 0.0
    %2522 = vmatprep.subr.mxu0 0.0
    %2523 = vmatpush1.msra.mxu0 0.0
    %2524 = vmatprep.subr.mxu0 0.0
    %2525 = vmatpush1.msra.mxu0 0.0
    %2526 = vmatprep.subr.mxu0 0.0
    %2527 = vmatpush1.msra.mxu0 %v2245
    %2528 = vmatprep.subr.mxu0 0.0
    %2529 = vmatpush1.msra.mxu0 %v2244
    %2530 = vmatprep.subr.mxu0 0.0
    %2531 = vmatpush1.msra.mxu0 %v2243
    %2532 = vmatprep.subr.mxu0 0.0
    %2533 = vmatpush1.msra.mxu0 %v2242
    %2534 = vmatprep.subr.mxu0 0.0
    %2535 = vmatpush2.msra.mxu0 0.0
    %2536 = vmatprep.subr.mxu0 0.0
    %2537 = vmatpush2.msra.mxu0 0.0
    %2538 = vmatprep.subr.mxu0 0.0
    %2539 = vmatpush2.msra.mxu0 0.0
    %2540 = vmatprep.subr.mxu0 0.0
    %2541 = vmatpush2.msra.mxu0 0.0
    %2542 = vmatprep.subr.mxu0 0.0
    %2543 = vmatpush2.msra.mxu0 0.0
    %2544 = vmatprep.subr.mxu0 0.0
    %2545 = vmatpush2.msra.mxu0 0.0
    %2546 = vmatprep.subr.mxu0 0.0
    %2547 = vmatpush2.msra.mxu0 0.0
    %2548 = vmatprep.subr.mxu0 0.0
    %2549 = vmatpush2.msra.mxu0 0.0
    %2550 = vmatprep.subr.mxu0 0.0
    %2551 = vmatpush2.msra.mxu0 0.0
    %2552 = vmatprep.subr.mxu0 0.0
    %2553 = vmatpush2.msra.mxu0 0.0
    %2554 = vmatprep.subr.mxu0 0.0
    %2555 = vmatpush2.msra.mxu0 0.0
    %2556 = vmatprep.subr.mxu0 0.0
    %2557 = vmatpush2.msra.mxu0 0.0
    %2558 = vmatprep.subr.mxu0 0.0
    %2559 = vmatpush2.msra.mxu0 0.0
    %2560 = vmatprep.subr.mxu0 0.0
    %2561 = vmatpush2.msra.mxu0 0.0
    %2562 = vmatprep.subr.mxu0 0.0
    %2563 = vmatpush2.msra.mxu0 0.0
    %2564 = vmatprep.subr.mxu0 0.0
    %2565 = vmatpush2.msra.mxu0 0.0
    %2566 = vmatprep.mubr.f32.mxu0 0.0
    %2567 = vmatmul.mubr.f32.gmra.mxu0 %v2500
    %v2568 = vpop.f32.mrf.mxu0
    %v2569 = vadd.f32 %v2389, %v2568
    %v2570 = vpop.f32.mrf.mxu0
    %2571 = vdwg.mxu0
    %v2572 = vadd.f32 %v2352, %v2569
    %v2573 = vxor.u32 %v2572, 2147483648
    %v2574 = vmul.f32 %v2573, 1.442695
    %v2575 = vpow.pop %v2574
    %v2576 = vadd.f32 %v2575, 1.0
    %v2577 = vrcp.pop %v2576
    %v2578 = vmul.f32 1.0, %v2577
    %2580 = vrot.lane.b32.xlu0 %v2569, 64
    %v2581 = vpop.permute.xlu0 %2580
    %v2583 = vmul.f32 %v2578, %v2581
    %2585 = vrot.lane.b32.xlu0 %v2583, 64
    %v2586 = vpop.permute.xlu0 %2585
    %v2588 = vadd.f32 %v2352, %v2586
    %v2589 = vtanh.pop %v2588
    %2591 = vrot.lane.b32.xlu0 %v2589, 64
    %v2592 = vpop.permute.xlu0 %2591
    %v2594 = vsub.f32 %v2498, %v2592
    %2596 = vrot.lane.b32.xlu0 %v2594, 32
    %v2597 = vpop.permute.xlu0 %2596
    %v2599 = vmul.f32 %v2578, %v2597
    %2601 = vrot.lane.b32.xlu0 %v2599, 32
    %v2602 = vpop.permute.xlu0 %2601
    %v2604 = vadd.f32 %v2589, %v2602
    %v2605 = vld [vmem:[%s448] sm:$0xff]
    %2607 = vrot.lane.b32.xlu0 %v2604, 64
    %v2608 = vpop.permute.xlu0 %2607
    %v2610 = vmul.f32 %v2605, %v2608
    %v2611 = vld [vmem:[%s455] sm:$0xff]
    %v2612 = vmul.f32 %v2611, %v2498
    %v2613 = vadd.f32 %v2610, %v2612
    %v2615 = vsel %vm95, %v2613, 0
    %2617 = vmatprep.subr.mxu0 0.0
    %2618 = vmatpush1.msra.mxu0 0.0
    %2619 = vmatprep.subr.mxu0 0.0
    %2620 = vmatpush1.msra.mxu0 0.0
    %2621 = vmatprep.subr.mxu0 0.0
    %2622 = vmatpush1.msra.mxu0 0.0
    %2623 = vmatprep.subr.mxu0 0.0
    %2624 = vmatpush1.msra.mxu0 0.0
    %2625 = vmatprep.subr.mxu0 0.0
    %2626 = vmatpush1.msra.mxu0 0.0
    %2627 = vmatprep.subr.mxu0 0.0
    %2628 = vmatpush1.msra.mxu0 0.0
    %2629 = vmatprep.subr.mxu0 0.0
    %2630 = vmatpush1.msra.mxu0 0.0
    %2631 = vmatprep.subr.mxu0 0.0
    %2632 = vmatpush1.msra.mxu0 0.0
    %2633 = vmatprep.subr.mxu0 0.0
    %2634 = vmatpush1.msra.mxu0 0.0
    %2635 = vmatprep.subr.mxu0 0.0
    %2636 = vmatpush1.msra.mxu0 0.0
    %2637 = vmatprep.subr.mxu0 0.0
    %2638 = vmatpush1.msra.mxu0 0.0
    %2639 = vmatprep.subr.mxu0 0.0
    %2640 = vmatpush1.msra.mxu0 0.0
    %2641 = vmatprep.subr.mxu0 0.0
    %2642 = vmatpush1.msra.mxu0 %v2245
    %2643 = vmatprep.subr.mxu0 0.0
    %2644 = vmatpush1.msra.mxu0 %v2244
    %2645 = vmatprep.subr.mxu0 0.0
    %2646 = vmatpush1.msra.mxu0 %v2243
    %2647 = vmatprep.subr.mxu0 0.0
    %2648 = vmatpush1.msra.mxu0 %v2242
    %2649 = vmatprep.subr.mxu0 0.0
    %2650 = vmatpush2.msra.mxu0 0.0
    %2651 = vmatprep.subr.mxu0 0.0
    %2652 = vmatpush2.msra.mxu0 0.0
    %2653 = vmatprep.subr.mxu0 0.0
    %2654 = vmatpush2.msra.mxu0 0.0
    %2655 = vmatprep.subr.mxu0 0.0
    %2656 = vmatpush2.msra.mxu0 0.0
    %2657 = vmatprep.subr.mxu0 0.0
    %2658 = vmatpush2.msra.mxu0 0.0
    %2659 = vmatprep.subr.mxu0 0.0
    %2660 = vmatpush2.msra.mxu0 0.0
    %2661 = vmatprep.subr.mxu0 0.0
    %2662 = vmatpush2.msra.mxu0 0.0
    %2663 = vmatprep.subr.mxu0 0.0
    %2664 = vmatpush2.msra.mxu0 0.0
    %2665 = vmatprep.subr.mxu0 0.0
    %2666 = vmatpush2.msra.mxu0 0.0
    %2667 = vmatprep.subr.mxu0 0.0
    %2668 = vmatpush2.msra.mxu0 0.0
    %2669 = vmatprep.subr.mxu0 0.0
    %2670 = vmatpush2.msra.mxu0 0.0
    %2671 = vmatprep.subr.mxu0 0.0
    %2672 = vmatpush2.msra.mxu0 0.0
    %2673 = vmatprep.subr.mxu0 0.0
    %2674 = vmatpush2.msra.mxu0 0.0
    %2675 = vmatprep.subr.mxu0 0.0
    %2676 = vmatpush2.msra.mxu0 0.0
    %2677 = vmatprep.subr.mxu0 0.0
    %2678 = vmatpush2.msra.mxu0 0.0
    %2679 = vmatprep.subr.mxu0 0.0
    %2680 = vmatpush2.msra.mxu0 0.0
    %2681 = vmatprep.mubr.f32.mxu0 0.0
    %2682 = vmatmul.mubr.f32.gmra.mxu0 %v2615
    %v2683 = vpop.f32.mrf.mxu0
    %v2684 = vadd.f32 %v2389, %v2683
    %v2685 = vpop.f32.mrf.mxu0
    %2686 = vdwg.mxu0
    %v2687 = vadd.f32 %v2357, %v2684
    %v2688 = vxor.u32 %v2687, 2147483648
    %v2689 = vmul.f32 %v2688, 1.442695
    %v2690 = vpow.pop %v2689
    %v2691 = vadd.f32 %v2690, 1.0
    %v2692 = vrcp.pop %v2691
    %v2693 = vmul.f32 1.0, %v2692
    %2695 = vrot.lane.b32.xlu0 %v2684, 64
    %v2696 = vpop.permute.xlu0 %2695
    %v2698 = vmul.f32 %v2693, %v2696
    %2700 = vrot.lane.b32.xlu0 %v2698, 64
    %v2701 = vpop.permute.xlu0 %2700
    %v2703 = vadd.f32 %v2357, %v2701
    %v2704 = vtanh.pop %v2703
    %2706 = vrot.lane.b32.xlu0 %v2704, 64
    %v2707 = vpop.permute.xlu0 %2706
    %v2709 = vsub.f32 %v2613, %v2707
    %2711 = vrot.lane.b32.xlu0 %v2709, 32
    %v2712 = vpop.permute.xlu0 %2711
    %v2714 = vmul.f32 %v2693, %v2712
    %2716 = vrot.lane.b32.xlu0 %v2714, 32
    %v2717 = vpop.permute.xlu0 %2716
    %v2719 = vadd.f32 %v2704, %v2717
    %v2720 = vld [vmem:[%s565] sm:$0xff]
    %2722 = vrot.lane.b32.xlu0 %v2719, 64
    %v2723 = vpop.permute.xlu0 %2722
    %v2725 = vmul.f32 %v2720, %v2723
    %v2726 = vld [vmem:[%s572] sm:$0xff]
    %v2727 = vmul.f32 %v2726, %v2613
    %v2728 = vadd.f32 %v2725, %v2727
    %v2730 = vsel %vm95, %v2728, 0
    %2732 = vmatprep.subr.mxu0 0.0
    %2733 = vmatpush1.msra.mxu0 0.0
    %2734 = vmatprep.subr.mxu0 0.0
    %2735 = vmatpush1.msra.mxu0 0.0
    %2736 = vmatprep.subr.mxu0 0.0
    %2737 = vmatpush1.msra.mxu0 0.0
    %2738 = vmatprep.subr.mxu0 0.0
    %2739 = vmatpush1.msra.mxu0 0.0
    %2740 = vmatprep.subr.mxu0 0.0
    %2741 = vmatpush1.msra.mxu0 0.0
    %2742 = vmatprep.subr.mxu0 0.0
    %2743 = vmatpush1.msra.mxu0 0.0
    %2744 = vmatprep.subr.mxu0 0.0
    %2745 = vmatpush1.msra.mxu0 0.0
    %2746 = vmatprep.subr.mxu0 0.0
    %2747 = vmatpush1.msra.mxu0 0.0
    %2748 = vmatprep.subr.mxu0 0.0
    %2749 = vmatpush1.msra.mxu0 0.0
    %2750 = vmatprep.subr.mxu0 0.0
    %2751 = vmatpush1.msra.mxu0 0.0
    %2752 = vmatprep.subr.mxu0 0.0
    %2753 = vmatpush1.msra.mxu0 0.0
    %2754 = vmatprep.subr.mxu0 0.0
    %2755 = vmatpush1.msra.mxu0 0.0
    %2756 = vmatprep.subr.mxu0 0.0
    %2757 = vmatpush1.msra.mxu0 %v2245
    %2758 = vmatprep.subr.mxu0 0.0
    %2759 = vmatpush1.msra.mxu0 %v2244
    %2760 = vmatprep.subr.mxu0 0.0
    %2761 = vmatpush1.msra.mxu0 %v2243
    %2762 = vmatprep.subr.mxu0 0.0
    %2763 = vmatpush1.msra.mxu0 %v2242
    %2764 = vmatprep.subr.mxu0 0.0
    %2765 = vmatpush2.msra.mxu0 0.0
    %2766 = vmatprep.subr.mxu0 0.0
    %2767 = vmatpush2.msra.mxu0 0.0
    %2768 = vmatprep.subr.mxu0 0.0
    %2769 = vmatpush2.msra.mxu0 0.0
    %2770 = vmatprep.subr.mxu0 0.0
    %2771 = vmatpush2.msra.mxu0 0.0
    %2772 = vmatprep.subr.mxu0 0.0
    %2773 = vmatpush2.msra.mxu0 0.0
    %2774 = vmatprep.subr.mxu0 0.0
    %2775 = vmatpush2.msra.mxu0 0.0
    %2776 = vmatprep.subr.mxu0 0.0
    %2777 = vmatpush2.msra.mxu0 0.0
    %2778 = vmatprep.subr.mxu0 0.0
    %2779 = vmatpush2.msra.mxu0 0.0
    %2780 = vmatprep.subr.mxu0 0.0
    %2781 = vmatpush2.msra.mxu0 0.0
    %2782 = vmatprep.subr.mxu0 0.0
    %2783 = vmatpush2.msra.mxu0 0.0
    %2784 = vmatprep.subr.mxu0 0.0
    %2785 = vmatpush2.msra.mxu0 0.0
    %2786 = vmatprep.subr.mxu0 0.0
    %2787 = vmatpush2.msra.mxu0 0.0
    %2788 = vmatprep.subr.mxu0 0.0
    %2789 = vmatpush2.msra.mxu0 0.0
    %2790 = vmatprep.subr.mxu0 0.0
    %2791 = vmatpush2.msra.mxu0 0.0
    %2792 = vmatprep.subr.mxu0 0.0
    %2793 = vmatpush2.msra.mxu0 0.0
    %2794 = vmatprep.subr.mxu0 0.0
    %2795 = vmatpush2.msra.mxu0 0.0
    %2796 = vmatprep.mubr.f32.mxu0 0.0
    %2797 = vmatmul.mubr.f32.gmra.mxu0 %v2730
    %v2798 = vpop.f32.mrf.mxu0
    %v2799 = vadd.f32 %v2389, %v2798
    %v2800 = vpop.f32.mrf.mxu0
    %2801 = vdwg.mxu0
    %v2802 = vadd.f32 %v2362, %v2799
    %v2803 = vxor.u32 %v2802, 2147483648
    %v2804 = vmul.f32 %v2803, 1.442695
    %v2805 = vpow.pop %v2804
    %v2806 = vadd.f32 %v2805, 1.0
    %v2807 = vrcp.pop %v2806
    %v2808 = vmul.f32 1.0, %v2807
    %2810 = vrot.lane.b32.xlu0 %v2799, 64
    %v2811 = vpop.permute.xlu0 %2810
    %v2813 = vmul.f32 %v2808, %v2811
    %2815 = vrot.lane.b32.xlu0 %v2813, 64
    %v2816 = vpop.permute.xlu0 %2815
    %v2818 = vadd.f32 %v2362, %v2816
    %v2819 = vtanh.pop %v2818
    %2821 = vrot.lane.b32.xlu0 %v2819, 64
    %v2822 = vpop.permute.xlu0 %2821
    %v2824 = vsub.f32 %v2728, %v2822
    %2826 = vrot.lane.b32.xlu0 %v2824, 32
    %v2827 = vpop.permute.xlu0 %2826
    %v2829 = vmul.f32 %v2808, %v2827
    %2831 = vrot.lane.b32.xlu0 %v2829, 32
    %v2832 = vpop.permute.xlu0 %2831
    %v2834 = vadd.f32 %v2819, %v2832
    %v2835 = vld [vmem:[%s682] sm:$0xff]
    %2837 = vrot.lane.b32.xlu0 %v2834, 64
    %v2838 = vpop.permute.xlu0 %2837
    %v2840 = vmul.f32 %v2835, %v2838
    %v2841 = vld [vmem:[%s689] sm:$0xff]
    %v2842 = vmul.f32 %v2841, %v2728
    %v2843 = vadd.f32 %v2840, %v2842
    %v2845 = vsel %vm95, %v2843, 0
    %2847 = vmatprep.subr.mxu0 0.0
    %2848 = vmatpush1.msra.mxu0 0.0
    %2849 = vmatprep.subr.mxu0 0.0
    %2850 = vmatpush1.msra.mxu0 0.0
    %2851 = vmatprep.subr.mxu0 0.0
    %2852 = vmatpush1.msra.mxu0 0.0
    %2853 = vmatprep.subr.mxu0 0.0
    %2854 = vmatpush1.msra.mxu0 0.0
    %2855 = vmatprep.subr.mxu0 0.0
    %2856 = vmatpush1.msra.mxu0 0.0
    %2857 = vmatprep.subr.mxu0 0.0
    %2858 = vmatpush1.msra.mxu0 0.0
    %2859 = vmatprep.subr.mxu0 0.0
    %2860 = vmatpush1.msra.mxu0 0.0
    %2861 = vmatprep.subr.mxu0 0.0
    %2862 = vmatpush1.msra.mxu0 0.0
    %2863 = vmatprep.subr.mxu0 0.0
    %2864 = vmatpush1.msra.mxu0 0.0
    %2865 = vmatprep.subr.mxu0 0.0
    %2866 = vmatpush1.msra.mxu0 0.0
    %2867 = vmatprep.subr.mxu0 0.0
    %2868 = vmatpush1.msra.mxu0 0.0
    %2869 = vmatprep.subr.mxu0 0.0
    %2870 = vmatpush1.msra.mxu0 0.0
    %2871 = vmatprep.subr.mxu0 0.0
    %2872 = vmatpush1.msra.mxu0 %v2245
    %2873 = vmatprep.subr.mxu0 0.0
    %2874 = vmatpush1.msra.mxu0 %v2244
    %2875 = vmatprep.subr.mxu0 0.0
    %2876 = vmatpush1.msra.mxu0 %v2243
    %2877 = vmatprep.subr.mxu0 0.0
    %2878 = vmatpush1.msra.mxu0 %v2242
    %2879 = vmatprep.subr.mxu0 0.0
    %2880 = vmatpush2.msra.mxu0 0.0
    %2881 = vmatprep.subr.mxu0 0.0
    %2882 = vmatpush2.msra.mxu0 0.0
    %2883 = vmatprep.subr.mxu0 0.0
    %2884 = vmatpush2.msra.mxu0 0.0
    %2885 = vmatprep.subr.mxu0 0.0
    %2886 = vmatpush2.msra.mxu0 0.0
    %2887 = vmatprep.subr.mxu0 0.0
    %2888 = vmatpush2.msra.mxu0 0.0
    %2889 = vmatprep.subr.mxu0 0.0
    %2890 = vmatpush2.msra.mxu0 0.0
    %2891 = vmatprep.subr.mxu0 0.0
    %2892 = vmatpush2.msra.mxu0 0.0
    %2893 = vmatprep.subr.mxu0 0.0
    %2894 = vmatpush2.msra.mxu0 0.0
    %2895 = vmatprep.subr.mxu0 0.0
    %2896 = vmatpush2.msra.mxu0 0.0
    %2897 = vmatprep.subr.mxu0 0.0
    %2898 = vmatpush2.msra.mxu0 0.0
    %2899 = vmatprep.subr.mxu0 0.0
    %2900 = vmatpush2.msra.mxu0 0.0
    %2901 = vmatprep.subr.mxu0 0.0
    %2902 = vmatpush2.msra.mxu0 0.0
    %2903 = vmatprep.subr.mxu0 0.0
    %2904 = vmatpush2.msra.mxu0 0.0
    %2905 = vmatprep.subr.mxu0 0.0
    %2906 = vmatpush2.msra.mxu0 0.0
    %2907 = vmatprep.subr.mxu0 0.0
    %2908 = vmatpush2.msra.mxu0 0.0
    %2909 = vmatprep.subr.mxu0 0.0
    %2910 = vmatpush2.msra.mxu0 0.0
    %2911 = vmatprep.mubr.f32.mxu0 0.0
    %2912 = vmatmul.mubr.f32.gmra.mxu0 %v2845
    %v2913 = vpop.f32.mrf.mxu0
    %v2914 = vadd.f32 %v2389, %v2913
    %v2915 = vpop.f32.mrf.mxu0
    %2916 = vdwg.mxu0
    %v2917 = vadd.f32 %v2367, %v2914
    %v2918 = vxor.u32 %v2917, 2147483648
    %v2919 = vmul.f32 %v2918, 1.442695
    %v2920 = vpow.pop %v2919
    %v2921 = vadd.f32 %v2920, 1.0
    %v2922 = vrcp.pop %v2921
    %v2923 = vmul.f32 1.0, %v2922
    %2925 = vrot.lane.b32.xlu0 %v2914, 64
    %v2926 = vpop.permute.xlu0 %2925
    %v2928 = vmul.f32 %v2923, %v2926
    %2930 = vrot.lane.b32.xlu0 %v2928, 64
    %v2931 = vpop.permute.xlu0 %2930
    %v2933 = vadd.f32 %v2367, %v2931
    %v2934 = vtanh.pop %v2933
    %2936 = vrot.lane.b32.xlu0 %v2934, 64
    %v2937 = vpop.permute.xlu0 %2936
    %v2939 = vsub.f32 %v2843, %v2937
    %2941 = vrot.lane.b32.xlu0 %v2939, 32
    %v2942 = vpop.permute.xlu0 %2941
    %v2944 = vmul.f32 %v2923, %v2942
    %2946 = vrot.lane.b32.xlu0 %v2944, 32
    %v2947 = vpop.permute.xlu0 %2946
    %v2949 = vadd.f32 %v2934, %v2947
    %v2950 = vld [vmem:[%s799] sm:$0xff]
    %2952 = vrot.lane.b32.xlu0 %v2949, 64
    %v2953 = vpop.permute.xlu0 %2952
    %v2955 = vmul.f32 %v2950, %v2953
    %v2956 = vld [vmem:[%s806] sm:$0xff]
    %v2957 = vmul.f32 %v2956, %v2843
    %v2958 = vadd.f32 %v2955, %v2957
    %v2960 = vsel %vm95, %v2958, 0
    %2962 = vmatprep.subr.mxu0 0.0
    %2963 = vmatpush1.msra.mxu0 0.0
    %2964 = vmatprep.subr.mxu0 0.0
    %2965 = vmatpush1.msra.mxu0 0.0
    %2966 = vmatprep.subr.mxu0 0.0
    %2967 = vmatpush1.msra.mxu0 0.0
    %2968 = vmatprep.subr.mxu0 0.0
    %2969 = vmatpush1.msra.mxu0 0.0
    %2970 = vmatprep.subr.mxu0 0.0
    %2971 = vmatpush1.msra.mxu0 0.0
    %2972 = vmatprep.subr.mxu0 0.0
    %2973 = vmatpush1.msra.mxu0 0.0
    %2974 = vmatprep.subr.mxu0 0.0
    %2975 = vmatpush1.msra.mxu0 0.0
    %2976 = vmatprep.subr.mxu0 0.0
    %2977 = vmatpush1.msra.mxu0 0.0
    %2978 = vmatprep.subr.mxu0 0.0
    %2979 = vmatpush1.msra.mxu0 0.0
    %2980 = vmatprep.subr.mxu0 0.0
    %2981 = vmatpush1.msra.mxu0 0.0
    %2982 = vmatprep.subr.mxu0 0.0
    %2983 = vmatpush1.msra.mxu0 0.0
    %2984 = vmatprep.subr.mxu0 0.0
    %2985 = vmatpush1.msra.mxu0 0.0
    %2986 = vmatprep.subr.mxu0 0.0
    %2987 = vmatpush1.msra.mxu0 %v2245
    %2988 = vmatprep.subr.mxu0 0.0
    %2989 = vmatpush1.msra.mxu0 %v2244
    %2990 = vmatprep.subr.mxu0 0.0
    %2991 = vmatpush1.msra.mxu0 %v2243
    %2992 = vmatprep.subr.mxu0 0.0
    %2993 = vmatpush1.msra.mxu0 %v2242
    %2994 = vmatprep.subr.mxu0 0.0
    %2995 = vmatpush2.msra.mxu0 0.0
    %2996 = vmatprep.subr.mxu0 0.0
    %2997 = vmatpush2.msra.mxu0 0.0
    %2998 = vmatprep.subr.mxu0 0.0
    %2999 = vmatpush2.msra.mxu0 0.0
    %3000 = vmatprep.subr.mxu0 0.0
    %3001 = vmatpush2.msra.mxu0 0.0
    %3002 = vmatprep.subr.mxu0 0.0
    %3003 = vmatpush2.msra.mxu0 0.0
    %3004 = vmatprep.subr.mxu0 0.0
    %3005 = vmatpush2.msra.mxu0 0.0
    %3006 = vmatprep.subr.mxu0 0.0
    %3007 = vmatpush2.msra.mxu0 0.0
    %3008 = vmatprep.subr.mxu0 0.0
    %3009 = vmatpush2.msra.mxu0 0.0
    %3010 = vmatprep.subr.mxu0 0.0
    %3011 = vmatpush2.msra.mxu0 0.0
    %3012 = vmatprep.subr.mxu0 0.0
    %3013 = vmatpush2.msra.mxu0 0.0
    %3014 = vmatprep.subr.mxu0 0.0
    %3015 = vmatpush2.msra.mxu0 0.0
    %3016 = vmatprep.subr.mxu0 0.0
    %3017 = vmatpush2.msra.mxu0 0.0
    %3018 = vmatprep.subr.mxu0 0.0
    %3019 = vmatpush2.msra.mxu0 0.0
    %3020 = vmatprep.subr.mxu0 0.0
    %3021 = vmatpush2.msra.mxu0 0.0
    %3022 = vmatprep.subr.mxu0 0.0
    %3023 = vmatpush2.msra.mxu0 0.0
    %3024 = vmatprep.subr.mxu0 0.0
    %3025 = vmatpush2.msra.mxu0 0.0
    %3026 = vmatprep.mubr.f32.mxu0 0.0
    %3027 = vmatmul.mubr.f32.gmra.mxu0 %v2960
    %v3028 = vpop.f32.mrf.mxu0
    %v3029 = vadd.f32 %v2389, %v3028
    %v3030 = vpop.f32.mrf.mxu0
    %3031 = vdwg.mxu0
    %v3032 = vadd.f32 %v2372, %v3029
    %v3033 = vxor.u32 %v3032, 2147483648
    %v3034 = vmul.f32 %v3033, 1.442695
    %v3035 = vpow.pop %v3034
    %v3036 = vadd.f32 %v3035, 1.0
    %v3037 = vrcp.pop %v3036
    %v3038 = vmul.f32 1.0, %v3037
    %3040 = vrot.lane.b32.xlu0 %v3029, 64
    %v3041 = vpop.permute.xlu0 %3040
    %v3043 = vmul.f32 %v3038, %v3041
    %3045 = vrot.lane.b32.xlu0 %v3043, 64
    %v3046 = vpop.permute.xlu0 %3045
    %v3048 = vadd.f32 %v2372, %v3046
    %v3049 = vtanh.pop %v3048
    %3051 = vrot.lane.b32.xlu0 %v3049, 64
    %v3052 = vpop.permute.xlu0 %3051
    %v3054 = vsub.f32 %v2958, %v3052
    %3056 = vrot.lane.b32.xlu0 %v3054, 32
    %v3057 = vpop.permute.xlu0 %3056
    %v3059 = vmul.f32 %v3038, %v3057
    %3061 = vrot.lane.b32.xlu0 %v3059, 32
    %v3062 = vpop.permute.xlu0 %3061
    %v3064 = vadd.f32 %v3049, %v3062
    %v3065 = vld [vmem:[%s916] sm:$0xff]
    %3067 = vrot.lane.b32.xlu0 %v3064, 64
    %v3068 = vpop.permute.xlu0 %3067
    %v3070 = vmul.f32 %v3065, %v3068
    %v3071 = vld [vmem:[%s923] sm:$0xff]
    %v3072 = vmul.f32 %v3071, %v2958
    %v3073 = vadd.f32 %v3070, %v3072
    %v3075 = vsel %vm95, %v3073, 0
    %3077 = vmatprep.subr.mxu0 0.0
    %3078 = vmatpush1.msra.mxu0 0.0
    %3079 = vmatprep.subr.mxu0 0.0
    %3080 = vmatpush1.msra.mxu0 0.0
    %3081 = vmatprep.subr.mxu0 0.0
    %3082 = vmatpush1.msra.mxu0 0.0
    %3083 = vmatprep.subr.mxu0 0.0
    %3084 = vmatpush1.msra.mxu0 0.0
    %3085 = vmatprep.subr.mxu0 0.0
    %3086 = vmatpush1.msra.mxu0 0.0
    %3087 = vmatprep.subr.mxu0 0.0
    %3088 = vmatpush1.msra.mxu0 0.0
    %3089 = vmatprep.subr.mxu0 0.0
    %3090 = vmatpush1.msra.mxu0 0.0
    %3091 = vmatprep.subr.mxu0 0.0
    %3092 = vmatpush1.msra.mxu0 0.0
    %3093 = vmatprep.subr.mxu0 0.0
    %3094 = vmatpush1.msra.mxu0 0.0
    %3095 = vmatprep.subr.mxu0 0.0
    %3096 = vmatpush1.msra.mxu0 0.0
    %3097 = vmatprep.subr.mxu0 0.0
    %3098 = vmatpush1.msra.mxu0 0.0
    %3099 = vmatprep.subr.mxu0 0.0
    %3100 = vmatpush1.msra.mxu0 0.0
    %3101 = vmatprep.subr.mxu0 0.0
    %3102 = vmatpush1.msra.mxu0 %v2245
    %3103 = vmatprep.subr.mxu0 0.0
    %3104 = vmatpush1.msra.mxu0 %v2244
    %3105 = vmatprep.subr.mxu0 0.0
    %3106 = vmatpush1.msra.mxu0 %v2243
    %3107 = vmatprep.subr.mxu0 0.0
    %3108 = vmatpush1.msra.mxu0 %v2242
    %3109 = vmatprep.subr.mxu0 0.0
    %3110 = vmatpush2.msra.mxu0 0.0
    %3111 = vmatprep.subr.mxu0 0.0
    %3112 = vmatpush2.msra.mxu0 0.0
    %3113 = vmatprep.subr.mxu0 0.0
    %3114 = vmatpush2.msra.mxu0 0.0
    %3115 = vmatprep.subr.mxu0 0.0
    %3116 = vmatpush2.msra.mxu0 0.0
    %3117 = vmatprep.subr.mxu0 0.0
    %3118 = vmatpush2.msra.mxu0 0.0
    %3119 = vmatprep.subr.mxu0 0.0
    %3120 = vmatpush2.msra.mxu0 0.0
    %3121 = vmatprep.subr.mxu0 0.0
    %3122 = vmatpush2.msra.mxu0 0.0
    %3123 = vmatprep.subr.mxu0 0.0
    %3124 = vmatpush2.msra.mxu0 0.0
    %3125 = vmatprep.subr.mxu0 0.0
    %3126 = vmatpush2.msra.mxu0 0.0
    %3127 = vmatprep.subr.mxu0 0.0
    %3128 = vmatpush2.msra.mxu0 0.0
    %3129 = vmatprep.subr.mxu0 0.0
    %3130 = vmatpush2.msra.mxu0 0.0
    %3131 = vmatprep.subr.mxu0 0.0
    %3132 = vmatpush2.msra.mxu0 0.0
    %3133 = vmatprep.subr.mxu0 0.0
    %3134 = vmatpush2.msra.mxu0 0.0
    %3135 = vmatprep.subr.mxu0 0.0
    %3136 = vmatpush2.msra.mxu0 0.0
    %3137 = vmatprep.subr.mxu0 0.0
    %3138 = vmatpush2.msra.mxu0 0.0
    %3139 = vmatprep.subr.mxu0 0.0
    %3140 = vmatpush2.msra.mxu0 0.0
    %3141 = vmatprep.mubr.f32.mxu0 0.0
    %3142 = vmatmul.mubr.f32.gmra.mxu0 %v3075
    %v3143 = vpop.f32.mrf.mxu0
    %v3144 = vadd.f32 %v2389, %v3143
    %v3145 = vpop.f32.mrf.mxu0
    %3146 = vdwg.mxu0
    %v3147 = vadd.f32 %v2377, %v3144
    %v3148 = vxor.u32 %v3147, 2147483648
    %v3149 = vmul.f32 %v3148, 1.442695
    %v3150 = vpow.pop %v3149
    %v3151 = vadd.f32 %v3150, 1.0
    %v3152 = vrcp.pop %v3151
    %v3153 = vmul.f32 1.0, %v3152
    %3155 = vrot.lane.b32.xlu0 %v3144, 64
    %v3156 = vpop.permute.xlu0 %3155
    %v3158 = vmul.f32 %v3153, %v3156
    %3160 = vrot.lane.b32.xlu0 %v3158, 64
    %v3161 = vpop.permute.xlu0 %3160
    %v3163 = vadd.f32 %v2377, %v3161
    %v3164 = vtanh.pop %v3163
    %3166 = vrot.lane.b32.xlu0 %v3164, 64
    %v3167 = vpop.permute.xlu0 %3166
    %v3169 = vsub.f32 %v3073, %v3167
    %3171 = vrot.lane.b32.xlu0 %v3169, 32
    %v3172 = vpop.permute.xlu0 %3171
    %v3174 = vmul.f32 %v3153, %v3172
    %3176 = vrot.lane.b32.xlu0 %v3174, 32
    %v3177 = vpop.permute.xlu0 %3176
    %v3179 = vadd.f32 %v3164, %v3177
    %v3180 = vld [vmem:[%s1033] sm:$0xff]
    %3182 = vrot.lane.b32.xlu0 %v3179, 64
    %v3183 = vpop.permute.xlu0 %3182
    %v3185 = vmul.f32 %v3180, %v3183
    %v3186 = vld [vmem:[%s1040] sm:$0xff]
    %v3187 = vmul.f32 %v3186, %v3073
    %v3188 = vadd.f32 %v3185, %v3187
    %v3190 = vsel %vm95, %v3188, 0
    %3192 = vmatprep.subr.mxu0 0.0
    %3193 = vmatpush1.msra.mxu0 0.0
    %3194 = vmatprep.subr.mxu0 0.0
    %3195 = vmatpush1.msra.mxu0 0.0
    %3196 = vmatprep.subr.mxu0 0.0
    %3197 = vmatpush1.msra.mxu0 0.0
    %3198 = vmatprep.subr.mxu0 0.0
    %3199 = vmatpush1.msra.mxu0 0.0
    %3200 = vmatprep.subr.mxu0 0.0
    %3201 = vmatpush1.msra.mxu0 0.0
    %3202 = vmatprep.subr.mxu0 0.0
    %3203 = vmatpush1.msra.mxu0 0.0
    %3204 = vmatprep.subr.mxu0 0.0
    %3205 = vmatpush1.msra.mxu0 0.0
    %3206 = vmatprep.subr.mxu0 0.0
    %3207 = vmatpush1.msra.mxu0 0.0
    %3208 = vmatprep.subr.mxu0 0.0
    %3209 = vmatpush1.msra.mxu0 0.0
    %3210 = vmatprep.subr.mxu0 0.0
    %3211 = vmatpush1.msra.mxu0 0.0
    %3212 = vmatprep.subr.mxu0 0.0
    %3213 = vmatpush1.msra.mxu0 0.0
    %3214 = vmatprep.subr.mxu0 0.0
    %3215 = vmatpush1.msra.mxu0 0.0
    %3216 = vmatprep.subr.mxu0 0.0
    %3217 = vmatpush1.msra.mxu0 %v2245
    %3218 = vmatprep.subr.mxu0 0.0
    %3219 = vmatpush1.msra.mxu0 %v2244
    %3220 = vmatprep.subr.mxu0 0.0
    %3221 = vmatpush1.msra.mxu0 %v2243
    %3222 = vmatprep.subr.mxu0 0.0
    %3223 = vmatpush1.msra.mxu0 %v2242
    %3224 = vmatprep.subr.mxu0 0.0
    %3225 = vmatpush2.msra.mxu0 0.0
    %3226 = vmatprep.subr.mxu0 0.0
    %3227 = vmatpush2.msra.mxu0 0.0
    %3228 = vmatprep.subr.mxu0 0.0
    %3229 = vmatpush2.msra.mxu0 0.0
    %3230 = vmatprep.subr.mxu0 0.0
    %3231 = vmatpush2.msra.mxu0 0.0
    %3232 = vmatprep.subr.mxu0 0.0
    %3233 = vmatpush2.msra.mxu0 0.0
    %3234 = vmatprep.subr.mxu0 0.0
    %3235 = vmatpush2.msra.mxu0 0.0
    %3236 = vmatprep.subr.mxu0 0.0
    %3237 = vmatpush2.msra.mxu0 0.0
    %3238 = vmatprep.subr.mxu0 0.0
    %3239 = vmatpush2.msra.mxu0 0.0
    %3240 = vmatprep.subr.mxu0 0.0
    %3241 = vmatpush2.msra.mxu0 0.0
    %3242 = vmatprep.subr.mxu0 0.0
    %3243 = vmatpush2.msra.mxu0 0.0
    %3244 = vmatprep.subr.mxu0 0.0
    %3245 = vmatpush2.msra.mxu0 0.0
    %3246 = vmatprep.subr.mxu0 0.0
    %3247 = vmatpush2.msra.mxu0 0.0
    %3248 = vmatprep.subr.mxu0 0.0
    %3249 = vmatpush2.msra.mxu0 0.0
    %3250 = vmatprep.subr.mxu0 0.0
    %3251 = vmatpush2.msra.mxu0 0.0
    %3252 = vmatprep.subr.mxu0 0.0
    %3253 = vmatpush2.msra.mxu0 0.0
    %3254 = vmatprep.subr.mxu0 0.0
    %3255 = vmatpush2.msra.mxu0 0.0
    %3256 = vmatprep.mubr.f32.mxu0 0.0
    %3257 = vmatmul.mubr.f32.gmra.mxu0 %v3190
    %v3258 = vpop.f32.mrf.mxu0
    %v3259 = vadd.f32 %v2389, %v3258
    %v3260 = vpop.f32.mrf.mxu0
    %3261 = vdwg.mxu0
    %v3262 = vadd.f32 %v2382, %v3259
    %v3263 = vxor.u32 %v3262, 2147483648
    %v3264 = vmul.f32 %v3263, 1.442695
    %v3265 = vpow.pop %v3264
    %v3266 = vadd.f32 %v3265, 1.0
    %v3267 = vrcp.pop %v3266
    %v3268 = vmul.f32 1.0, %v3267
    %3270 = vrot.lane.b32.xlu0 %v3259, 64
    %v3271 = vpop.permute.xlu0 %3270
    %v3273 = vmul.f32 %v3268, %v3271
    %3275 = vrot.lane.b32.xlu0 %v3273, 64
    %v3276 = vpop.permute.xlu0 %3275
    %v3278 = vadd.f32 %v2382, %v3276
    %v3279 = vtanh.pop %v3278
    %3281 = vrot.lane.b32.xlu0 %v3279, 64
    %v3282 = vpop.permute.xlu0 %3281
    %v3284 = vsub.f32 %v3188, %v3282
    %3286 = vrot.lane.b32.xlu0 %v3284, 32
    %v3287 = vpop.permute.xlu0 %3286
    %v3289 = vmul.f32 %v3268, %v3287
    %3291 = vrot.lane.b32.xlu0 %v3289, 32
    %v3292 = vpop.permute.xlu0 %3291
    %v3294 = vadd.f32 %v3279, %v3292
    %v3295 = vld [vmem:[%s1150] sm:$0xff]
    %3297 = vrot.lane.b32.xlu0 %v3294, 64
    %v3298 = vpop.permute.xlu0 %3297
    %v3300 = vmul.f32 %v3295, %v3298
    %v3301 = vld [vmem:[%s1157] sm:$0xff]
    %v3302 = vmul.f32 %v3301, %v3188
    %v3303 = vadd.f32 %v3300, %v3302
    %3305 = vrot.lane.b32.xlu0 %v3303, 64
    %v3306 = vpop.permute.xlu0 %3305
    %vm3308 = vcmask 785920
    %3309 = vst.msk [vmem:[#allocation9] sm:$0xff] %vm3308, %v3306
    %s3310 = scalar_lea.vmem [#allocation5], 96
    %v3311 = vld [vmem:[%s3310] sm:$0xff]
    %v3312 = vld [vmem:[%s3310 + $0x8] sm:$0xff]
    %v3313 = vld [vmem:[%s3310 + $0x10] sm:$0xff]
    %v3314 = vld [vmem:[%s3310 + $0x18] sm:$0xff]
    %s3315 = scalar_lea.vmem [#allocation7], 96
    %v3316 = vld [vmem:[%s3315] sm:$0xff]
    %v3317 = vld [vmem:[%s3315 + $0x8] sm:$0xff]
    %v3318 = vld [vmem:[%s3315 + $0x10] sm:$0xff]
    %v3319 = vld [vmem:[%s3315 + $0x18] sm:$0xff]
    %s3320 = scalar_lea.vmem %s5, 3
    %v3321 = vld [vmem:[%s3320] sm:$0x1]
    %s3322 = scalar_lea.vmem %s6, 3
    %v3323 = vld [vmem:[%s3322] sm:$0x1]
    %v3325 = vlaneseq
    %v3326 = vshrl.u32 %v3325, 7
    %v3327 = vsub.s32 0, %v3326
    %v3328 = vrot.slane %v3321, %v3327
    %v3331 = vsel %vm95, %v2495, 0
    %v3334 = vsel %vm95, %v2610, 0
    %v3337 = vsel %vm95, %v2725, 0
    %v3340 = vsel %vm95, %v2840, 0
    %v3343 = vsel %vm95, %v2955, 0
    %v3346 = vsel %vm95, %v3070, 0
    %v3349 = vsel %vm95, %v3185, 0
    %v3352 = vsel %vm95, %v3300, 0
    %3354 = vmatprep.subr.mxu0 0.0
    %3355 = vmatpush1.msra.mxu0 0.0
    %3356 = vmatprep.subr.mxu0 0.0
    %3357 = vmatpush1.msra.mxu0 0.0
    %3358 = vmatprep.subr.mxu0 0.0
    %3359 = vmatpush1.msra.mxu0 0.0
    %3360 = vmatprep.subr.mxu0 0.0
    %3361 = vmatpush1.msra.mxu0 0.0
    %3362 = vmatprep.subr.mxu0 0.0
    %3363 = vmatpush1.msra.mxu0 0.0
    %3364 = vmatprep.subr.mxu0 0.0
    %3365 = vmatpush1.msra.mxu0 0.0
    %3366 = vmatprep.subr.mxu0 0.0
    %3367 = vmatpush1.msra.mxu0 0.0
    %3368 = vmatprep.subr.mxu0 0.0
    %3369 = vmatpush1.msra.mxu0 0.0
    %3370 = vmatprep.subr.mxu0 0.0
    %3371 = vmatpush1.msra.mxu0 0.0
    %3372 = vmatprep.subr.mxu0 0.0
    %3373 = vmatpush1.msra.mxu0 0.0
    %3374 = vmatprep.subr.mxu0 0.0
    %3375 = vmatpush1.msra.mxu0 0.0
    %3376 = vmatprep.subr.mxu0 0.0
    %3377 = vmatpush1.msra.mxu0 0.0
    %3378 = vmatprep.subr.mxu0 0.0
    %3379 = vmatpush1.msra.mxu0 %v3314
    %3380 = vmatprep.subr.mxu0 0.0
    %3381 = vmatpush1.msra.mxu0 %v3313
    %3382 = vmatprep.subr.mxu0 0.0
    %3383 = vmatpush1.msra.mxu0 %v3312
    %3384 = vmatprep.subr.mxu0 0.0
    %3385 = vmatpush1.msra.mxu0 %v3311
    %3386 = vmatprep.subr.mxu0 0.0
    %3387 = vmatpush2.msra.mxu0 0.0
    %3388 = vmatprep.subr.mxu0 0.0
    %3389 = vmatpush2.msra.mxu0 0.0
    %3390 = vmatprep.subr.mxu0 0.0
    %3391 = vmatpush2.msra.mxu0 0.0
    %3392 = vmatprep.subr.mxu0 0.0
    %3393 = vmatpush2.msra.mxu0 0.0
    %3394 = vmatprep.subr.mxu0 0.0
    %3395 = vmatpush2.msra.mxu0 0.0
    %3396 = vmatprep.subr.mxu0 0.0
    %3397 = vmatpush2.msra.mxu0 0.0
    %3398 = vmatprep.subr.mxu0 0.0
    %3399 = vmatpush2.msra.mxu0 0.0
    %3400 = vmatprep.subr.mxu0 0.0
    %3401 = vmatpush2.msra.mxu0 0.0
    %3402 = vmatprep.subr.mxu0 0.0
    %3403 = vmatpush2.msra.mxu0 0.0
    %3404 = vmatprep.subr.mxu0 0.0
    %3405 = vmatpush2.msra.mxu0 0.0
    %3406 = vmatprep.subr.mxu0 0.0
    %3407 = vmatpush2.msra.mxu0 0.0
    %3408 = vmatprep.subr.mxu0 0.0
    %3409 = vmatpush2.msra.mxu0 0.0
    %3410 = vmatprep.subr.mxu0 0.0
    %3411 = vmatpush2.msra.mxu0 0.0
    %3412 = vmatprep.subr.mxu0 0.0
    %3413 = vmatpush2.msra.mxu0 0.0
    %3414 = vmatprep.subr.mxu0 0.0
    %3415 = vmatpush2.msra.mxu0 0.0
    %3416 = vmatprep.subr.mxu0 0.0
    %3417 = vmatpush2.msra.mxu0 0.0
    %3418 = vmatprep.mubr.f32.mxu0 0.0
    %3419 = vmatmul.mubr.f32.gmra.mxu0 %v3331
    %v3420 = vpop.f32.mrf.mxu0
    %v3421 = vadd.f32 %v3328, %v3420
    %v3422 = vpop.f32.mrf.mxu0
    %3423 = vmatprep.mubr.f32.mxu0 0.0
    %3424 = vmatmul.mubr.f32.gmra.mxu0 %v3334
    %v3425 = vpop.f32.mrf.mxu0
    %v3426 = vadd.f32 %v3328, %v3425
    %v3427 = vpop.f32.mrf.mxu0
    %3428 = vmatprep.mubr.f32.mxu0 0.0
    %3429 = vmatmul.mubr.f32.gmra.mxu0 %v3337
    %v3430 = vpop.f32.mrf.mxu0
    %v3431 = vadd.f32 %v3328, %v3430
    %v3432 = vpop.f32.mrf.mxu0
    %3433 = vmatprep.mubr.f32.mxu0 0.0
    %3434 = vmatmul.mubr.f32.gmra.mxu0 %v3340
    %v3435 = vpop.f32.mrf.mxu0
    %v3436 = vadd.f32 %v3328, %v3435
    %v3437 = vpop.f32.mrf.mxu0
    %3438 = vmatprep.mubr.f32.mxu0 0.0
    %3439 = vmatmul.mubr.f32.gmra.mxu0 %v3343
    %v3440 = vpop.f32.mrf.mxu0
    %v3441 = vadd.f32 %v3328, %v3440
    %v3442 = vpop.f32.mrf.mxu0
    %3443 = vmatprep.mubr.f32.mxu0 0.0
    %3444 = vmatmul.mubr.f32.gmra.mxu0 %v3346
    %v3445 = vpop.f32.mrf.mxu0
    %v3446 = vadd.f32 %v3328, %v3445
    %v3447 = vpop.f32.mrf.mxu0
    %3448 = vmatprep.mubr.f32.mxu0 0.0
    %3449 = vmatmul.mubr.f32.gmra.mxu0 %v3349
    %v3450 = vpop.f32.mrf.mxu0
    %v3451 = vadd.f32 %v3328, %v3450
    %v3452 = vpop.f32.mrf.mxu0
    %3453 = vmatprep.mubr.f32.mxu0 0.0
    %3454 = vmatmul.mubr.f32.gmra.mxu0 %v3352
    %v3455 = vpop.f32.mrf.mxu0
    %v3456 = vadd.f32 %v3328, %v3455
    %v3457 = vpop.f32.mrf.mxu0
    %3458 = vdwg.mxu0
    %v3460 = vlaneseq
    %v3461 = vshrl.u32 %v3460, 7
    %v3462 = vsub.s32 0, %v3461
    %v3463 = vrot.slane %v3323, %v3462
    %3465 = vmatprep.subr.mxu0 0.0
    %3466 = vmatpush1.msra.mxu0 0.0
    %3467 = vmatprep.subr.mxu0 0.0
    %3468 = vmatpush1.msra.mxu0 0.0
    %3469 = vmatprep.subr.mxu0 0.0
    %3470 = vmatpush1.msra.mxu0 0.0
    %3471 = vmatprep.subr.mxu0 0.0
    %3472 = vmatpush1.msra.mxu0 0.0
    %3473 = vmatprep.subr.mxu0 0.0
    %3474 = vmatpush1.msra.mxu0 0.0
    %3475 = vmatprep.subr.mxu0 0.0
    %3476 = vmatpush1.msra.mxu0 0.0
    %3477 = vmatprep.subr.mxu0 0.0
    %3478 = vmatpush1.msra.mxu0 0.0
    %3479 = vmatprep.subr.mxu0 0.0
    %3480 = vmatpush1.msra.mxu0 0.0
    %3481 = vmatprep.subr.mxu0 0.0
    %3482 = vmatpush1.msra.mxu0 0.0
    %3483 = vmatprep.subr.mxu0 0.0
    %3484 = vmatpush1.msra.mxu0 0.0
    %3485 = vmatprep.subr.mxu0 0.0
    %3486 = vmatpush1.msra.mxu0 0.0
    %3487 = vmatprep.subr.mxu0 0.0
    %3488 = vmatpush1.msra.mxu0 0.0
    %3489 = vmatprep.subr.mxu0 0.0
    %3490 = vmatpush1.msra.mxu0 %v3319
    %3491 = vmatprep.subr.mxu0 0.0
    %3492 = vmatpush1.msra.mxu0 %v3318
    %3493 = vmatprep.subr.mxu0 0.0
    %3494 = vmatpush1.msra.mxu0 %v3317
    %3495 = vmatprep.subr.mxu0 0.0
    %3496 = vmatpush1.msra.mxu0 %v3316
    %3497 = vmatprep.subr.mxu0 0.0
    %3498 = vmatpush2.msra.mxu0 0.0
    %3499 = vmatprep.subr.mxu0 0.0
    %3500 = vmatpush2.msra.mxu0 0.0
    %3501 = vmatprep.subr.mxu0 0.0
    %3502 = vmatpush2.msra.mxu0 0.0
    %3503 = vmatprep.subr.mxu0 0.0
    %3504 = vmatpush2.msra.mxu0 0.0
    %3505 = vmatprep.subr.mxu0 0.0
    %3506 = vmatpush2.msra.mxu0 0.0
    %3507 = vmatprep.subr.mxu0 0.0
    %3508 = vmatpush2.msra.mxu0 0.0
    %3509 = vmatprep.subr.mxu0 0.0
    %3510 = vmatpush2.msra.mxu0 0.0
    %3511 = vmatprep.subr.mxu0 0.0
    %3512 = vmatpush2.msra.mxu0 0.0
    %3513 = vmatprep.subr.mxu0 0.0
    %3514 = vmatpush2.msra.mxu0 0.0
    %3515 = vmatprep.subr.mxu0 0.0
    %3516 = vmatpush2.msra.mxu0 0.0
    %3517 = vmatprep.subr.mxu0 0.0
    %3518 = vmatpush2.msra.mxu0 0.0
    %3519 = vmatprep.subr.mxu0 0.0
    %3520 = vmatpush2.msra.mxu0 0.0
    %3521 = vmatprep.subr.mxu0 0.0
    %3522 = vmatpush2.msra.mxu0 0.0
    %3523 = vmatprep.subr.mxu0 0.0
    %3524 = vmatpush2.msra.mxu0 0.0
    %3525 = vmatprep.subr.mxu0 0.0
    %3526 = vmatpush2.msra.mxu0 0.0
    %3527 = vmatprep.subr.mxu0 0.0
    %3528 = vmatpush2.msra.mxu0 0.0
    %3529 = vmatprep.mubr.f32.mxu0 0.0
    %3530 = vmatmul.mubr.f32.gmra.mxu0 %v232
    %v3531 = vpop.f32.mrf.mxu0
    %v3532 = vadd.f32 %v3463, %v3531
    %v3533 = vpop.f32.mrf.mxu0
    %3534 = vdwg.mxu0
    %v3535 = vadd.f32 %v3421, %v3532
    %v3536 = vxor.u32 %v3535, 2147483648
    %v3537 = vmul.f32 %v3536, 1.442695
    %v3538 = vpow.pop %v3537
    %v3539 = vadd.f32 %v3538, 1.0
    %v3540 = vrcp.pop %v3539
    %v3541 = vmul.f32 1.0, %v3540
    %3543 = vrot.lane.b32.xlu0 %v3532, 64
    %v3544 = vpop.permute.xlu0 %3543
    %v3546 = vmul.f32 %v3541, %v3544
    %3548 = vrot.lane.b32.xlu0 %v3546, 64
    %v3549 = vpop.permute.xlu0 %3548
    %v3551 = vadd.f32 %v3421, %v3549
    %v3552 = vtanh.pop %v3551
    %v3553 = vsub.f32 0.0, %v3552
    %3555 = vrot.lane.b32.xlu0 %v3553, 96
    %v3556 = vpop.permute.xlu0 %3555
    %v3558 = vmul.f32 %v3541, %v3556
    %3560 = vrot.lane.b32.xlu0 %v3558, 32
    %v3561 = vpop.permute.xlu0 %3560
    %v3563 = vadd.f32 %v3552, %v3561
    %v3564 = vld [vmem:[%s1] sm:$0xff]
    %3566 = vrot.lane.b32.xlu0 %v3563, 64
    %v3567 = vpop.permute.xlu0 %3566
    %v3569 = vmul.f32 %v3564, %v3567
    %v3570 = vld [vmem:[#allocation2] sm:$0xff]
    %v3571 = vmul.f32 %v3570, 0.0
    %v3572 = vadd.f32 %v3569, %v3571
    %3573 = vst.msk [vmem:[#allocation8] sm:$0xff] %vm95, %v3569
    %v3575 = vsel %vm95, %v3572, 0
    %3577 = vmatprep.subr.mxu0 0.0
    %3578 = vmatpush1.msra.mxu0 0.0
    %3579 = vmatprep.subr.mxu0 0.0
    %3580 = vmatpush1.msra.mxu0 0.0
    %3581 = vmatprep.subr.mxu0 0.0
    %3582 = vmatpush1.msra.mxu0 0.0
    %3583 = vmatprep.subr.mxu0 0.0
    %3584 = vmatpush1.msra.mxu0 0.0
    %3585 = vmatprep.subr.mxu0 0.0
    %3586 = vmatpush1.msra.mxu0 0.0
    %3587 = vmatprep.subr.mxu0 0.0
    %3588 = vmatpush1.msra.mxu0 0.0
    %3589 = vmatprep.subr.mxu0 0.0
    %3590 = vmatpush1.msra.mxu0 0.0
    %3591 = vmatprep.subr.mxu0 0.0
    %3592 = vmatpush1.msra.mxu0 0.0
    %3593 = vmatprep.subr.mxu0 0.0
    %3594 = vmatpush1.msra.mxu0 0.0
    %3595 = vmatprep.subr.mxu0 0.0
    %3596 = vmatpush1.msra.mxu0 0.0
    %3597 = vmatprep.subr.mxu0 0.0
    %3598 = vmatpush1.msra.mxu0 0.0
    %3599 = vmatprep.subr.mxu0 0.0
    %3600 = vmatpush1.msra.mxu0 0.0
    %3601 = vmatprep.subr.mxu0 0.0
    %3602 = vmatpush1.msra.mxu0 %v3319
    %3603 = vmatprep.subr.mxu0 0.0
    %3604 = vmatpush1.msra.mxu0 %v3318
    %3605 = vmatprep.subr.mxu0 0.0
    %3606 = vmatpush1.msra.mxu0 %v3317
    %3607 = vmatprep.subr.mxu0 0.0
    %3608 = vmatpush1.msra.mxu0 %v3316
    %3609 = vmatprep.subr.mxu0 0.0
    %3610 = vmatpush2.msra.mxu0 0.0
    %3611 = vmatprep.subr.mxu0 0.0
    %3612 = vmatpush2.msra.mxu0 0.0
    %3613 = vmatprep.subr.mxu0 0.0
    %3614 = vmatpush2.msra.mxu0 0.0
    %3615 = vmatprep.subr.mxu0 0.0
    %3616 = vmatpush2.msra.mxu0 0.0
    %3617 = vmatprep.subr.mxu0 0.0
    %3618 = vmatpush2.msra.mxu0 0.0
    %3619 = vmatprep.subr.mxu0 0.0
    %3620 = vmatpush2.msra.mxu0 0.0
    %3621 = vmatprep.subr.mxu0 0.0
    %3622 = vmatpush2.msra.mxu0 0.0
    %3623 = vmatprep.subr.mxu0 0.0
    %3624 = vmatpush2.msra.mxu0 0.0
    %3625 = vmatprep.subr.mxu0 0.0
    %3626 = vmatpush2.msra.mxu0 0.0
    %3627 = vmatprep.subr.mxu0 0.0
    %3628 = vmatpush2.msra.mxu0 0.0
    %3629 = vmatprep.subr.mxu0 0.0
    %3630 = vmatpush2.msra.mxu0 0.0
    %3631 = vmatprep.subr.mxu0 0.0
    %3632 = vmatpush2.msra.mxu0 0.0
    %3633 = vmatprep.subr.mxu0 0.0
    %3634 = vmatpush2.msra.mxu0 0.0
    %3635 = vmatprep.subr.mxu0 0.0
    %3636 = vmatpush2.msra.mxu0 0.0
    %3637 = vmatprep.subr.mxu0 0.0
    %3638 = vmatpush2.msra.mxu0 0.0
    %3639 = vmatprep.subr.mxu0 0.0
    %3640 = vmatpush2.msra.mxu0 0.0
    %3641 = vmatprep.mubr.f32.mxu0 0.0
    %3642 = vmatmul.mubr.f32.gmra.mxu0 %v3575
    %v3643 = vpop.f32.mrf.mxu0
    %v3644 = vadd.f32 %v3463, %v3643
    %v3645 = vpop.f32.mrf.mxu0
    %3646 = vdwg.mxu0
    %v3647 = vadd.f32 %v3426, %v3644
    %v3648 = vxor.u32 %v3647, 2147483648
    %v3649 = vmul.f32 %v3648, 1.442695
    %v3650 = vpow.pop %v3649
    %v3651 = vadd.f32 %v3650, 1.0
    %v3652 = vrcp.pop %v3651
    %v3653 = vmul.f32 1.0, %v3652
    %3655 = vrot.lane.b32.xlu0 %v3644, 64
    %v3656 = vpop.permute.xlu0 %3655
    %v3658 = vmul.f32 %v3653, %v3656
    %3660 = vrot.lane.b32.xlu0 %v3658, 64
    %v3661 = vpop.permute.xlu0 %3660
    %v3663 = vadd.f32 %v3426, %v3661
    %v3664 = vtanh.pop %v3663
    %3666 = vrot.lane.b32.xlu0 %v3664, 64
    %v3667 = vpop.permute.xlu0 %3666
    %v3669 = vsub.f32 %v3572, %v3667
    %3671 = vrot.lane.b32.xlu0 %v3669, 32
    %v3672 = vpop.permute.xlu0 %3671
    %v3674 = vmul.f32 %v3653, %v3672
    %3676 = vrot.lane.b32.xlu0 %v3674, 32
    %v3677 = vpop.permute.xlu0 %3676
    %v3679 = vadd.f32 %v3664, %v3677
    %v3680 = vld [vmem:[%s448] sm:$0xff]
    %3682 = vrot.lane.b32.xlu0 %v3679, 64
    %v3683 = vpop.permute.xlu0 %3682
    %v3685 = vmul.f32 %v3680, %v3683
    %v3686 = vld [vmem:[%s455] sm:$0xff]
    %v3687 = vmul.f32 %v3686, %v3572
    %v3688 = vadd.f32 %v3685, %v3687
    %3690 = vrot.lane.b32.xlu0 %v3685, 32
    %v3691 = vpop.permute.xlu0 %3690
    %3693 = vst.msk [vmem:[#allocation8] sm:$0xff] %vm2234, %v3691
    %v3695 = vsel %vm95, %v3688, 0
    %3697 = vmatprep.subr.mxu0 0.0
    %3698 = vmatpush1.msra.mxu0 0.0
    %3699 = vmatprep.subr.mxu0 0.0
    %3700 = vmatpush1.msra.mxu0 0.0
    %3701 = vmatprep.subr.mxu0 0.0
    %3702 = vmatpush1.msra.mxu0 0.0
    %3703 = vmatprep.subr.mxu0 0.0
    %3704 = vmatpush1.msra.mxu0 0.0
    %3705 = vmatprep.subr.mxu0 0.0
    %3706 = vmatpush1.msra.mxu0 0.0
    %3707 = vmatprep.subr.mxu0 0.0
    %3708 = vmatpush1.msra.mxu0 0.0
    %3709 = vmatprep.subr.mxu0 0.0
    %3710 = vmatpush1.msra.mxu0 0.0
    %3711 = vmatprep.subr.mxu0 0.0
    %3712 = vmatpush1.msra.mxu0 0.0
    %3713 = vmatprep.subr.mxu0 0.0
    %3714 = vmatpush1.msra.mxu0 0.0
    %3715 = vmatprep.subr.mxu0 0.0
    %3716 = vmatpush1.msra.mxu0 0.0
    %3717 = vmatprep.subr.mxu0 0.0
    %3718 = vmatpush1.msra.mxu0 0.0
    %3719 = vmatprep.subr.mxu0 0.0
    %3720 = vmatpush1.msra.mxu0 0.0
    %3721 = vmatprep.subr.mxu0 0.0
    %3722 = vmatpush1.msra.mxu0 %v3319
    %3723 = vmatprep.subr.mxu0 0.0
    %3724 = vmatpush1.msra.mxu0 %v3318
    %3725 = vmatprep.subr.mxu0 0.0
    %3726 = vmatpush1.msra.mxu0 %v3317
    %3727 = vmatprep.subr.mxu0 0.0
    %3728 = vmatpush1.msra.mxu0 %v3316
    %3729 = vmatprep.subr.mxu0 0.0
    %3730 = vmatpush2.msra.mxu0 0.0
    %3731 = vmatprep.subr.mxu0 0.0
    %3732 = vmatpush2.msra.mxu0 0.0
    %3733 = vmatprep.subr.mxu0 0.0
    %3734 = vmatpush2.msra.mxu0 0.0
    %3735 = vmatprep.subr.mxu0 0.0
    %3736 = vmatpush2.msra.mxu0 0.0
    %3737 = vmatprep.subr.mxu0 0.0
    %3738 = vmatpush2.msra.mxu0 0.0
    %3739 = vmatprep.subr.mxu0 0.0
    %3740 = vmatpush2.msra.mxu0 0.0
    %3741 = vmatprep.subr.mxu0 0.0
    %3742 = vmatpush2.msra.mxu0 0.0
    %3743 = vmatprep.subr.mxu0 0.0
    %3744 = vmatpush2.msra.mxu0 0.0
    %3745 = vmatprep.subr.mxu0 0.0
    %3746 = vmatpush2.msra.mxu0 0.0
    %3747 = vmatprep.subr.mxu0 0.0
    %3748 = vmatpush2.msra.mxu0 0.0
    %3749 = vmatprep.subr.mxu0 0.0
    %3750 = vmatpush2.msra.mxu0 0.0
    %3751 = vmatprep.subr.mxu0 0.0
    %3752 = vmatpush2.msra.mxu0 0.0
    %3753 = vmatprep.subr.mxu0 0.0
    %3754 = vmatpush2.msra.mxu0 0.0
    %3755 = vmatprep.subr.mxu0 0.0
    %3756 = vmatpush2.msra.mxu0 0.0
    %3757 = vmatprep.subr.mxu0 0.0
    %3758 = vmatpush2.msra.mxu0 0.0
    %3759 = vmatprep.subr.mxu0 0.0
    %3760 = vmatpush2.msra.mxu0 0.0
    %3761 = vmatprep.mubr.f32.mxu0 0.0
    %3762 = vmatmul.mubr.f32.gmra.mxu0 %v3695
    %v3763 = vpop.f32.mrf.mxu0
    %v3764 = vadd.f32 %v3463, %v3763
    %v3765 = vpop.f32.mrf.mxu0
    %3766 = vdwg.mxu0
    %v3767 = vadd.f32 %v3431, %v3764
    %v3768 = vxor.u32 %v3767, 2147483648
    %v3769 = vmul.f32 %v3768, 1.442695
    %v3770 = vpow.pop %v3769
    %v3771 = vadd.f32 %v3770, 1.0
    %v3772 = vrcp.pop %v3771
    %v3773 = vmul.f32 1.0, %v3772
    %3775 = vrot.lane.b32.xlu0 %v3764, 64
    %v3776 = vpop.permute.xlu0 %3775
    %v3778 = vmul.f32 %v3773, %v3776
    %3780 = vrot.lane.b32.xlu0 %v3778, 64
    %v3781 = vpop.permute.xlu0 %3780
    %v3783 = vadd.f32 %v3431, %v3781
    %v3784 = vtanh.pop %v3783
    %3786 = vrot.lane.b32.xlu0 %v3784, 64
    %v3787 = vpop.permute.xlu0 %3786
    %v3789 = vsub.f32 %v3688, %v3787
    %3791 = vrot.lane.b32.xlu0 %v3789, 32
    %v3792 = vpop.permute.xlu0 %3791
    %v3794 = vmul.f32 %v3773, %v3792
    %3796 = vrot.lane.b32.xlu0 %v3794, 32
    %v3797 = vpop.permute.xlu0 %3796
    %v3799 = vadd.f32 %v3784, %v3797
    %v3800 = vld [vmem:[%s565] sm:$0xff]
    %3802 = vrot.lane.b32.xlu0 %v3799, 64
    %v3803 = vpop.permute.xlu0 %3802
    %v3805 = vmul.f32 %v3800, %v3803
    %v3806 = vld [vmem:[%s572] sm:$0xff]
    %v3807 = vmul.f32 %v3806, %v3688
    %v3808 = vadd.f32 %v3805, %v3807
    %3810 = vrot.lane.b32.xlu0 %v3805, 64
    %v3811 = vpop.permute.xlu0 %3810
    %3813 = vst.msk [vmem:[#allocation8] sm:$0xff] %vm3308, %v3811
    %v3815 = vsel %vm95, %v3808, 0
    %3817 = vmatprep.subr.mxu0 0.0
    %3818 = vmatpush1.msra.mxu0 0.0
    %3819 = vmatprep.subr.mxu0 0.0
    %3820 = vmatpush1.msra.mxu0 0.0
    %3821 = vmatprep.subr.mxu0 0.0
    %3822 = vmatpush1.msra.mxu0 0.0
    %3823 = vmatprep.subr.mxu0 0.0
    %3824 = vmatpush1.msra.mxu0 0.0
    %3825 = vmatprep.subr.mxu0 0.0
    %3826 = vmatpush1.msra.mxu0 0.0
    %3827 = vmatprep.subr.mxu0 0.0
    %3828 = vmatpush1.msra.mxu0 0.0
    %3829 = vmatprep.subr.mxu0 0.0
    %3830 = vmatpush1.msra.mxu0 0.0
    %3831 = vmatprep.subr.mxu0 0.0
    %3832 = vmatpush1.msra.mxu0 0.0
    %3833 = vmatprep.subr.mxu0 0.0
    %3834 = vmatpush1.msra.mxu0 0.0
    %3835 = vmatprep.subr.mxu0 0.0
    %3836 = vmatpush1.msra.mxu0 0.0
    %3837 = vmatprep.subr.mxu0 0.0
    %3838 = vmatpush1.msra.mxu0 0.0
    %3839 = vmatprep.subr.mxu0 0.0
    %3840 = vmatpush1.msra.mxu0 0.0
    %3841 = vmatprep.subr.mxu0 0.0
    %3842 = vmatpush1.msra.mxu0 %v3319
    %3843 = vmatprep.subr.mxu0 0.0
    %3844 = vmatpush1.msra.mxu0 %v3318
    %3845 = vmatprep.subr.mxu0 0.0
    %3846 = vmatpush1.msra.mxu0 %v3317
    %3847 = vmatprep.subr.mxu0 0.0
    %3848 = vmatpush1.msra.mxu0 %v3316
    %3849 = vmatprep.subr.mxu0 0.0
    %3850 = vmatpush2.msra.mxu0 0.0
    %3851 = vmatprep.subr.mxu0 0.0
    %3852 = vmatpush2.msra.mxu0 0.0
    %3853 = vmatprep.subr.mxu0 0.0
    %3854 = vmatpush2.msra.mxu0 0.0
    %3855 = vmatprep.subr.mxu0 0.0
    %3856 = vmatpush2.msra.mxu0 0.0
    %3857 = vmatprep.subr.mxu0 0.0
    %3858 = vmatpush2.msra.mxu0 0.0
    %3859 = vmatprep.subr.mxu0 0.0
    %3860 = vmatpush2.msra.mxu0 0.0
    %3861 = vmatprep.subr.mxu0 0.0
    %3862 = vmatpush2.msra.mxu0 0.0
    %3863 = vmatprep.subr.mxu0 0.0
    %3864 = vmatpush2.msra.mxu0 0.0
    %3865 = vmatprep.subr.mxu0 0.0
    %3866 = vmatpush2.msra.mxu0 0.0
    %3867 = vmatprep.subr.mxu0 0.0
    %3868 = vmatpush2.msra.mxu0 0.0
    %3869 = vmatprep.subr.mxu0 0.0
    %3870 = vmatpush2.msra.mxu0 0.0
    %3871 = vmatprep.subr.mxu0 0.0
    %3872 = vmatpush2.msra.mxu0 0.0
    %3873 = vmatprep.subr.mxu0 0.0
    %3874 = vmatpush2.msra.mxu0 0.0
    %3875 = vmatprep.subr.mxu0 0.0
    %3876 = vmatpush2.msra.mxu0 0.0
    %3877 = vmatprep.subr.mxu0 0.0
    %3878 = vmatpush2.msra.mxu0 0.0
    %3879 = vmatprep.subr.mxu0 0.0
    %3880 = vmatpush2.msra.mxu0 0.0
    %3881 = vmatprep.mubr.f32.mxu0 0.0
    %3882 = vmatmul.mubr.f32.gmra.mxu0 %v3815
    %v3883 = vpop.f32.mrf.mxu0
    %v3884 = vadd.f32 %v3463, %v3883
    %v3885 = vpop.f32.mrf.mxu0
    %3886 = vdwg.mxu0
    %v3887 = vadd.f32 %v3436, %v3884
    %v3888 = vxor.u32 %v3887, 2147483648
    %v3889 = vmul.f32 %v3888, 1.442695
    %v3890 = vpow.pop %v3889
    %v3891 = vadd.f32 %v3890, 1.0
    %v3892 = vrcp.pop %v3891
    %v3893 = vmul.f32 1.0, %v3892
    %3895 = vrot.lane.b32.xlu0 %v3884, 64
    %v3896 = vpop.permute.xlu0 %3895
    %v3898 = vmul.f32 %v3893, %v3896
    %3900 = vrot.lane.b32.xlu0 %v3898, 64
    %v3901 = vpop.permute.xlu0 %3900
    %v3903 = vadd.f32 %v3436, %v3901
    %v3904 = vtanh.pop %v3903
    %3906 = vrot.lane.b32.xlu0 %v3904, 64
    %v3907 = vpop.permute.xlu0 %3906
    %v3909 = vsub.f32 %v3808, %v3907
    %3911 = vrot.lane.b32.xlu0 %v3909, 32
    %v3912 = vpop.permute.xlu0 %3911
    %v3914 = vmul.f32 %v3893, %v3912
    %3916 = vrot.lane.b32.xlu0 %v3914, 32
    %v3917 = vpop.permute.xlu0 %3916
    %v3919 = vadd.f32 %v3904, %v3917
    %v3920 = vld [vmem:[%s682] sm:$0xff]
    %3922 = vrot.lane.b32.xlu0 %v3919, 64
    %v3923 = vpop.permute.xlu0 %3922
    %v3925 = vmul.f32 %v3920, %v3923
    %v3926 = vld [vmem:[%s689] sm:$0xff]
    %v3927 = vmul.f32 %v3926, %v3808
    %v3928 = vadd.f32 %v3925, %v3927
    %3930 = vrot.lane.b32.xlu0 %v3925, 96
    %v3931 = vpop.permute.xlu0 %3930
    %vm3933 = vcmask 1048320
    %3934 = vst.msk [vmem:[#allocation8] sm:$0xff] %vm3933, %v3931
    %v3936 = vsel %vm95, %v3928, 0
    %3938 = vmatprep.subr.mxu0 0.0
    %3939 = vmatpush1.msra.mxu0 0.0
    %3940 = vmatprep.subr.mxu0 0.0
    %3941 = vmatpush1.msra.mxu0 0.0
    %3942 = vmatprep.subr.mxu0 0.0
    %3943 = vmatpush1.msra.mxu0 0.0
    %3944 = vmatprep.subr.mxu0 0.0
    %3945 = vmatpush1.msra.mxu0 0.0
    %3946 = vmatprep.subr.mxu0 0.0
    %3947 = vmatpush1.msra.mxu0 0.0
    %3948 = vmatprep.subr.mxu0 0.0
    %3949 = vmatpush1.msra.mxu0 0.0
    %3950 = vmatprep.subr.mxu0 0.0
    %3951 = vmatpush1.msra.mxu0 0.0
    %3952 = vmatprep.subr.mxu0 0.0
    %3953 = vmatpush1.msra.mxu0 0.0
    %3954 = vmatprep.subr.mxu0 0.0
    %3955 = vmatpush1.msra.mxu0 0.0
    %3956 = vmatprep.subr.mxu0 0.0
    %3957 = vmatpush1.msra.mxu0 0.0
    %3958 = vmatprep.subr.mxu0 0.0
    %3959 = vmatpush1.msra.mxu0 0.0
    %3960 = vmatprep.subr.mxu0 0.0
    %3961 = vmatpush1.msra.mxu0 0.0
    %3962 = vmatprep.subr.mxu0 0.0
    %3963 = vmatpush1.msra.mxu0 %v3319
    %3964 = vmatprep.subr.mxu0 0.0
    %3965 = vmatpush1.msra.mxu0 %v3318
    %3966 = vmatprep.subr.mxu0 0.0
    %3967 = vmatpush1.msra.mxu0 %v3317
    %3968 = vmatprep.subr.mxu0 0.0
    %3969 = vmatpush1.msra.mxu0 %v3316
    %3970 = vmatprep.subr.mxu0 0.0
    %3971 = vmatpush2.msra.mxu0 0.0
    %3972 = vmatprep.subr.mxu0 0.0
    %3973 = vmatpush2.msra.mxu0 0.0
    %3974 = vmatprep.subr.mxu0 0.0
    %3975 = vmatpush2.msra.mxu0 0.0
    %3976 = vmatprep.subr.mxu0 0.0
    %3977 = vmatpush2.msra.mxu0 0.0
    %3978 = vmatprep.subr.mxu0 0.0
    %3979 = vmatpush2.msra.mxu0 0.0
    %3980 = vmatprep.subr.mxu0 0.0
    %3981 = vmatpush2.msra.mxu0 0.0
    %3982 = vmatprep.subr.mxu0 0.0
    %3983 = vmatpush2.msra.mxu0 0.0
    %3984 = vmatprep.subr.mxu0 0.0
    %3985 = vmatpush2.msra.mxu0 0.0
    %3986 = vmatprep.subr.mxu0 0.0
    %3987 = vmatpush2.msra.mxu0 0.0
    %3988 = vmatprep.subr.mxu0 0.0
    %3989 = vmatpush2.msra.mxu0 0.0
    %3990 = vmatprep.subr.mxu0 0.0
    %3991 = vmatpush2.msra.mxu0 0.0
    %3992 = vmatprep.subr.mxu0 0.0
    %3993 = vmatpush2.msra.mxu0 0.0
    %3994 = vmatprep.subr.mxu0 0.0
    %3995 = vmatpush2.msra.mxu0 0.0
    %3996 = vmatprep.subr.mxu0 0.0
    %3997 = vmatpush2.msra.mxu0 0.0
    %3998 = vmatprep.subr.mxu0 0.0
    %3999 = vmatpush2.msra.mxu0 0.0
    %4000 = vmatprep.subr.mxu0 0.0
    %4001 = vmatpush2.msra.mxu0 0.0
    %4002 = vmatprep.mubr.f32.mxu0 0.0
    %4003 = vmatmul.mubr.f32.gmra.mxu0 %v3936
    %v4004 = vpop.f32.mrf.mxu0
    %v4005 = vadd.f32 %v3463, %v4004
    %v4006 = vpop.f32.mrf.mxu0
    %4007 = vdwg.mxu0
    %v4008 = vadd.f32 %v3441, %v4005
    %v4009 = vxor.u32 %v4008, 2147483648
    %v4010 = vmul.f32 %v4009, 1.442695
    %v4011 = vpow.pop %v4010
    %v4012 = vadd.f32 %v4011, 1.0
    %v4013 = vrcp.pop %v4012
    %v4014 = vmul.f32 1.0, %v4013
    %4016 = vrot.lane.b32.xlu0 %v4005, 64
    %v4017 = vpop.permute.xlu0 %4016
    %v4019 = vmul.f32 %v4014, %v4017
    %4021 = vrot.lane.b32.xlu0 %v4019, 64
    %v4022 = vpop.permute.xlu0 %4021
    %v4024 = vadd.f32 %v3441, %v4022
    %v4025 = vtanh.pop %v4024
    %4027 = vrot.lane.b32.xlu0 %v4025, 64
    %v4028 = vpop.permute.xlu0 %4027
    %v4030 = vsub.f32 %v3928, %v4028
    %4032 = vrot.lane.b32.xlu0 %v4030, 32
    %v4033 = vpop.permute.xlu0 %4032
    %v4035 = vmul.f32 %v4014, %v4033
    %4037 = vrot.lane.b32.xlu0 %v4035, 32
    %v4038 = vpop.permute.xlu0 %4037
    %v4040 = vadd.f32 %v4025, %v4038
    %v4041 = vld [vmem:[%s799] sm:$0xff]
    %4043 = vrot.lane.b32.xlu0 %v4040, 64
    %v4044 = vpop.permute.xlu0 %4043
    %v4046 = vmul.f32 %v4041, %v4044
    %v4047 = vld [vmem:[%s806] sm:$0xff]
    %v4048 = vmul.f32 %v4047, %v3928
    %v4049 = vadd.f32 %v4046, %v4048
    %4050 = vst.msk [vmem:[#allocation8 + $0x8] sm:$0xff] %vm95, %v4046
    %v4052 = vsel %vm95, %v4049, 0
    %4054 = vmatprep.subr.mxu0 0.0
    %4055 = vmatpush1.msra.mxu0 0.0
    %4056 = vmatprep.subr.mxu0 0.0
    %4057 = vmatpush1.msra.mxu0 0.0
    %4058 = vmatprep.subr.mxu0 0.0
    %4059 = vmatpush1.msra.mxu0 0.0
    %4060 = vmatprep.subr.mxu0 0.0
    %4061 = vmatpush1.msra.mxu0 0.0
    %4062 = vmatprep.subr.mxu0 0.0
    %4063 = vmatpush1.msra.mxu0 0.0
    %4064 = vmatprep.subr.mxu0 0.0
    %4065 = vmatpush1.msra.mxu0 0.0
    %4066 = vmatprep.subr.mxu0 0.0
    %4067 = vmatpush1.msra.mxu0 0.0
    %4068 = vmatprep.subr.mxu0 0.0
    %4069 = vmatpush1.msra.mxu0 0.0
    %4070 = vmatprep.subr.mxu0 0.0
    %4071 = vmatpush1.msra.mxu0 0.0
    %4072 = vmatprep.subr.mxu0 0.0
    %4073 = vmatpush1.msra.mxu0 0.0
    %4074 = vmatprep.subr.mxu0 0.0
    %4075 = vmatpush1.msra.mxu0 0.0
    %4076 = vmatprep.subr.mxu0 0.0
    %4077 = vmatpush1.msra.mxu0 0.0
    %4078 = vmatprep.subr.mxu0 0.0
    %4079 = vmatpush1.msra.mxu0 %v3319
    %4080 = vmatprep.subr.mxu0 0.0
    %4081 = vmatpush1.msra.mxu0 %v3318
    %4082 = vmatprep.subr.mxu0 0.0
    %4083 = vmatpush1.msra.mxu0 %v3317
    %4084 = vmatprep.subr.mxu0 0.0
    %4085 = vmatpush1.msra.mxu0 %v3316
    %4086 = vmatprep.subr.mxu0 0.0
    %4087 = vmatpush2.msra.mxu0 0.0
    %4088 = vmatprep.subr.mxu0 0.0
    %4089 = vmatpush2.msra.mxu0 0.0
    %4090 = vmatprep.subr.mxu0 0.0
    %4091 = vmatpush2.msra.mxu0 0.0
    %4092 = vmatprep.subr.mxu0 0.0
    %4093 = vmatpush2.msra.mxu0 0.0
    %4094 = vmatprep.subr.mxu0 0.0
    %4095 = vmatpush2.msra.mxu0 0.0
    %4096 = vmatprep.subr.mxu0 0.0
    %4097 = vmatpush2.msra.mxu0 0.0
    %4098 = vmatprep.subr.mxu0 0.0
    %4099 = vmatpush2.msra.mxu0 0.0
    %4100 = vmatprep.subr.mxu0 0.0
    %4101 = vmatpush2.msra.mxu0 0.0
    %4102 = vmatprep.subr.mxu0 0.0
    %4103 = vmatpush2.msra.mxu0 0.0
    %4104 = vmatprep.subr.mxu0 0.0
    %4105 = vmatpush2.msra.mxu0 0.0
    %4106 = vmatprep.subr.mxu0 0.0
    %4107 = vmatpush2.msra.mxu0 0.0
    %4108 = vmatprep.subr.mxu0 0.0
    %4109 = vmatpush2.msra.mxu0 0.0
    %4110 = vmatprep.subr.mxu0 0.0
    %4111 = vmatpush2.msra.mxu0 0.0
    %4112 = vmatprep.subr.mxu0 0.0
    %4113 = vmatpush2.msra.mxu0 0.0
    %4114 = vmatprep.subr.mxu0 0.0
    %4115 = vmatpush2.msra.mxu0 0.0
    %4116 = vmatprep.subr.mxu0 0.0
    %4117 = vmatpush2.msra.mxu0 0.0
    %4118 = vmatprep.mubr.f32.mxu0 0.0
    %4119 = vmatmul.mubr.f32.gmra.mxu0 %v4052
    %v4120 = vpop.f32.mrf.mxu0
    %v4121 = vadd.f32 %v3463, %v4120
    %v4122 = vpop.f32.mrf.mxu0
    %4123 = vdwg.mxu0
    %v4124 = vadd.f32 %v3446, %v4121
    %v4125 = vxor.u32 %v4124, 2147483648
    %v4126 = vmul.f32 %v4125, 1.442695
    %v4127 = vpow.pop %v4126
    %v4128 = vadd.f32 %v4127, 1.0
    %v4129 = vrcp.pop %v4128
    %v4130 = vmul.f32 1.0, %v4129
    %4132 = vrot.lane.b32.xlu0 %v4121, 64
    %v4133 = vpop.permute.xlu0 %4132
    %v4135 = vmul.f32 %v4130, %v4133
    %4137 = vrot.lane.b32.xlu0 %v4135, 64
    %v4138 = vpop.permute.xlu0 %4137
    %v4140 = vadd.f32 %v3446, %v4138
    %v4141 = vtanh.pop %v4140
    %4143 = vrot.lane.b32.xlu0 %v4141, 64
    %v4144 = vpop.permute.xlu0 %4143
    %v4146 = vsub.f32 %v4049, %v4144
    %4148 = vrot.lane.b32.xlu0 %v4146, 32
    %v4149 = vpop.permute.xlu0 %4148
    %v4151 = vmul.f32 %v4130, %v4149
    %4153 = vrot.lane.b32.xlu0 %v4151, 32
    %v4154 = vpop.permute.xlu0 %4153
    %v4156 = vadd.f32 %v4141, %v4154
    %v4157 = vld [vmem:[%s916] sm:$0xff]
    %4159 = vrot.lane.b32.xlu0 %v4156, 64
    %v4160 = vpop.permute.xlu0 %4159
    %v4162 = vmul.f32 %v4157, %v4160
    %v4163 = vld [vmem:[%s923] sm:$0xff]
    %v4164 = vmul.f32 %v4163, %v4049
    %v4165 = vadd.f32 %v4162, %v4164
    %4167 = vrot.lane.b32.xlu0 %v4162, 32
    %v4168 = vpop.permute.xlu0 %4167
    %4170 = vst.msk [vmem:[#allocation8 + $0x8] sm:$0xff] %vm2234, %v4168
    %v4172 = vsel %vm95, %v4165, 0
    %4174 = vmatprep.subr.mxu0 0.0
    %4175 = vmatpush1.msra.mxu0 0.0
    %4176 = vmatprep.subr.mxu0 0.0
    %4177 = vmatpush1.msra.mxu0 0.0
    %4178 = vmatprep.subr.mxu0 0.0
    %4179 = vmatpush1.msra.mxu0 0.0
    %4180 = vmatprep.subr.mxu0 0.0
    %4181 = vmatpush1.msra.mxu0 0.0
    %4182 = vmatprep.subr.mxu0 0.0
    %4183 = vmatpush1.msra.mxu0 0.0
    %4184 = vmatprep.subr.mxu0 0.0
    %4185 = vmatpush1.msra.mxu0 0.0
    %4186 = vmatprep.subr.mxu0 0.0
    %4187 = vmatpush1.msra.mxu0 0.0
    %4188 = vmatprep.subr.mxu0 0.0
    %4189 = vmatpush1.msra.mxu0 0.0
    %4190 = vmatprep.subr.mxu0 0.0
    %4191 = vmatpush1.msra.mxu0 0.0
    %4192 = vmatprep.subr.mxu0 0.0
    %4193 = vmatpush1.msra.mxu0 0.0
    %4194 = vmatprep.subr.mxu0 0.0
    %4195 = vmatpush1.msra.mxu0 0.0
    %4196 = vmatprep.subr.mxu0 0.0
    %4197 = vmatpush1.msra.mxu0 0.0
    %4198 = vmatprep.subr.mxu0 0.0
    %4199 = vmatpush1.msra.mxu0 %v3319
    %4200 = vmatprep.subr.mxu0 0.0
    %4201 = vmatpush1.msra.mxu0 %v3318
    %4202 = vmatprep.subr.mxu0 0.0
    %4203 = vmatpush1.msra.mxu0 %v3317
    %4204 = vmatprep.subr.mxu0 0.0
    %4205 = vmatpush1.msra.mxu0 %v3316
    %4206 = vmatprep.subr.mxu0 0.0
    %4207 = vmatpush2.msra.mxu0 0.0
    %4208 = vmatprep.subr.mxu0 0.0
    %4209 = vmatpush2.msra.mxu0 0.0
    %4210 = vmatprep.subr.mxu0 0.0
    %4211 = vmatpush2.msra.mxu0 0.0
    %4212 = vmatprep.subr.mxu0 0.0
    %4213 = vmatpush2.msra.mxu0 0.0
    %4214 = vmatprep.subr.mxu0 0.0
    %4215 = vmatpush2.msra.mxu0 0.0
    %4216 = vmatprep.subr.mxu0 0.0
    %4217 = vmatpush2.msra.mxu0 0.0
    %4218 = vmatprep.subr.mxu0 0.0
    %4219 = vmatpush2.msra.mxu0 0.0
    %4220 = vmatprep.subr.mxu0 0.0
    %4221 = vmatpush2.msra.mxu0 0.0
    %4222 = vmatprep.subr.mxu0 0.0
    %4223 = vmatpush2.msra.mxu0 0.0
    %4224 = vmatprep.subr.mxu0 0.0
    %4225 = vmatpush2.msra.mxu0 0.0
    %4226 = vmatprep.subr.mxu0 0.0
    %4227 = vmatpush2.msra.mxu0 0.0
    %4228 = vmatprep.subr.mxu0 0.0
    %4229 = vmatpush2.msra.mxu0 0.0
    %4230 = vmatprep.subr.mxu0 0.0
    %4231 = vmatpush2.msra.mxu0 0.0
    %4232 = vmatprep.subr.mxu0 0.0
    %4233 = vmatpush2.msra.mxu0 0.0
    %4234 = vmatprep.subr.mxu0 0.0
    %4235 = vmatpush2.msra.mxu0 0.0
    %4236 = vmatprep.subr.mxu0 0.0
    %4237 = vmatpush2.msra.mxu0 0.0
    %4238 = vmatprep.mubr.f32.mxu0 0.0
    %4239 = vmatmul.mubr.f32.gmra.mxu0 %v4172
    %v4240 = vpop.f32.mrf.mxu0
    %v4241 = vadd.f32 %v3463, %v4240
    %v4242 = vpop.f32.mrf.mxu0
    %4243 = vdwg.mxu0
    %v4244 = vadd.f32 %v3451, %v4241
    %v4245 = vxor.u32 %v4244, 2147483648
    %v4246 = vmul.f32 %v4245, 1.442695
    %v4247 = vpow.pop %v4246
    %v4248 = vadd.f32 %v4247, 1.0
    %v4249 = vrcp.pop %v4248
    %v4250 = vmul.f32 1.0, %v4249
    %4252 = vrot.lane.b32.xlu0 %v4241, 64
    %v4253 = vpop.permute.xlu0 %4252
    %v4255 = vmul.f32 %v4250, %v4253
    %4257 = vrot.lane.b32.xlu0 %v4255, 64
    %v4258 = vpop.permute.xlu0 %4257
    %v4260 = vadd.f32 %v3451, %v4258
    %v4261 = vtanh.pop %v4260
    %4263 = vrot.lane.b32.xlu0 %v4261, 64
    %v4264 = vpop.permute.xlu0 %4263
    %v4266 = vsub.f32 %v4165, %v4264
    %4268 = vrot.lane.b32.xlu0 %v4266, 32
    %v4269 = vpop.permute.xlu0 %4268
    %v4271 = vmul.f32 %v4250, %v4269
    %4273 = vrot.lane.b32.xlu0 %v4271, 32
    %v4274 = vpop.permute.xlu0 %4273
    %v4276 = vadd.f32 %v4261, %v4274
    %v4277 = vld [vmem:[%s1033] sm:$0xff]
    %4279 = vrot.lane.b32.xlu0 %v4276, 64
    %v4280 = vpop.permute.xlu0 %4279
    %v4282 = vmul.f32 %v4277, %v4280
    %v4283 = vld [vmem:[%s1040] sm:$0xff]
    %v4284 = vmul.f32 %v4283, %v4165
    %v4285 = vadd.f32 %v4282, %v4284
    %4287 = vrot.lane.b32.xlu0 %v4282, 64
    %v4288 = vpop.permute.xlu0 %4287
    %4290 = vst.msk [vmem:[#allocation8 + $0x8] sm:$0xff] %vm3308, %v4288
    %v4292 = vsel %vm95, %v4285, 0
    %4294 = vmatprep.subr.mxu0 0.0
    %4295 = vmatpush1.msra.mxu0 0.0
    %4296 = vmatprep.subr.mxu0 0.0
    %4297 = vmatpush1.msra.mxu0 0.0
    %4298 = vmatprep.subr.mxu0 0.0
    %4299 = vmatpush1.msra.mxu0 0.0
    %4300 = vmatprep.subr.mxu0 0.0
    %4301 = vmatpush1.msra.mxu0 0.0
    %4302 = vmatprep.subr.mxu0 0.0
    %4303 = vmatpush1.msra.mxu0 0.0
    %4304 = vmatprep.subr.mxu0 0.0
    %4305 = vmatpush1.msra.mxu0 0.0
    %4306 = vmatprep.subr.mxu0 0.0
    %4307 = vmatpush1.msra.mxu0 0.0
    %4308 = vmatprep.subr.mxu0 0.0
    %4309 = vmatpush1.msra.mxu0 0.0
    %4310 = vmatprep.subr.mxu0 0.0
    %4311 = vmatpush1.msra.mxu0 0.0
    %4312 = vmatprep.subr.mxu0 0.0
    %4313 = vmatpush1.msra.mxu0 0.0
    %4314 = vmatprep.subr.mxu0 0.0
    %4315 = vmatpush1.msra.mxu0 0.0
    %4316 = vmatprep.subr.mxu0 0.0
    %4317 = vmatpush1.msra.mxu0 0.0
    %4318 = vmatprep.subr.mxu0 0.0
    %4319 = vmatpush1.msra.mxu0 %v3319
    %4320 = vmatprep.subr.mxu0 0.0
    %4321 = vmatpush1.msra.mxu0 %v3318
    %4322 = vmatprep.subr.mxu0 0.0
    %4323 = vmatpush1.msra.mxu0 %v3317
    %4324 = vmatprep.subr.mxu0 0.0
    %4325 = vmatpush1.msra.mxu0 %v3316
    %4326 = vmatprep.subr.mxu0 0.0
    %4327 = vmatpush2.msra.mxu0 0.0
    %4328 = vmatprep.subr.mxu0 0.0
    %4329 = vmatpush2.msra.mxu0 0.0
    %4330 = vmatprep.subr.mxu0 0.0
    %4331 = vmatpush2.msra.mxu0 0.0
    %4332 = vmatprep.subr.mxu0 0.0
    %4333 = vmatpush2.msra.mxu0 0.0
    %4334 = vmatprep.subr.mxu0 0.0
    %4335 = vmatpush2.msra.mxu0 0.0
    %4336 = vmatprep.subr.mxu0 0.0
    %4337 = vmatpush2.msra.mxu0 0.0
    %4338 = vmatprep.subr.mxu0 0.0
    %4339 = vmatpush2.msra.mxu0 0.0
    %4340 = vmatprep.subr.mxu0 0.0
    %4341 = vmatpush2.msra.mxu0 0.0
    %4342 = vmatprep.subr.mxu0 0.0
    %4343 = vmatpush2.msra.mxu0 0.0
    %4344 = vmatprep.subr.mxu0 0.0
    %4345 = vmatpush2.msra.mxu0 0.0
    %4346 = vmatprep.subr.mxu0 0.0
    %4347 = vmatpush2.msra.mxu0 0.0
    %4348 = vmatprep.subr.mxu0 0.0
    %4349 = vmatpush2.msra.mxu0 0.0
    %4350 = vmatprep.subr.mxu0 0.0
    %4351 = vmatpush2.msra.mxu0 0.0
    %4352 = vmatprep.subr.mxu0 0.0
    %4353 = vmatpush2.msra.mxu0 0.0
    %4354 = vmatprep.subr.mxu0 0.0
    %4355 = vmatpush2.msra.mxu0 0.0
    %4356 = vmatprep.subr.mxu0 0.0
    %4357 = vmatpush2.msra.mxu0 0.0
    %4358 = vmatprep.mubr.f32.mxu0 0.0
    %4359 = vmatmul.mubr.f32.gmra.mxu0 %v4292
    %v4360 = vpop.f32.mrf.mxu0
    %v4361 = vadd.f32 %v3463, %v4360
    %v4362 = vpop.f32.mrf.mxu0
    %4363 = vdwg.mxu0
    %v4364 = vadd.f32 %v3456, %v4361
    %v4365 = vxor.u32 %v4364, 2147483648
    %v4366 = vmul.f32 %v4365, 1.442695
    %v4367 = vpow.pop %v4366
    %v4368 = vadd.f32 %v4367, 1.0
    %v4369 = vrcp.pop %v4368
    %v4370 = vmul.f32 1.0, %v4369
    %4372 = vrot.lane.b32.xlu0 %v4361, 64
    %v4373 = vpop.permute.xlu0 %4372
    %v4375 = vmul.f32 %v4370, %v4373
    %4377 = vrot.lane.b32.xlu0 %v4375, 64
    %v4378 = vpop.permute.xlu0 %4377
    %v4380 = vadd.f32 %v3456, %v4378
    %v4381 = vtanh.pop %v4380
    %4383 = vrot.lane.b32.xlu0 %v4381, 64
    %v4384 = vpop.permute.xlu0 %4383
    %v4386 = vsub.f32 %v4285, %v4384
    %4388 = vrot.lane.b32.xlu0 %v4386, 32
    %v4389 = vpop.permute.xlu0 %4388
    %v4391 = vmul.f32 %v4370, %v4389
    %4393 = vrot.lane.b32.xlu0 %v4391, 32
    %v4394 = vpop.permute.xlu0 %4393
    %v4396 = vadd.f32 %v4381, %v4394
    %v4397 = vld [vmem:[%s1150] sm:$0xff]
    %4399 = vrot.lane.b32.xlu0 %v4396, 64
    %v4400 = vpop.permute.xlu0 %4399
    %v4402 = vmul.f32 %v4397, %v4400
    %v4403 = vld [vmem:[%s1157] sm:$0xff]
    %v4404 = vmul.f32 %v4403, %v4285
    %v4405 = vadd.f32 %v4402, %v4404
    %4407 = vrot.lane.b32.xlu0 %v4402, 96
    %v4408 = vpop.permute.xlu0 %4407
    %4410 = vst.msk [vmem:[#allocation8 + $0x8] sm:$0xff] %vm3933, %v4408
    %4412 = vrot.lane.b32.xlu0 %v4405, 96
    %v4413 = vpop.permute.xlu0 %4412
    %4415 = vst.msk [vmem:[#allocation9] sm:$0xff] %vm3933, %v4413
    // Predicated region
    $region42: #{tpu_custom_call.1} parent=1 // pred_check
      _
    $region43: #{tpu_custom_call.1} parent=1 // pred_check_branch
      %4417 = sbr.rel (0) target = $region45
    $region44: #{tpu_custom_call.1} parent=1 // pred_region
      %s4419 = ssub.s32 256, 256
      %4420 = vsyncadd [#allocation4], %s4419
      %s4422 = sshll.u32 [#allocation8], 4
      %s4423 = int_to_ptr.vmem [resolvable:$true] %s4422
      %4425 = dma.vmem_to_hbm [thread:$0]  %s4423, 256, %s7, [#allocation4]
    $region45: #{tpu_custom_call.1} parent=1 // pred_fallthru
      _
    // Predicated region
    $region46: #{tpu_custom_call.1} parent=1 // pred_check
      _
    $region47: #{tpu_custom_call.1} parent=1 // pred_check_branch
      %4427 = sbr.rel (0) target = $region49
    $region48: #{tpu_custom_call.1} parent=1 // pred_region
      %s4429 = ssub.s32 128, 128
      %4430 = vsyncadd [#allocation10], %s4429
      %s4432 = sshll.u32 [#allocation9], 4
      %s4433 = int_to_ptr.vmem [resolvable:$true] %s4432
      %4435 = dma.vmem_to_hbm [thread:$0]  %s4433, 128, %s8, [#allocation10]
    $region49: #{tpu_custom_call.1} parent=1 // pred_fallthru
      _
    // Predicated region
    $region50: #{tpu_custom_call.1} parent=1 // pred_check
      _
    $region51: #{tpu_custom_call.1} parent=1 // pred_check_branch
      %4437 = sbr.rel (0) target = $region53
    $region52: #{tpu_custom_call.1} parent=1 // pred_region
      %4438 = dma.done [#allocation4], 256
    $region53: #{tpu_custom_call.1} parent=1 // pred_fallthru
      _
    // Predicated region
    $region54: #{tpu_custom_call.1} parent=1 // pred_check
      _
    $region55: #{tpu_custom_call.1} parent=1 // pred_check_branch
      %4440 = sbr.rel (0) target = $region57
    $region56: #{tpu_custom_call.1} parent=1 // pred_region
      %4441 = dma.done [#allocation10], 128
    $region57: #{tpu_custom_call.1} parent=1 // pred_fallthru
      _
    %4442 = vsyncpa [#allocation3], 1
    %4443 = vsyncpa [#allocation6], 1
    %4444 = vsyncpa [#allocation4], 1
    %4445 = vsyncpa [#allocation10], 1

</llo_original>
